<compile_context>
chip_gen: v6e
topology: v6e:2x2x1
jax: 0.10.0
libtpu: 0.0.40
codegen_flags: <defaults>
</compile_context>

<pallas_src>
import functools

import jax
import jax.numpy as jnp
import numpy as np
from jax.experimental import pallas as pl
from jax.experimental.pallas import tpu as pltpu


def _parity_groups(K: int, scale: int):
    """For each output parity p, group kernel taps k by the source-pixel offset
    d = floor((p + k - K//2) / scale) they read from the ORIGINAL (pre-upsample)
    input.  Returns, per parity, a sorted list of (d, [k, ...])."""
    P = K // 2
    groups = []
    for p in range(scale):
        g = {}
        for k in range(K):
            d = (p + k - P) // scale  # Python floor division (exact for ints)
            g.setdefault(d, []).append(k)
        groups.append(sorted(g.items()))
    return groups


def _fold_weights(w, groups, scale):
    """Fold the nearest-2x upsample into the conv weights.
    w: (Cout, Cin, K, K) -> (scale, scale, Cout, Cin, T, T), where
    w_eff[py, px, :, :, ty, tx] sums the kernel taps that read the same source
    pixel for output parity (py, px)."""
    per_py = []
    for py in range(scale):
        per_px = []
        for px in range(scale):
            rows = []
            for (_, khs) in groups[py]:
                cols = []
                for (_, kws) in groups[px]:
                    s = None
                    for kh in khs:
                        for kw in kws:
                            term = w[:, :, kh, kw]
                            s = term if s is None else s + term
                    cols.append(s)                     # (Cout, Cin)
                rows.append(jnp.stack(cols, axis=-1))  # (Cout, Cin, Tx)
            per_px.append(jnp.stack(rows, axis=-2))    # (Cout, Cin, Ty, Tx)
        per_py.append(jnp.stack(per_px, axis=0))       # (scale, Cout, Cin, T, T)
    return jnp.stack(per_py, axis=0)                   # (scale, scale, Cout, Cin, T, T)


def _make_deconv2d_kernel(Cin, Cout, H, W, scale, offsets, T):
    Ho, Wo = scale * H, scale * W
    # reverse map: source-pixel offset d -> [(parity, tap_index), ...]
    users = {}
    for p in range(scale):
        for t, d in enumerate(offsets[p]):
            users.setdefault(d, []).append((p, t))
    d_list = sorted(users)

    def shift_rows(a, d):
        # out[i, :] = a[i + d, :], zero outside [0, H)  (== conv zero padding)
        if d == 0:
            return a
        z = jnp.zeros((abs(d), W), jnp.float32)
        if d > 0:
            return jnp.concatenate([a[d:, :], z], axis=0)
        return jnp.concatenate([z, a[:H + d, :]], axis=0)

    def shift_cols(a, d):
        # out[:, j] = a[:, j + d], zero outside [0, W)
        if d == 0:
            return a
        z = jnp.zeros((H, abs(d)), jnp.float32)
        if d > 0:
            return jnp.concatenate([a[:, d:], z], axis=1)
        return jnp.concatenate([z, a[:, :W + d]], axis=1)

    def kernel(x_ref, w_ref, b_ref, o_ref):
        # x_ref: (1, Cin, H, W)                    VMEM (one batch element)
        # w_ref: (scale*scale*Cout*Cin*T*T,)       SMEM folded weights
        # b_ref: (Cout,)                           SMEM
        # o_ref: (1, Cout, Ho, Wo)                 VMEM
        f32 = jnp.float32

        # Per (co, parity) accumulators at the ORIGINAL resolution.
        accs = [[[jnp.zeros((H, W), f32) for _ in range(scale)]
                 for _ in range(scale)] for _ in range(Cout)]

        # Hoisted shifted views: each (ci, dy, dx) patch is built exactly once
        # and re-used by every (parity, tap, output-channel) that needs it.
        for ci in range(Cin):
            xc = x_ref[0, ci, :, :].astype(f32)
            for dx in d_list:
                xcol = shift_cols(xc, dx)
                for dy in d_list:
                    patch = shift_rows(xcol, dy)
                    for (py, ty) in users[dy]:
                        for (px, tx) in users[dx]:
                            for co in range(Cout):
                                idx = ((((py * scale + px) * Cout + co) * Cin
                                        + ci) * T + ty) * T + tx
                                accs[co][py][px] = (accs[co][py][px]
                                                    + w_ref[idx] * patch)

        # Scatter the parity blocks into the full-resolution output layout with
        # tiny 0/1 matmuls on the (otherwise idle) MXU, add bias, and store.
        rr = jax.lax.broadcasted_iota(jnp.int32, (Ho, H), 0)
        rc = jax.lax.broadcasted_iota(jnp.int32, (Ho, H), 1)
        cr = jax.lax.broadcasted_iota(jnp.int32, (W, Wo), 0)
        cc = jax.lax.broadcasted_iota(jnp.int32, (W, Wo), 1)
        Rm = [jnp.where(rr == scale * rc + p, 1.0, 0.0).astype(f32)
              for p in range(scale)]
        Cm = [jnp.where(cc == scale * cr + p, 1.0, 0.0).astype(f32)
              for p in range(scale)]

        for co in range(Cout):
            y = jnp.full((Ho, Wo), b_ref[co], dtype=f32)
            for py in range(scale):
                row = None  # (H, Wo): columns already interleaved
                for px in range(scale):
                    contrib = jnp.dot(accs[co][py][px], Cm[px],
                                      preferred_element_type=f32)
                    row = contrib if row is None else row + contrib
                y = y + jnp.dot(Rm[py], row, preferred_element_type=f32)
            o_ref[0, co, :, :] = y.astype(o_ref.dtype)

    return kernel


@functools.partial(jax.jit, static_argnames=("scale_factor",))
def deconv2d_forward(x, w, b, *, scale_factor=2):
    """DeConv2d.forward: nearest-neighbour 2x upsample then
    Conv2d(kernel_size=K, stride=1, padding=K//2), fused into one Pallas call.
    x: (B, Cin, H, W), w: (Cout, Cin, K, K), b: (Cout,)."""
    B, Cin, H, W = x.shape
    Cout, Cin2, K, K2 = w.shape
    assert Cin2 == Cin and K2 == K and K % 2 == 1
    # TODO(synk): only stride=1 and scale_factor=2 (the module defaults used by
    # the autoencoder) are implemented here.
    assert scale_factor == 2, "scale_factor != 2 not implemented"
    scale = scale_factor

    groups = _parity_groups(K, scale)
    tap_counts = {len(g) for g in groups}
    assert len(tap_counts) == 1
    T = tap_counts.pop()
    offsets = [[d for d, _ in g] for g in groups]

    w_eff = _fold_weights(w.astype(jnp.float32), groups, scale).reshape(-1)

    Ho, Wo = scale * H, scale * W
    kernel = _make_deconv2d_kernel(Cin, Cout, H, W, scale, offsets, T)
    return pl.pallas_call(
        kernel,
        out_shape=jax.ShapeDtypeStruct((B, Cout, Ho, Wo), jnp.float32),
        grid=(B,),
        in_specs=[
            pl.BlockSpec((1, Cin, H, W), lambda bb: (bb, 0, 0, 0)),
            pl.BlockSpec(memory_space=pltpu.MemorySpace.SMEM),
            pl.BlockSpec(memory_space=pltpu.MemorySpace.SMEM),
        ],
        out_specs=pl.BlockSpec((1, Cout, Ho, Wo), lambda bb: (bb, 0, 0, 0)),
        compiler_params=pltpu.CompilerParams(
            dimension_semantics=("parallel",)),
    )(x.astype(jnp.float32), w_eff, b.astype(jnp.float32))


def reference_forward(x, w, b, *, scale_factor=2):
    """Pure-JAX reference (XLA): explicit upsample + conv."""
    B, Cin, H, W = x.shape
    s = scale_factor
    u = jnp.broadcast_to(x[:, :, :, None, :, None], (B, Cin, H, s, W, s))
    u = u.reshape(B, Cin, s * H, s * W)
    P = w.shape[-1] // 2
    y = jax.lax.conv_general_dilated(
        u, w, window_strides=(1, 1), padding=[(P, P), (P, P)],
        dimension_numbers=("NCHW", "OIHW", "NCHW"))
    return y + b[None, :, None, None]


if __name__ == "__main__":
    key = jax.random.PRNGKey(0)
    k1, k2, k3, k4, k5, k6 = jax.random.split(key, 6)

    # DeConv2d(4 -> 2, kernel_size=3) on a (2, 4, 16, 16) input -> (2, 2, 32, 32)
    Cin, Cout, K = 4, 2, 3
    fan_in = Cin * K * K
    w1 = jax.random.normal(k1, (Cout, Cin, K, K), jnp.float32) * np.sqrt(2.0 / fan_in)
    b1 = jax.random.uniform(k2, (Cout,), jnp.float32,
                            -1.0 / np.sqrt(fan_in), 1.0 / np.sqrt(fan_in))
    x1 = jax.random.normal(k3, (2, Cin, 16, 16), jnp.float32)

    out1 = jax.block_until_ready(deconv2d_forward(x1, w1, b1))
    assert out1.shape == (2, Cout, 32, 32), out1.shape
    np.testing.assert_allclose(np.asarray(out1),
                               np.asarray(reference_forward(x1, w1, b1)),
                               rtol=1e-4, atol=1e-4)

    # DeConv2d(2 -> 1, kernel_size=3) at a larger spatial size -> (2, 1, 64, 64)
    Cin, Cout, K = 2, 1, 3
    fan_in = Cin * K * K
    w2 = jax.random.normal(k4, (Cout, Cin, K, K), jnp.float32) * np.sqrt(2.0 / fan_in)
    b2 = jax.random.uniform(k5, (Cout,), jnp.float32,
                            -1.0 / np.sqrt(fan_in), 1.0 / np.sqrt(fan_in))
    x2 = jax.random.normal(k6, (2, Cin, 32, 32), jnp.float32)

    out2 = jax.block_until_ready(deconv2d_forward(x2, w2, b2))
    assert out2.shape == (2, Cout, 64, 64), out2.shape
    np.testing.assert_allclose(np.asarray(out2),
                               np.asarray(reference_forward(x2, w2, b2)),
                               rtol=1e-4, atol=1e-4)

    print("KERNEL_OK")
</pallas_src>

<mosaic_0001>
module attributes {stable_mosaic.version = 11 : i64} {
  func.func @kernel(%arg0: i32, %arg1: memref<1x4x16x16xf32, #tpu.memory_space<vmem>>, %arg2: memref<128xf32, #tpu.memory_space<smem>>, %arg3: memref<2xf32, #tpu.memory_space<smem>>, %arg4: memref<1x2x32x32xf32, #tpu.memory_space<vmem>>) attributes {dimension_semantics = [#tpu.dimension_semantics<parallel>], iteration_bounds = array<i64: 2>, scalar_prefetch = 0 : i64, scratch_operands = 0 : i64, tpu.core_type = #tpu.core_type<tc>, window_params = [{transform_indices = @transform_0, window_bounds = array<i64: 1, 4, 16, 16>}, {transform_indices = @transform_1, window_bounds = array<i64: 128>}, {transform_indices = @transform_2, window_bounds = array<i64: 2>}, {transform_indices = @transform_3, window_bounds = array<i64: 1, 2, 32, 32>}]} {
    %cst = arith.constant 0.000000e+00 : f32
    %0 = vector.broadcast %cst : f32 to vector<16x16xf32>
    %cst_0 = arith.constant 0.000000e+00 : f32
    %1 = vector.broadcast %cst_0 : f32 to vector<16x16xf32>
    %cst_1 = arith.constant 0.000000e+00 : f32
    %2 = vector.broadcast %cst_1 : f32 to vector<16x16xf32>
    %cst_2 = arith.constant 0.000000e+00 : f32
    %3 = vector.broadcast %cst_2 : f32 to vector<16x16xf32>
    %cst_3 = arith.constant 0.000000e+00 : f32
    %4 = vector.broadcast %cst_3 : f32 to vector<16x16xf32>
    %cst_4 = arith.constant 0.000000e+00 : f32
    %5 = vector.broadcast %cst_4 : f32 to vector<16x16xf32>
    %cst_5 = arith.constant 0.000000e+00 : f32
    %6 = vector.broadcast %cst_5 : f32 to vector<16x16xf32>
    %cst_6 = arith.constant 0.000000e+00 : f32
    %7 = vector.broadcast %cst_6 : f32 to vector<16x16xf32>
    %c0 = arith.constant 0 : index
    %c0_7 = arith.constant 0 : index
    %c0_8 = arith.constant 0 : index
    %c0_9 = arith.constant 0 : index
    %8 = vector.load %arg1[%c0, %c0_7, %c0_8, %c0_9] : memref<1x4x16x16xf32, #tpu.memory_space<vmem>>, vector<1x1x16x16xf32>
    %9 = vector.shape_cast %8 : vector<1x1x16x16xf32> to vector<16x16xf32>
    %cst_10 = arith.constant 0.000000e+00 : f32
    %10 = vector.broadcast %cst_10 : f32 to vector<16x1xf32>
    %11 = vector.extract_strided_slice %9 {offsets = [0, 0], sizes = [16, 15], strides = [1, 1]} : vector<16x16xf32> to vector<16x15xf32>
    %12 = tpu.concatenate %10, %11 in 1 : vector<16x1xf32>, vector<16x15xf32> -> vector<16x16xf32>
    %cst_11 = arith.constant 0.000000e+00 : f32
    %13 = vector.broadcast %cst_11 : f32 to vector<1x16xf32>
    %14 = vector.extract_strided_slice %12 {offsets = [0, 0], sizes = [15, 16], strides = [1, 1]} : vector<16x16xf32> to vector<15x16xf32>
    %15 = tpu.concatenate %13, %14 in 0 : vector<1x16xf32>, vector<15x16xf32> -> vector<16x16xf32>
    %c0_12 = arith.constant 0 : index
    %16 = memref.load %arg2[%c0_12] : memref<128xf32, #tpu.memory_space<smem>>
    %17 = vector.broadcast %16 : f32 to vector<16x16xf32>
    %18 = arith.mulf %17, %15 : vector<16x16xf32>
    %19 = arith.addf %0, %18 : vector<16x16xf32>
    %c16 = arith.constant 16 : index
    %20 = memref.load %arg2[%c16] : memref<128xf32, #tpu.memory_space<smem>>
    %21 = vector.broadcast %20 : f32 to vector<16x16xf32>
    %22 = arith.mulf %21, %15 : vector<16x16xf32>
    %23 = arith.addf %4, %22 : vector<16x16xf32>
    %c2 = arith.constant 2 : index
    %24 = memref.load %arg2[%c2] : memref<128xf32, #tpu.memory_space<smem>>
    %25 = vector.broadcast %24 : f32 to vector<16x16xf32>
    %26 = arith.mulf %25, %12 : vector<16x16xf32>
    %27 = arith.addf %19, %26 : vector<16x16xf32>
    %c18 = arith.constant 18 : index
    %28 = memref.load %arg2[%c18] : memref<128xf32, #tpu.memory_space<smem>>
    %29 = vector.broadcast %28 : f32 to vector<16x16xf32>
    %30 = arith.mulf %29, %12 : vector<16x16xf32>
    %31 = arith.addf %23, %30 : vector<16x16xf32>
    %c64 = arith.constant 64 : index
    %32 = memref.load %arg2[%c64] : memref<128xf32, #tpu.memory_space<smem>>
    %33 = vector.broadcast %32 : f32 to vector<16x16xf32>
    %34 = arith.mulf %33, %12 : vector<16x16xf32>
    %35 = arith.addf %2, %34 : vector<16x16xf32>
    %c80 = arith.constant 80 : index
    %36 = memref.load %arg2[%c80] : memref<128xf32, #tpu.memory_space<smem>>
    %37 = vector.broadcast %36 : f32 to vector<16x16xf32>
    %38 = arith.mulf %37, %12 : vector<16x16xf32>
    %39 = arith.addf %6, %38 : vector<16x16xf32>
    %cst_13 = arith.constant 0.000000e+00 : f32
    %40 = vector.broadcast %cst_13 : f32 to vector<1x16xf32>
    %41 = vector.extract_strided_slice %12 {offsets = [1, 0], sizes = [15, 16], strides = [1, 1]} : vector<16x16xf32> to vector<15x16xf32>
    %42 = tpu.concatenate %41, %40 in 0 : vector<15x16xf32>, vector<1x16xf32> -> vector<16x16xf32>
    %c66 = arith.constant 66 : index
    %43 = memref.load %arg2[%c66] : memref<128xf32, #tpu.memory_space<smem>>
    %44 = vector.broadcast %43 : f32 to vector<16x16xf32>
    %45 = arith.mulf %44, %42 : vector<16x16xf32>
    %46 = arith.addf %35, %45 : vector<16x16xf32>
    %c82 = arith.constant 82 : index
    %47 = memref.load %arg2[%c82] : memref<128xf32, #tpu.memory_space<smem>>
    %48 = vector.broadcast %47 : f32 to vector<16x16xf32>
    %49 = arith.mulf %48, %42 : vector<16x16xf32>
    %50 = arith.addf %39, %49 : vector<16x16xf32>
    %cst_14 = arith.constant 0.000000e+00 : f32
    %51 = vector.broadcast %cst_14 : f32 to vector<1x16xf32>
    %52 = vector.extract_strided_slice %9 {offsets = [0, 0], sizes = [15, 16], strides = [1, 1]} : vector<16x16xf32> to vector<15x16xf32>
    %53 = tpu.concatenate %51, %52 in 0 : vector<1x16xf32>, vector<15x16xf32> -> vector<16x16xf32>
    %c1 = arith.constant 1 : index
    %54 = memref.load %arg2[%c1] : memref<128xf32, #tpu.memory_space<smem>>
    %55 = vector.broadcast %54 : f32 to vector<16x16xf32>
    %56 = arith.mulf %55, %53 : vector<16x16xf32>
    %57 = arith.addf %27, %56 : vector<16x16xf32>
    %c17 = arith.constant 17 : index
    %58 = memref.load %arg2[%c17] : memref<128xf32, #tpu.memory_space<smem>>
    %59 = vector.broadcast %58 : f32 to vector<16x16xf32>
    %60 = arith.mulf %59, %53 : vector<16x16xf32>
    %61 = arith.addf %31, %60 : vector<16x16xf32>
    %c32 = arith.constant 32 : index
    %62 = memref.load %arg2[%c32] : memref<128xf32, #tpu.memory_space<smem>>
    %63 = vector.broadcast %62 : f32 to vector<16x16xf32>
    %64 = arith.mulf %63, %53 : vector<16x16xf32>
    %65 = arith.addf %1, %64 : vector<16x16xf32>
    %c48 = arith.constant 48 : index
    %66 = memref.load %arg2[%c48] : memref<128xf32, #tpu.memory_space<smem>>
    %67 = vector.broadcast %66 : f32 to vector<16x16xf32>
    %68 = arith.mulf %67, %53 : vector<16x16xf32>
    %69 = arith.addf %5, %68 : vector<16x16xf32>
    %c3 = arith.constant 3 : index
    %70 = memref.load %arg2[%c3] : memref<128xf32, #tpu.memory_space<smem>>
    %71 = vector.broadcast %70 : f32 to vector<16x16xf32>
    %72 = arith.mulf %71, %9 : vector<16x16xf32>
    %73 = arith.addf %57, %72 : vector<16x16xf32>
    %c19 = arith.constant 19 : index
    %74 = memref.load %arg2[%c19] : memref<128xf32, #tpu.memory_space<smem>>
    %75 = vector.broadcast %74 : f32 to vector<16x16xf32>
    %76 = arith.mulf %75, %9 : vector<16x16xf32>
    %77 = arith.addf %61, %76 : vector<16x16xf32>
    %c34 = arith.constant 34 : index
    %78 = memref.load %arg2[%c34] : memref<128xf32, #tpu.memory_space<smem>>
    %79 = vector.broadcast %78 : f32 to vector<16x16xf32>
    %80 = arith.mulf %79, %9 : vector<16x16xf32>
    %81 = arith.addf %65, %80 : vector<16x16xf32>
    %c50 = arith.constant 50 : index
    %82 = memref.load %arg2[%c50] : memref<128xf32, #tpu.memory_space<smem>>
    %83 = vector.broadcast %82 : f32 to vector<16x16xf32>
    %84 = arith.mulf %83, %9 : vector<16x16xf32>
    %85 = arith.addf %69, %84 : vector<16x16xf32>
    %c65 = arith.constant 65 : index
    %86 = memref.load %arg2[%c65] : memref<128xf32, #tpu.memory_space<smem>>
    %87 = vector.broadcast %86 : f32 to vector<16x16xf32>
    %88 = arith.mulf %87, %9 : vector<16x16xf32>
    %89 = arith.addf %46, %88 : vector<16x16xf32>
    %c81 = arith.constant 81 : index
    %90 = memref.load %arg2[%c81] : memref<128xf32, #tpu.memory_space<smem>>
    %91 = vector.broadcast %90 : f32 to vector<16x16xf32>
    %92 = arith.mulf %91, %9 : vector<16x16xf32>
    %93 = arith.addf %50, %92 : vector<16x16xf32>
    %c96 = arith.constant 96 : index
    %94 = memref.load %arg2[%c96] : memref<128xf32, #tpu.memory_space<smem>>
    %95 = vector.broadcast %94 : f32 to vector<16x16xf32>
    %96 = arith.mulf %95, %9 : vector<16x16xf32>
    %97 = arith.addf %3, %96 : vector<16x16xf32>
    %c112 = arith.constant 112 : index
    %98 = memref.load %arg2[%c112] : memref<128xf32, #tpu.memory_space<smem>>
    %99 = vector.broadcast %98 : f32 to vector<16x16xf32>
    %100 = arith.mulf %99, %9 : vector<16x16xf32>
    %101 = arith.addf %7, %100 : vector<16x16xf32>
    %cst_15 = arith.constant 0.000000e+00 : f32
    %102 = vector.broadcast %cst_15 : f32 to vector<1x16xf32>
    %103 = vector.extract_strided_slice %9 {offsets = [1, 0], sizes = [15, 16], strides = [1, 1]} : vector<16x16xf32> to vector<15x16xf32>
    %104 = tpu.concatenate %103, %102 in 0 : vector<15x16xf32>, vector<1x16xf32> -> vector<16x16xf32>
    %c67 = arith.constant 67 : index
    %105 = memref.load %arg2[%c67] : memref<128xf32, #tpu.memory_space<smem>>
    %106 = vector.broadcast %105 : f32 to vector<16x16xf32>
    %107 = arith.mulf %106, %104 : vector<16x16xf32>
    %108 = arith.addf %89, %107 : vector<16x16xf32>
    %c83 = arith.constant 83 : index
    %109 = memref.load %arg2[%c83] : memref<128xf32, #tpu.memory_space<smem>>
    %110 = vector.broadcast %109 : f32 to vector<16x16xf32>
    %111 = arith.mulf %110, %104 : vector<16x16xf32>
    %112 = arith.addf %93, %111 : vector<16x16xf32>
    %c98 = arith.constant 98 : index
    %113 = memref.load %arg2[%c98] : memref<128xf32, #tpu.memory_space<smem>>
    %114 = vector.broadcast %113 : f32 to vector<16x16xf32>
    %115 = arith.mulf %114, %104 : vector<16x16xf32>
    %116 = arith.addf %97, %115 : vector<16x16xf32>
    %c114 = arith.constant 114 : index
    %117 = memref.load %arg2[%c114] : memref<128xf32, #tpu.memory_space<smem>>
    %118 = vector.broadcast %117 : f32 to vector<16x16xf32>
    %119 = arith.mulf %118, %104 : vector<16x16xf32>
    %120 = arith.addf %101, %119 : vector<16x16xf32>
    %cst_16 = arith.constant 0.000000e+00 : f32
    %121 = vector.broadcast %cst_16 : f32 to vector<16x1xf32>
    %122 = vector.extract_strided_slice %9 {offsets = [0, 1], sizes = [16, 15], strides = [1, 1]} : vector<16x16xf32> to vector<16x15xf32>
    %123 = tpu.concatenate %122, %121 in 1 : vector<16x15xf32>, vector<16x1xf32> -> vector<16x16xf32>
    %cst_17 = arith.constant 0.000000e+00 : f32
    %124 = vector.broadcast %cst_17 : f32 to vector<1x16xf32>
    %125 = vector.extract_strided_slice %123 {offsets = [0, 0], sizes = [15, 16], strides = [1, 1]} : vector<16x16xf32> to vector<15x16xf32>
    %126 = tpu.concatenate %124, %125 in 0 : vector<1x16xf32>, vector<15x16xf32> -> vector<16x16xf32>
    %c33 = arith.constant 33 : index
    %127 = memref.load %arg2[%c33] : memref<128xf32, #tpu.memory_space<smem>>
    %128 = vector.broadcast %127 : f32 to vector<16x16xf32>
    %129 = arith.mulf %128, %126 : vector<16x16xf32>
    %130 = arith.addf %81, %129 : vector<16x16xf32>
    %c49 = arith.constant 49 : index
    %131 = memref.load %arg2[%c49] : memref<128xf32, #tpu.memory_space<smem>>
    %132 = vector.broadcast %131 : f32 to vector<16x16xf32>
    %133 = arith.mulf %132, %126 : vector<16x16xf32>
    %134 = arith.addf %85, %133 : vector<16x16xf32>
    %c35 = arith.constant 35 : index
    %135 = memref.load %arg2[%c35] : memref<128xf32, #tpu.memory_space<smem>>
    %136 = vector.broadcast %135 : f32 to vector<16x16xf32>
    %137 = arith.mulf %136, %123 : vector<16x16xf32>
    %138 = arith.addf %130, %137 : vector<16x16xf32>
    %c51 = arith.constant 51 : index
    %139 = memref.load %arg2[%c51] : memref<128xf32, #tpu.memory_space<smem>>
    %140 = vector.broadcast %139 : f32 to vector<16x16xf32>
    %141 = arith.mulf %140, %123 : vector<16x16xf32>
    %142 = arith.addf %134, %141 : vector<16x16xf32>
    %c97 = arith.constant 97 : index
    %143 = memref.load %arg2[%c97] : memref<128xf32, #tpu.memory_space<smem>>
    %144 = vector.broadcast %143 : f32 to vector<16x16xf32>
    %145 = arith.mulf %144, %123 : vector<16x16xf32>
    %146 = arith.addf %116, %145 : vector<16x16xf32>
    %c113 = arith.constant 113 : index
    %147 = memref.load %arg2[%c113] : memref<128xf32, #tpu.memory_space<smem>>
    %148 = vector.broadcast %147 : f32 to vector<16x16xf32>
    %149 = arith.mulf %148, %123 : vector<16x16xf32>
    %150 = arith.addf %120, %149 : vector<16x16xf32>
    %cst_18 = arith.constant 0.000000e+00 : f32
    %151 = vector.broadcast %cst_18 : f32 to vector<1x16xf32>
    %152 = vector.extract_strided_slice %123 {offsets = [1, 0], sizes = [15, 16], strides = [1, 1]} : vector<16x16xf32> to vector<15x16xf32>
    %153 = tpu.concatenate %152, %151 in 0 : vector<15x16xf32>, vector<1x16xf32> -> vector<16x16xf32>
    %c99 = arith.constant 99 : index
    %154 = memref.load %arg2[%c99] : memref<128xf32, #tpu.memory_space<smem>>
    %155 = vector.broadcast %154 : f32 to vector<16x16xf32>
    %156 = arith.mulf %155, %153 : vector<16x16xf32>
    %157 = arith.addf %146, %156 : vector<16x16xf32>
    %c115 = arith.constant 115 : index
    %158 = memref.load %arg2[%c115] : memref<128xf32, #tpu.memory_space<smem>>
    %159 = vector.broadcast %158 : f32 to vector<16x16xf32>
    %160 = arith.mulf %159, %153 : vector<16x16xf32>
    %161 = arith.addf %150, %160 : vector<16x16xf32>
    %c0_19 = arith.constant 0 : index
    %c1_20 = arith.constant 1 : index
    %c0_21 = arith.constant 0 : index
    %c0_22 = arith.constant 0 : index
    %162 = vector.load %arg1[%c0_19, %c1_20, %c0_21, %c0_22] : memref<1x4x16x16xf32, #tpu.memory_space<vmem>>, vector<1x1x16x16xf32>
    %163 = vector.shape_cast %162 : vector<1x1x16x16xf32> to vector<16x16xf32>
    %cst_23 = arith.constant 0.000000e+00 : f32
    %164 = vector.broadcast %cst_23 : f32 to vector<16x1xf32>
    %165 = vector.extract_strided_slice %163 {offsets = [0, 0], sizes = [16, 15], strides = [1, 1]} : vector<16x16xf32> to vector<16x15xf32>
    %166 = tpu.concatenate %164, %165 in 1 : vector<16x1xf32>, vector<16x15xf32> -> vector<16x16xf32>
    %cst_24 = arith.constant 0.000000e+00 : f32
    %167 = vector.broadcast %cst_24 : f32 to vector<1x16xf32>
    %168 = vector.extract_strided_slice %166 {offsets = [0, 0], sizes = [15, 16], strides = [1, 1]} : vector<16x16xf32> to vector<15x16xf32>
    %169 = tpu.concatenate %167, %168 in 0 : vector<1x16xf32>, vector<15x16xf32> -> vector<16x16xf32>
    %c4 = arith.constant 4 : index
    %170 = memref.load %arg2[%c4] : memref<128xf32, #tpu.memory_space<smem>>
    %171 = vector.broadcast %170 : f32 to vector<16x16xf32>
    %172 = arith.mulf %171, %169 : vector<16x16xf32>
    %173 = arith.addf %73, %172 : vector<16x16xf32>
    %c20 = arith.constant 20 : index
    %174 = memref.load %arg2[%c20] : memref<128xf32, #tpu.memory_space<smem>>
    %175 = vector.broadcast %174 : f32 to vector<16x16xf32>
    %176 = arith.mulf %175, %169 : vector<16x16xf32>
    %177 = arith.addf %77, %176 : vector<16x16xf32>
    %c6 = arith.constant 6 : index
    %178 = memref.load %arg2[%c6] : memref<128xf32, #tpu.memory_space<smem>>
    %179 = vector.broadcast %178 : f32 to vector<16x16xf32>
    %180 = arith.mulf %179, %166 : vector<16x16xf32>
    %181 = arith.addf %173, %180 : vector<16x16xf32>
    %c22 = arith.constant 22 : index
    %182 = memref.load %arg2[%c22] : memref<128xf32, #tpu.memory_space<smem>>
    %183 = vector.broadcast %182 : f32 to vector<16x16xf32>
    %184 = arith.mulf %183, %166 : vector<16x16xf32>
    %185 = arith.addf %177, %184 : vector<16x16xf32>
    %c68 = arith.constant 68 : index
    %186 = memref.load %arg2[%c68] : memref<128xf32, #tpu.memory_space<smem>>
    %187 = vector.broadcast %186 : f32 to vector<16x16xf32>
    %188 = arith.mulf %187, %166 : vector<16x16xf32>
    %189 = arith.addf %108, %188 : vector<16x16xf32>
    %c84 = arith.constant 84 : index
    %190 = memref.load %arg2[%c84] : memref<128xf32, #tpu.memory_space<smem>>
    %191 = vector.broadcast %190 : f32 to vector<16x16xf32>
    %192 = arith.mulf %191, %166 : vector<16x16xf32>
    %193 = arith.addf %112, %192 : vector<16x16xf32>
    %cst_25 = arith.constant 0.000000e+00 : f32
    %194 = vector.broadcast %cst_25 : f32 to vector<1x16xf32>
    %195 = vector.extract_strided_slice %166 {offsets = [1, 0], sizes = [15, 16], strides = [1, 1]} : vector<16x16xf32> to vector<15x16xf32>
    %196 = tpu.concatenate %195, %194 in 0 : vector<15x16xf32>, vector<1x16xf32> -> vector<16x16xf32>
    %c70 = arith.constant 70 : index
    %197 = memref.load %arg2[%c70] : memref<128xf32, #tpu.memory_space<smem>>
    %198 = vector.broadcast %197 : f32 to vector<16x16xf32>
    %199 = arith.mulf %198, %196 : vector<16x16xf32>
    %200 = arith.addf %189, %199 : vector<16x16xf32>
    %c86 = arith.constant 86 : index
    %201 = memref.load %arg2[%c86] : memref<128xf32, #tpu.memory_space<smem>>
    %202 = vector.broadcast %201 : f32 to vector<16x16xf32>
    %203 = arith.mulf %202, %196 : vector<16x16xf32>
    %204 = arith.addf %193, %203 : vector<16x16xf32>
    %cst_26 = arith.constant 0.000000e+00 : f32
    %205 = vector.broadcast %cst_26 : f32 to vector<1x16xf32>
    %206 = vector.extract_strided_slice %163 {offsets = [0, 0], sizes = [15, 16], strides = [1, 1]} : vector<16x16xf32> to vector<15x16xf32>
    %207 = tpu.concatenate %205, %206 in 0 : vector<1x16xf32>, vector<15x16xf32> -> vector<16x16xf32>
    %c5 = arith.constant 5 : index
    %208 = memref.load %arg2[%c5] : memref<128xf32, #tpu.memory_space<smem>>
    %209 = vector.broadcast %208 : f32 to vector<16x16xf32>
    %210 = arith.mulf %209, %207 : vector<16x16xf32>
    %211 = arith.addf %181, %210 : vector<16x16xf32>
    %c21 = arith.constant 21 : index
    %212 = memref.load %arg2[%c21] : memref<128xf32, #tpu.memory_space<smem>>
    %213 = vector.broadcast %212 : f32 to vector<16x16xf32>
    %214 = arith.mulf %213, %207 : vector<16x16xf32>
    %215 = arith.addf %185, %214 : vector<16x16xf32>
    %c36 = arith.constant 36 : index
    %216 = memref.load %arg2[%c36] : memref<128xf32, #tpu.memory_space<smem>>
    %217 = vector.broadcast %216 : f32 to vector<16x16xf32>
    %218 = arith.mulf %217, %207 : vector<16x16xf32>
    %219 = arith.addf %138, %218 : vector<16x16xf32>
    %c52 = arith.constant 52 : index
    %220 = memref.load %arg2[%c52] : memref<128xf32, #tpu.memory_space<smem>>
    %221 = vector.broadcast %220 : f32 to vector<16x16xf32>
    %222 = arith.mulf %221, %207 : vector<16x16xf32>
    %223 = arith.addf %142, %222 : vector<16x16xf32>
    %c7 = arith.constant 7 : index
    %224 = memref.load %arg2[%c7] : memref<128xf32, #tpu.memory_space<smem>>
    %225 = vector.broadcast %224 : f32 to vector<16x16xf32>
    %226 = arith.mulf %225, %163 : vector<16x16xf32>
    %227 = arith.addf %211, %226 : vector<16x16xf32>
    %c23 = arith.constant 23 : index
    %228 = memref.load %arg2[%c23] : memref<128xf32, #tpu.memory_space<smem>>
    %229 = vector.broadcast %228 : f32 to vector<16x16xf32>
    %230 = arith.mulf %229, %163 : vector<16x16xf32>
    %231 = arith.addf %215, %230 : vector<16x16xf32>
    %c38 = arith.constant 38 : index
    %232 = memref.load %arg2[%c38] : memref<128xf32, #tpu.memory_space<smem>>
    %233 = vector.broadcast %232 : f32 to vector<16x16xf32>
    %234 = arith.mulf %233, %163 : vector<16x16xf32>
    %235 = arith.addf %219, %234 : vector<16x16xf32>
    %c54 = arith.constant 54 : index
    %236 = memref.load %arg2[%c54] : memref<128xf32, #tpu.memory_space<smem>>
    %237 = vector.broadcast %236 : f32 to vector<16x16xf32>
    %238 = arith.mulf %237, %163 : vector<16x16xf32>
    %239 = arith.addf %223, %238 : vector<16x16xf32>
    %c69 = arith.constant 69 : index
    %240 = memref.load %arg2[%c69] : memref<128xf32, #tpu.memory_space<smem>>
    %241 = vector.broadcast %240 : f32 to vector<16x16xf32>
    %242 = arith.mulf %241, %163 : vector<16x16xf32>
    %243 = arith.addf %200, %242 : vector<16x16xf32>
    %c85 = arith.constant 85 : index
    %244 = memref.load %arg2[%c85] : memref<128xf32, #tpu.memory_space<smem>>
    %245 = vector.broadcast %244 : f32 to vector<16x16xf32>
    %246 = arith.mulf %245, %163 : vector<16x16xf32>
    %247 = arith.addf %204, %246 : vector<16x16xf32>
    %c100 = arith.constant 100 : index
    %248 = memref.load %arg2[%c100] : memref<128xf32, #tpu.memory_space<smem>>
    %249 = vector.broadcast %248 : f32 to vector<16x16xf32>
    %250 = arith.mulf %249, %163 : vector<16x16xf32>
    %251 = arith.addf %157, %250 : vector<16x16xf32>
    %c116 = arith.constant 116 : index
    %252 = memref.load %arg2[%c116] : memref<128xf32, #tpu.memory_space<smem>>
    %253 = vector.broadcast %252 : f32 to vector<16x16xf32>
    %254 = arith.mulf %253, %163 : vector<16x16xf32>
    %255 = arith.addf %161, %254 : vector<16x16xf32>
    %cst_27 = arith.constant 0.000000e+00 : f32
    %256 = vector.broadcast %cst_27 : f32 to vector<1x16xf32>
    %257 = vector.extract_strided_slice %163 {offsets = [1, 0], sizes = [15, 16], strides = [1, 1]} : vector<16x16xf32> to vector<15x16xf32>
    %258 = tpu.concatenate %257, %256 in 0 : vector<15x16xf32>, vector<1x16xf32> -> vector<16x16xf32>
    %c71 = arith.constant 71 : index
    %259 = memref.load %arg2[%c71] : memref<128xf32, #tpu.memory_space<smem>>
    %260 = vector.broadcast %259 : f32 to vector<16x16xf32>
    %261 = arith.mulf %260, %258 : vector<16x16xf32>
    %262 = arith.addf %243, %261 : vector<16x16xf32>
    %c87 = arith.constant 87 : index
    %263 = memref.load %arg2[%c87] : memref<128xf32, #tpu.memory_space<smem>>
    %264 = vector.broadcast %263 : f32 to vector<16x16xf32>
    %265 = arith.mulf %264, %258 : vector<16x16xf32>
    %266 = arith.addf %247, %265 : vector<16x16xf32>
    %c102 = arith.constant 102 : index
    %267 = memref.load %arg2[%c102] : memref<128xf32, #tpu.memory_space<smem>>
    %268 = vector.broadcast %267 : f32 to vector<16x16xf32>
    %269 = arith.mulf %268, %258 : vector<16x16xf32>
    %270 = arith.addf %251, %269 : vector<16x16xf32>
    %c118 = arith.constant 118 : index
    %271 = memref.load %arg2[%c118] : memref<128xf32, #tpu.memory_space<smem>>
    %272 = vector.broadcast %271 : f32 to vector<16x16xf32>
    %273 = arith.mulf %272, %258 : vector<16x16xf32>
    %274 = arith.addf %255, %273 : vector<16x16xf32>
    %cst_28 = arith.constant 0.000000e+00 : f32
    %275 = vector.broadcast %cst_28 : f32 to vector<16x1xf32>
    %276 = vector.extract_strided_slice %163 {offsets = [0, 1], sizes = [16, 15], strides = [1, 1]} : vector<16x16xf32> to vector<16x15xf32>
    %277 = tpu.concatenate %276, %275 in 1 : vector<16x15xf32>, vector<16x1xf32> -> vector<16x16xf32>
    %cst_29 = arith.constant 0.000000e+00 : f32
    %278 = vector.broadcast %cst_29 : f32 to vector<1x16xf32>
    %279 = vector.extract_strided_slice %277 {offsets = [0, 0], sizes = [15, 16], strides = [1, 1]} : vector<16x16xf32> to vector<15x16xf32>
    %280 = tpu.concatenate %278, %279 in 0 : vector<1x16xf32>, vector<15x16xf32> -> vector<16x16xf32>
    %c37 = arith.constant 37 : index
    %281 = memref.load %arg2[%c37] : memref<128xf32, #tpu.memory_space<smem>>
    %282 = vector.broadcast %281 : f32 to vector<16x16xf32>
    %283 = arith.mulf %282, %280 : vector<16x16xf32>
    %284 = arith.addf %235, %283 : vector<16x16xf32>
    %c53 = arith.constant 53 : index
    %285 = memref.load %arg2[%c53] : memref<128xf32, #tpu.memory_space<smem>>
    %286 = vector.broadcast %285 : f32 to vector<16x16xf32>
    %287 = arith.mulf %286, %280 : vector<16x16xf32>
    %288 = arith.addf %239, %287 : vector<16x16xf32>
    %c39 = arith.constant 39 : index
    %289 = memref.load %arg2[%c39] : memref<128xf32, #tpu.memory_space<smem>>
    %290 = vector.broadcast %289 : f32 to vector<16x16xf32>
    %291 = arith.mulf %290, %277 : vector<16x16xf32>
    %292 = arith.addf %284, %291 : vector<16x16xf32>
    %c55 = arith.constant 55 : index
    %293 = memref.load %arg2[%c55] : memref<128xf32, #tpu.memory_space<smem>>
    %294 = vector.broadcast %293 : f32 to vector<16x16xf32>
    %295 = arith.mulf %294, %277 : vector<16x16xf32>
    %296 = arith.addf %288, %295 : vector<16x16xf32>
    %c101 = arith.constant 101 : index
    %297 = memref.load %arg2[%c101] : memref<128xf32, #tpu.memory_space<smem>>
    %298 = vector.broadcast %297 : f32 to vector<16x16xf32>
    %299 = arith.mulf %298, %277 : vector<16x16xf32>
    %300 = arith.addf %270, %299 : vector<16x16xf32>
    %c117 = arith.constant 117 : index
    %301 = memref.load %arg2[%c117] : memref<128xf32, #tpu.memory_space<smem>>
    %302 = vector.broadcast %301 : f32 to vector<16x16xf32>
    %303 = arith.mulf %302, %277 : vector<16x16xf32>
    %304 = arith.addf %274, %303 : vector<16x16xf32>
    %cst_30 = arith.constant 0.000000e+00 : f32
    %305 = vector.broadcast %cst_30 : f32 to vector<1x16xf32>
    %306 = vector.extract_strided_slice %277 {offsets = [1, 0], sizes = [15, 16], strides = [1, 1]} : vector<16x16xf32> to vector<15x16xf32>
    %307 = tpu.concatenate %306, %305 in 0 : vector<15x16xf32>, vector<1x16xf32> -> vector<16x16xf32>
    %c103 = arith.constant 103 : index
    %308 = memref.load %arg2[%c103] : memref<128xf32, #tpu.memory_space<smem>>
    %309 = vector.broadcast %308 : f32 to vector<16x16xf32>
    %310 = arith.mulf %309, %307 : vector<16x16xf32>
    %311 = arith.addf %300, %310 : vector<16x16xf32>
    %c119 = arith.constant 119 : index
    %312 = memref.load %arg2[%c119] : memref<128xf32, #tpu.memory_space<smem>>
    %313 = vector.broadcast %312 : f32 to vector<16x16xf32>
    %314 = arith.mulf %313, %307 : vector<16x16xf32>
    %315 = arith.addf %304, %314 : vector<16x16xf32>
    %c0_31 = arith.constant 0 : index
    %c2_32 = arith.constant 2 : index
    %c0_33 = arith.constant 0 : index
    %c0_34 = arith.constant 0 : index
    %316 = vector.load %arg1[%c0_31, %c2_32, %c0_33, %c0_34] : memref<1x4x16x16xf32, #tpu.memory_space<vmem>>, vector<1x1x16x16xf32>
    %317 = vector.shape_cast %316 : vector<1x1x16x16xf32> to vector<16x16xf32>
    %cst_35 = arith.constant 0.000000e+00 : f32
    %318 = vector.broadcast %cst_35 : f32 to vector<16x1xf32>
    %319 = vector.extract_strided_slice %317 {offsets = [0, 0], sizes = [16, 15], strides = [1, 1]} : vector<16x16xf32> to vector<16x15xf32>
    %320 = tpu.concatenate %318, %319 in 1 : vector<16x1xf32>, vector<16x15xf32> -> vector<16x16xf32>
    %cst_36 = arith.constant 0.000000e+00 : f32
    %321 = vector.broadcast %cst_36 : f32 to vector<1x16xf32>
    %322 = vector.extract_strided_slice %320 {offsets = [0, 0], sizes = [15, 16], strides = [1, 1]} : vector<16x16xf32> to vector<15x16xf32>
    %323 = tpu.concatenate %321, %322 in 0 : vector<1x16xf32>, vector<15x16xf32> -> vector<16x16xf32>
    %c8 = arith.constant 8 : index
    %324 = memref.load %arg2[%c8] : memref<128xf32, #tpu.memory_space<smem>>
    %325 = vector.broadcast %324 : f32 to vector<16x16xf32>
    %326 = arith.mulf %325, %323 : vector<16x16xf32>
    %327 = arith.addf %227, %326 : vector<16x16xf32>
    %c24 = arith.constant 24 : index
    %328 = memref.load %arg2[%c24] : memref<128xf32, #tpu.memory_space<smem>>
    %329 = vector.broadcast %328 : f32 to vector<16x16xf32>
    %330 = arith.mulf %329, %323 : vector<16x16xf32>
    %331 = arith.addf %231, %330 : vector<16x16xf32>
    %c10 = arith.constant 10 : index
    %332 = memref.load %arg2[%c10] : memref<128xf32, #tpu.memory_space<smem>>
    %333 = vector.broadcast %332 : f32 to vector<16x16xf32>
    %334 = arith.mulf %333, %320 : vector<16x16xf32>
    %335 = arith.addf %327, %334 : vector<16x16xf32>
    %c26 = arith.constant 26 : index
    %336 = memref.load %arg2[%c26] : memref<128xf32, #tpu.memory_space<smem>>
    %337 = vector.broadcast %336 : f32 to vector<16x16xf32>
    %338 = arith.mulf %337, %320 : vector<16x16xf32>
    %339 = arith.addf %331, %338 : vector<16x16xf32>
    %c72 = arith.constant 72 : index
    %340 = memref.load %arg2[%c72] : memref<128xf32, #tpu.memory_space<smem>>
    %341 = vector.broadcast %340 : f32 to vector<16x16xf32>
    %342 = arith.mulf %341, %320 : vector<16x16xf32>
    %343 = arith.addf %262, %342 : vector<16x16xf32>
    %c88 = arith.constant 88 : index
    %344 = memref.load %arg2[%c88] : memref<128xf32, #tpu.memory_space<smem>>
    %345 = vector.broadcast %344 : f32 to vector<16x16xf32>
    %346 = arith.mulf %345, %320 : vector<16x16xf32>
    %347 = arith.addf %266, %346 : vector<16x16xf32>
    %cst_37 = arith.constant 0.000000e+00 : f32
    %348 = vector.broadcast %cst_37 : f32 to vector<1x16xf32>
    %349 = vector.extract_strided_slice %320 {offsets = [1, 0], sizes = [15, 16], strides = [1, 1]} : vector<16x16xf32> to vector<15x16xf32>
    %350 = tpu.concatenate %349, %348 in 0 : vector<15x16xf32>, vector<1x16xf32> -> vector<16x16xf32>
    %c74 = arith.constant 74 : index
    %351 = memref.load %arg2[%c74] : memref<128xf32, #tpu.memory_space<smem>>
    %352 = vector.broadcast %351 : f32 to vector<16x16xf32>
    %353 = arith.mulf %352, %350 : vector<16x16xf32>
    %354 = arith.addf %343, %353 : vector<16x16xf32>
    %c90 = arith.constant 90 : index
    %355 = memref.load %arg2[%c90] : memref<128xf32, #tpu.memory_space<smem>>
    %356 = vector.broadcast %355 : f32 to vector<16x16xf32>
    %357 = arith.mulf %356, %350 : vector<16x16xf32>
    %358 = arith.addf %347, %357 : vector<16x16xf32>
    %cst_38 = arith.constant 0.000000e+00 : f32
    %359 = vector.broadcast %cst_38 : f32 to vector<1x16xf32>
    %360 = vector.extract_strided_slice %317 {offsets = [0, 0], sizes = [15, 16], strides = [1, 1]} : vector<16x16xf32> to vector<15x16xf32>
    %361 = tpu.concatenate %359, %360 in 0 : vector<1x16xf32>, vector<15x16xf32> -> vector<16x16xf32>
    %c9 = arith.constant 9 : index
    %362 = memref.load %arg2[%c9] : memref<128xf32, #tpu.memory_space<smem>>
    %363 = vector.broadcast %362 : f32 to vector<16x16xf32>
    %364 = arith.mulf %363, %361 : vector<16x16xf32>
    %365 = arith.addf %335, %364 : vector<16x16xf32>
    %c25 = arith.constant 25 : index
    %366 = memref.load %arg2[%c25] : memref<128xf32, #tpu.memory_space<smem>>
    %367 = vector.broadcast %366 : f32 to vector<16x16xf32>
    %368 = arith.mulf %367, %361 : vector<16x16xf32>
    %369 = arith.addf %339, %368 : vector<16x16xf32>
    %c40 = arith.constant 40 : index
    %370 = memref.load %arg2[%c40] : memref<128xf32, #tpu.memory_space<smem>>
    %371 = vector.broadcast %370 : f32 to vector<16x16xf32>
    %372 = arith.mulf %371, %361 : vector<16x16xf32>
    %373 = arith.addf %292, %372 : vector<16x16xf32>
    %c56 = arith.constant 56 : index
    %374 = memref.load %arg2[%c56] : memref<128xf32, #tpu.memory_space<smem>>
    %375 = vector.broadcast %374 : f32 to vector<16x16xf32>
    %376 = arith.mulf %375, %361 : vector<16x16xf32>
    %377 = arith.addf %296, %376 : vector<16x16xf32>
    %c11 = arith.constant 11 : index
    %378 = memref.load %arg2[%c11] : memref<128xf32, #tpu.memory_space<smem>>
    %379 = vector.broadcast %378 : f32 to vector<16x16xf32>
    %380 = arith.mulf %379, %317 : vector<16x16xf32>
    %381 = arith.addf %365, %380 : vector<16x16xf32>
    %c27 = arith.constant 27 : index
    %382 = memref.load %arg2[%c27] : memref<128xf32, #tpu.memory_space<smem>>
    %383 = vector.broadcast %382 : f32 to vector<16x16xf32>
    %384 = arith.mulf %383, %317 : vector<16x16xf32>
    %385 = arith.addf %369, %384 : vector<16x16xf32>
    %c42 = arith.constant 42 : index
    %386 = memref.load %arg2[%c42] : memref<128xf32, #tpu.memory_space<smem>>
    %387 = vector.broadcast %386 : f32 to vector<16x16xf32>
    %388 = arith.mulf %387, %317 : vector<16x16xf32>
    %389 = arith.addf %373, %388 : vector<16x16xf32>
    %c58 = arith.constant 58 : index
    %390 = memref.load %arg2[%c58] : memref<128xf32, #tpu.memory_space<smem>>
    %391 = vector.broadcast %390 : f32 to vector<16x16xf32>
    %392 = arith.mulf %391, %317 : vector<16x16xf32>
    %393 = arith.addf %377, %392 : vector<16x16xf32>
    %c73 = arith.constant 73 : index
    %394 = memref.load %arg2[%c73] : memref<128xf32, #tpu.memory_space<smem>>
    %395 = vector.broadcast %394 : f32 to vector<16x16xf32>
    %396 = arith.mulf %395, %317 : vector<16x16xf32>
    %397 = arith.addf %354, %396 : vector<16x16xf32>
    %c89 = arith.constant 89 : index
    %398 = memref.load %arg2[%c89] : memref<128xf32, #tpu.memory_space<smem>>
    %399 = vector.broadcast %398 : f32 to vector<16x16xf32>
    %400 = arith.mulf %399, %317 : vector<16x16xf32>
    %401 = arith.addf %358, %400 : vector<16x16xf32>
    %c104 = arith.constant 104 : index
    %402 = memref.load %arg2[%c104] : memref<128xf32, #tpu.memory_space<smem>>
    %403 = vector.broadcast %402 : f32 to vector<16x16xf32>
    %404 = arith.mulf %403, %317 : vector<16x16xf32>
    %405 = arith.addf %311, %404 : vector<16x16xf32>
    %c120 = arith.constant 120 : index
    %406 = memref.load %arg2[%c120] : memref<128xf32, #tpu.memory_space<smem>>
    %407 = vector.broadcast %406 : f32 to vector<16x16xf32>
    %408 = arith.mulf %407, %317 : vector<16x16xf32>
    %409 = arith.addf %315, %408 : vector<16x16xf32>
    %cst_39 = arith.constant 0.000000e+00 : f32
    %410 = vector.broadcast %cst_39 : f32 to vector<1x16xf32>
    %411 = vector.extract_strided_slice %317 {offsets = [1, 0], sizes = [15, 16], strides = [1, 1]} : vector<16x16xf32> to vector<15x16xf32>
    %412 = tpu.concatenate %411, %410 in 0 : vector<15x16xf32>, vector<1x16xf32> -> vector<16x16xf32>
    %c75 = arith.constant 75 : index
    %413 = memref.load %arg2[%c75] : memref<128xf32, #tpu.memory_space<smem>>
    %414 = vector.broadcast %413 : f32 to vector<16x16xf32>
    %415 = arith.mulf %414, %412 : vector<16x16xf32>
    %416 = arith.addf %397, %415 : vector<16x16xf32>
    %c91 = arith.constant 91 : index
    %417 = memref.load %arg2[%c91] : memref<128xf32, #tpu.memory_space<smem>>
    %418 = vector.broadcast %417 : f32 to vector<16x16xf32>
    %419 = arith.mulf %418, %412 : vector<16x16xf32>
    %420 = arith.addf %401, %419 : vector<16x16xf32>
    %c106 = arith.constant 106 : index
    %421 = memref.load %arg2[%c106] : memref<128xf32, #tpu.memory_space<smem>>
    %422 = vector.broadcast %421 : f32 to vector<16x16xf32>
    %423 = arith.mulf %422, %412 : vector<16x16xf32>
    %424 = arith.addf %405, %423 : vector<16x16xf32>
    %c122 = arith.constant 122 : index
    %425 = memref.load %arg2[%c122] : memref<128xf32, #tpu.memory_space<smem>>
    %426 = vector.broadcast %425 : f32 to vector<16x16xf32>
    %427 = arith.mulf %426, %412 : vector<16x16xf32>
    %428 = arith.addf %409, %427 : vector<16x16xf32>
    %cst_40 = arith.constant 0.000000e+00 : f32
    %429 = vector.broadcast %cst_40 : f32 to vector<16x1xf32>
    %430 = vector.extract_strided_slice %317 {offsets = [0, 1], sizes = [16, 15], strides = [1, 1]} : vector<16x16xf32> to vector<16x15xf32>
    %431 = tpu.concatenate %430, %429 in 1 : vector<16x15xf32>, vector<16x1xf32> -> vector<16x16xf32>
    %cst_41 = arith.constant 0.000000e+00 : f32
    %432 = vector.broadcast %cst_41 : f32 to vector<1x16xf32>
    %433 = vector.extract_strided_slice %431 {offsets = [0, 0], sizes = [15, 16], strides = [1, 1]} : vector<16x16xf32> to vector<15x16xf32>
    %434 = tpu.concatenate %432, %433 in 0 : vector<1x16xf32>, vector<15x16xf32> -> vector<16x16xf32>
    %c41 = arith.constant 41 : index
    %435 = memref.load %arg2[%c41] : memref<128xf32, #tpu.memory_space<smem>>
    %436 = vector.broadcast %435 : f32 to vector<16x16xf32>
    %437 = arith.mulf %436, %434 : vector<16x16xf32>
    %438 = arith.addf %389, %437 : vector<16x16xf32>
    %c57 = arith.constant 57 : index
    %439 = memref.load %arg2[%c57] : memref<128xf32, #tpu.memory_space<smem>>
    %440 = vector.broadcast %439 : f32 to vector<16x16xf32>
    %441 = arith.mulf %440, %434 : vector<16x16xf32>
    %442 = arith.addf %393, %441 : vector<16x16xf32>
    %c43 = arith.constant 43 : index
    %443 = memref.load %arg2[%c43] : memref<128xf32, #tpu.memory_space<smem>>
    %444 = vector.broadcast %443 : f32 to vector<16x16xf32>
    %445 = arith.mulf %444, %431 : vector<16x16xf32>
    %446 = arith.addf %438, %445 : vector<16x16xf32>
    %c59 = arith.constant 59 : index
    %447 = memref.load %arg2[%c59] : memref<128xf32, #tpu.memory_space<smem>>
    %448 = vector.broadcast %447 : f32 to vector<16x16xf32>
    %449 = arith.mulf %448, %431 : vector<16x16xf32>
    %450 = arith.addf %442, %449 : vector<16x16xf32>
    %c105 = arith.constant 105 : index
    %451 = memref.load %arg2[%c105] : memref<128xf32, #tpu.memory_space<smem>>
    %452 = vector.broadcast %451 : f32 to vector<16x16xf32>
    %453 = arith.mulf %452, %431 : vector<16x16xf32>
    %454 = arith.addf %424, %453 : vector<16x16xf32>
    %c121 = arith.constant 121 : index
    %455 = memref.load %arg2[%c121] : memref<128xf32, #tpu.memory_space<smem>>
    %456 = vector.broadcast %455 : f32 to vector<16x16xf32>
    %457 = arith.mulf %456, %431 : vector<16x16xf32>
    %458 = arith.addf %428, %457 : vector<16x16xf32>
    %cst_42 = arith.constant 0.000000e+00 : f32
    %459 = vector.broadcast %cst_42 : f32 to vector<1x16xf32>
    %460 = vector.extract_strided_slice %431 {offsets = [1, 0], sizes = [15, 16], strides = [1, 1]} : vector<16x16xf32> to vector<15x16xf32>
    %461 = tpu.concatenate %460, %459 in 0 : vector<15x16xf32>, vector<1x16xf32> -> vector<16x16xf32>
    %c107 = arith.constant 107 : index
    %462 = memref.load %arg2[%c107] : memref<128xf32, #tpu.memory_space<smem>>
    %463 = vector.broadcast %462 : f32 to vector<16x16xf32>
    %464 = arith.mulf %463, %461 : vector<16x16xf32>
    %465 = arith.addf %454, %464 : vector<16x16xf32>
    %c123 = arith.constant 123 : index
    %466 = memref.load %arg2[%c123] : memref<128xf32, #tpu.memory_space<smem>>
    %467 = vector.broadcast %466 : f32 to vector<16x16xf32>
    %468 = arith.mulf %467, %461 : vector<16x16xf32>
    %469 = arith.addf %458, %468 : vector<16x16xf32>
    %c0_43 = arith.constant 0 : index
    %c3_44 = arith.constant 3 : index
    %c0_45 = arith.constant 0 : index
    %c0_46 = arith.constant 0 : index
    %470 = vector.load %arg1[%c0_43, %c3_44, %c0_45, %c0_46] : memref<1x4x16x16xf32, #tpu.memory_space<vmem>>, vector<1x1x16x16xf32>
    %471 = vector.shape_cast %470 : vector<1x1x16x16xf32> to vector<16x16xf32>
    %cst_47 = arith.constant 0.000000e+00 : f32
    %472 = vector.broadcast %cst_47 : f32 to vector<16x1xf32>
    %473 = vector.extract_strided_slice %471 {offsets = [0, 0], sizes = [16, 15], strides = [1, 1]} : vector<16x16xf32> to vector<16x15xf32>
    %474 = tpu.concatenate %472, %473 in 1 : vector<16x1xf32>, vector<16x15xf32> -> vector<16x16xf32>
    %cst_48 = arith.constant 0.000000e+00 : f32
    %475 = vector.broadcast %cst_48 : f32 to vector<1x16xf32>
    %476 = vector.extract_strided_slice %474 {offsets = [0, 0], sizes = [15, 16], strides = [1, 1]} : vector<16x16xf32> to vector<15x16xf32>
    %477 = tpu.concatenate %475, %476 in 0 : vector<1x16xf32>, vector<15x16xf32> -> vector<16x16xf32>
    %c12 = arith.constant 12 : index
    %478 = memref.load %arg2[%c12] : memref<128xf32, #tpu.memory_space<smem>>
    %479 = vector.broadcast %478 : f32 to vector<16x16xf32>
    %480 = arith.mulf %479, %477 : vector<16x16xf32>
    %481 = arith.addf %381, %480 : vector<16x16xf32>
    %c28 = arith.constant 28 : index
    %482 = memref.load %arg2[%c28] : memref<128xf32, #tpu.memory_space<smem>>
    %483 = vector.broadcast %482 : f32 to vector<16x16xf32>
    %484 = arith.mulf %483, %477 : vector<16x16xf32>
    %485 = arith.addf %385, %484 : vector<16x16xf32>
    %c14 = arith.constant 14 : index
    %486 = memref.load %arg2[%c14] : memref<128xf32, #tpu.memory_space<smem>>
    %487 = vector.broadcast %486 : f32 to vector<16x16xf32>
    %488 = arith.mulf %487, %474 : vector<16x16xf32>
    %489 = arith.addf %481, %488 : vector<16x16xf32>
    %c30 = arith.constant 30 : index
    %490 = memref.load %arg2[%c30] : memref<128xf32, #tpu.memory_space<smem>>
    %491 = vector.broadcast %490 : f32 to vector<16x16xf32>
    %492 = arith.mulf %491, %474 : vector<16x16xf32>
    %493 = arith.addf %485, %492 : vector<16x16xf32>
    %c76 = arith.constant 76 : index
    %494 = memref.load %arg2[%c76] : memref<128xf32, #tpu.memory_space<smem>>
    %495 = vector.broadcast %494 : f32 to vector<16x16xf32>
    %496 = arith.mulf %495, %474 : vector<16x16xf32>
    %497 = arith.addf %416, %496 : vector<16x16xf32>
    %c92 = arith.constant 92 : index
    %498 = memref.load %arg2[%c92] : memref<128xf32, #tpu.memory_space<smem>>
    %499 = vector.broadcast %498 : f32 to vector<16x16xf32>
    %500 = arith.mulf %499, %474 : vector<16x16xf32>
    %501 = arith.addf %420, %500 : vector<16x16xf32>
    %cst_49 = arith.constant 0.000000e+00 : f32
    %502 = vector.broadcast %cst_49 : f32 to vector<1x16xf32>
    %503 = vector.extract_strided_slice %474 {offsets = [1, 0], sizes = [15, 16], strides = [1, 1]} : vector<16x16xf32> to vector<15x16xf32>
    %504 = tpu.concatenate %503, %502 in 0 : vector<15x16xf32>, vector<1x16xf32> -> vector<16x16xf32>
    %c78 = arith.constant 78 : index
    %505 = memref.load %arg2[%c78] : memref<128xf32, #tpu.memory_space<smem>>
    %506 = vector.broadcast %505 : f32 to vector<16x16xf32>
    %507 = arith.mulf %506, %504 : vector<16x16xf32>
    %508 = arith.addf %497, %507 : vector<16x16xf32>
    %c94 = arith.constant 94 : index
    %509 = memref.load %arg2[%c94] : memref<128xf32, #tpu.memory_space<smem>>
    %510 = vector.broadcast %509 : f32 to vector<16x16xf32>
    %511 = arith.mulf %510, %504 : vector<16x16xf32>
    %512 = arith.addf %501, %511 : vector<16x16xf32>
    %cst_50 = arith.constant 0.000000e+00 : f32
    %513 = vector.broadcast %cst_50 : f32 to vector<1x16xf32>
    %514 = vector.extract_strided_slice %471 {offsets = [0, 0], sizes = [15, 16], strides = [1, 1]} : vector<16x16xf32> to vector<15x16xf32>
    %515 = tpu.concatenate %513, %514 in 0 : vector<1x16xf32>, vector<15x16xf32> -> vector<16x16xf32>
    %c13 = arith.constant 13 : index
    %516 = memref.load %arg2[%c13] : memref<128xf32, #tpu.memory_space<smem>>
    %517 = vector.broadcast %516 : f32 to vector<16x16xf32>
    %518 = arith.mulf %517, %515 : vector<16x16xf32>
    %519 = arith.addf %489, %518 : vector<16x16xf32>
    %c29 = arith.constant 29 : index
    %520 = memref.load %arg2[%c29] : memref<128xf32, #tpu.memory_space<smem>>
    %521 = vector.broadcast %520 : f32 to vector<16x16xf32>
    %522 = arith.mulf %521, %515 : vector<16x16xf32>
    %523 = arith.addf %493, %522 : vector<16x16xf32>
    %c44 = arith.constant 44 : index
    %524 = memref.load %arg2[%c44] : memref<128xf32, #tpu.memory_space<smem>>
    %525 = vector.broadcast %524 : f32 to vector<16x16xf32>
    %526 = arith.mulf %525, %515 : vector<16x16xf32>
    %527 = arith.addf %446, %526 : vector<16x16xf32>
    %c60 = arith.constant 60 : index
    %528 = memref.load %arg2[%c60] : memref<128xf32, #tpu.memory_space<smem>>
    %529 = vector.broadcast %528 : f32 to vector<16x16xf32>
    %530 = arith.mulf %529, %515 : vector<16x16xf32>
    %531 = arith.addf %450, %530 : vector<16x16xf32>
    %c15 = arith.constant 15 : index
    %532 = memref.load %arg2[%c15] : memref<128xf32, #tpu.memory_space<smem>>
    %533 = vector.broadcast %532 : f32 to vector<16x16xf32>
    %534 = arith.mulf %533, %471 : vector<16x16xf32>
    %535 = arith.addf %519, %534 : vector<16x16xf32>
    %c31 = arith.constant 31 : index
    %536 = memref.load %arg2[%c31] : memref<128xf32, #tpu.memory_space<smem>>
    %537 = vector.broadcast %536 : f32 to vector<16x16xf32>
    %538 = arith.mulf %537, %471 : vector<16x16xf32>
    %539 = arith.addf %523, %538 : vector<16x16xf32>
    %c46 = arith.constant 46 : index
    %540 = memref.load %arg2[%c46] : memref<128xf32, #tpu.memory_space<smem>>
    %541 = vector.broadcast %540 : f32 to vector<16x16xf32>
    %542 = arith.mulf %541, %471 : vector<16x16xf32>
    %543 = arith.addf %527, %542 : vector<16x16xf32>
    %c62 = arith.constant 62 : index
    %544 = memref.load %arg2[%c62] : memref<128xf32, #tpu.memory_space<smem>>
    %545 = vector.broadcast %544 : f32 to vector<16x16xf32>
    %546 = arith.mulf %545, %471 : vector<16x16xf32>
    %547 = arith.addf %531, %546 : vector<16x16xf32>
    %c77 = arith.constant 77 : index
    %548 = memref.load %arg2[%c77] : memref<128xf32, #tpu.memory_space<smem>>
    %549 = vector.broadcast %548 : f32 to vector<16x16xf32>
    %550 = arith.mulf %549, %471 : vector<16x16xf32>
    %551 = arith.addf %508, %550 : vector<16x16xf32>
    %c93 = arith.constant 93 : index
    %552 = memref.load %arg2[%c93] : memref<128xf32, #tpu.memory_space<smem>>
    %553 = vector.broadcast %552 : f32 to vector<16x16xf32>
    %554 = arith.mulf %553, %471 : vector<16x16xf32>
    %555 = arith.addf %512, %554 : vector<16x16xf32>
    %c108 = arith.constant 108 : index
    %556 = memref.load %arg2[%c108] : memref<128xf32, #tpu.memory_space<smem>>
    %557 = vector.broadcast %556 : f32 to vector<16x16xf32>
    %558 = arith.mulf %557, %471 : vector<16x16xf32>
    %559 = arith.addf %465, %558 : vector<16x16xf32>
    %c124 = arith.constant 124 : index
    %560 = memref.load %arg2[%c124] : memref<128xf32, #tpu.memory_space<smem>>
    %561 = vector.broadcast %560 : f32 to vector<16x16xf32>
    %562 = arith.mulf %561, %471 : vector<16x16xf32>
    %563 = arith.addf %469, %562 : vector<16x16xf32>
    %cst_51 = arith.constant 0.000000e+00 : f32
    %564 = vector.broadcast %cst_51 : f32 to vector<1x16xf32>
    %565 = vector.extract_strided_slice %471 {offsets = [1, 0], sizes = [15, 16], strides = [1, 1]} : vector<16x16xf32> to vector<15x16xf32>
    %566 = tpu.concatenate %565, %564 in 0 : vector<15x16xf32>, vector<1x16xf32> -> vector<16x16xf32>
    %c79 = arith.constant 79 : index
    %567 = memref.load %arg2[%c79] : memref<128xf32, #tpu.memory_space<smem>>
    %568 = vector.broadcast %567 : f32 to vector<16x16xf32>
    %569 = arith.mulf %568, %566 : vector<16x16xf32>
    %570 = arith.addf %551, %569 : vector<16x16xf32>
    %c95 = arith.constant 95 : index
    %571 = memref.load %arg2[%c95] : memref<128xf32, #tpu.memory_space<smem>>
    %572 = vector.broadcast %571 : f32 to vector<16x16xf32>
    %573 = arith.mulf %572, %566 : vector<16x16xf32>
    %574 = arith.addf %555, %573 : vector<16x16xf32>
    %c110 = arith.constant 110 : index
    %575 = memref.load %arg2[%c110] : memref<128xf32, #tpu.memory_space<smem>>
    %576 = vector.broadcast %575 : f32 to vector<16x16xf32>
    %577 = arith.mulf %576, %566 : vector<16x16xf32>
    %578 = arith.addf %559, %577 : vector<16x16xf32>
    %c126 = arith.constant 126 : index
    %579 = memref.load %arg2[%c126] : memref<128xf32, #tpu.memory_space<smem>>
    %580 = vector.broadcast %579 : f32 to vector<16x16xf32>
    %581 = arith.mulf %580, %566 : vector<16x16xf32>
    %582 = arith.addf %563, %581 : vector<16x16xf32>
    %cst_52 = arith.constant 0.000000e+00 : f32
    %583 = vector.broadcast %cst_52 : f32 to vector<16x1xf32>
    %584 = vector.extract_strided_slice %471 {offsets = [0, 1], sizes = [16, 15], strides = [1, 1]} : vector<16x16xf32> to vector<16x15xf32>
    %585 = tpu.concatenate %584, %583 in 1 : vector<16x15xf32>, vector<16x1xf32> -> vector<16x16xf32>
    %cst_53 = arith.constant 0.000000e+00 : f32
    %586 = vector.broadcast %cst_53 : f32 to vector<1x16xf32>
    %587 = vector.extract_strided_slice %585 {offsets = [0, 0], sizes = [15, 16], strides = [1, 1]} : vector<16x16xf32> to vector<15x16xf32>
    %588 = tpu.concatenate %586, %587 in 0 : vector<1x16xf32>, vector<15x16xf32> -> vector<16x16xf32>
    %c45 = arith.constant 45 : index
    %589 = memref.load %arg2[%c45] : memref<128xf32, #tpu.memory_space<smem>>
    %590 = vector.broadcast %589 : f32 to vector<16x16xf32>
    %591 = arith.mulf %590, %588 : vector<16x16xf32>
    %592 = arith.addf %543, %591 : vector<16x16xf32>
    %c61 = arith.constant 61 : index
    %593 = memref.load %arg2[%c61] : memref<128xf32, #tpu.memory_space<smem>>
    %594 = vector.broadcast %593 : f32 to vector<16x16xf32>
    %595 = arith.mulf %594, %588 : vector<16x16xf32>
    %596 = arith.addf %547, %595 : vector<16x16xf32>
    %c47 = arith.constant 47 : index
    %597 = memref.load %arg2[%c47] : memref<128xf32, #tpu.memory_space<smem>>
    %598 = vector.broadcast %597 : f32 to vector<16x16xf32>
    %599 = arith.mulf %598, %585 : vector<16x16xf32>
    %600 = arith.addf %592, %599 : vector<16x16xf32>
    %c63 = arith.constant 63 : index
    %601 = memref.load %arg2[%c63] : memref<128xf32, #tpu.memory_space<smem>>
    %602 = vector.broadcast %601 : f32 to vector<16x16xf32>
    %603 = arith.mulf %602, %585 : vector<16x16xf32>
    %604 = arith.addf %596, %603 : vector<16x16xf32>
    %c109 = arith.constant 109 : index
    %605 = memref.load %arg2[%c109] : memref<128xf32, #tpu.memory_space<smem>>
    %606 = vector.broadcast %605 : f32 to vector<16x16xf32>
    %607 = arith.mulf %606, %585 : vector<16x16xf32>
    %608 = arith.addf %578, %607 : vector<16x16xf32>
    %c125 = arith.constant 125 : index
    %609 = memref.load %arg2[%c125] : memref<128xf32, #tpu.memory_space<smem>>
    %610 = vector.broadcast %609 : f32 to vector<16x16xf32>
    %611 = arith.mulf %610, %585 : vector<16x16xf32>
    %612 = arith.addf %582, %611 : vector<16x16xf32>
    %cst_54 = arith.constant 0.000000e+00 : f32
    %613 = vector.broadcast %cst_54 : f32 to vector<1x16xf32>
    %614 = vector.extract_strided_slice %585 {offsets = [1, 0], sizes = [15, 16], strides = [1, 1]} : vector<16x16xf32> to vector<15x16xf32>
    %615 = tpu.concatenate %614, %613 in 0 : vector<15x16xf32>, vector<1x16xf32> -> vector<16x16xf32>
    %c111 = arith.constant 111 : index
    %616 = memref.load %arg2[%c111] : memref<128xf32, #tpu.memory_space<smem>>
    %617 = vector.broadcast %616 : f32 to vector<16x16xf32>
    %618 = arith.mulf %617, %615 : vector<16x16xf32>
    %619 = arith.addf %608, %618 : vector<16x16xf32>
    %c127 = arith.constant 127 : index
    %620 = memref.load %arg2[%c127] : memref<128xf32, #tpu.memory_space<smem>>
    %621 = vector.broadcast %620 : f32 to vector<16x16xf32>
    %622 = arith.mulf %621, %615 : vector<16x16xf32>
    %623 = arith.addf %612, %622 : vector<16x16xf32>
    %624 = tpu.iota {dimensions = array<i32: 0>} : vector<32x16xi32>
    %625 = tpu.iota {dimensions = array<i32: 1>} : vector<32x16xi32>
    %626 = tpu.iota {dimensions = array<i32: 0>} : vector<16x32xi32>
    %627 = tpu.iota {dimensions = array<i32: 1>} : vector<16x32xi32>
    %c2_i32 = arith.constant 2 : i32
    %628 = vector.broadcast %c2_i32 : i32 to vector<32x16xi32>
    %629 = arith.muli %628, %625 : vector<32x16xi32>
    %c0_i32 = arith.constant 0 : i32
    %630 = vector.broadcast %c0_i32 : i32 to vector<32x16xi32>
    %631 = arith.addi %629, %630 : vector<32x16xi32>
    %632 = arith.cmpi eq, %624, %631 : vector<32x16xi32>
    %cst_55 = arith.constant 1.000000e+00 : f32
    %cst_56 = arith.constant 0.000000e+00 : f32
    %633 = vector.broadcast %cst_55 : f32 to vector<32x16xf32>
    %634 = vector.broadcast %cst_56 : f32 to vector<32x16xf32>
    %635 = arith.select %632, %633, %634 : vector<32x16xi1>, vector<32x16xf32>
    %c2_i32_57 = arith.constant 2 : i32
    %636 = vector.broadcast %c2_i32_57 : i32 to vector<32x16xi32>
    %637 = arith.muli %636, %625 : vector<32x16xi32>
    %c1_i32 = arith.constant 1 : i32
    %638 = vector.broadcast %c1_i32 : i32 to vector<32x16xi32>
    %639 = arith.addi %637, %638 : vector<32x16xi32>
    %640 = arith.cmpi eq, %624, %639 : vector<32x16xi32>
    %cst_58 = arith.constant 1.000000e+00 : f32
    %cst_59 = arith.constant 0.000000e+00 : f32
    %641 = vector.broadcast %cst_58 : f32 to vector<32x16xf32>
    %642 = vector.broadcast %cst_59 : f32 to vector<32x16xf32>
    %643 = arith.select %640, %641, %642 : vector<32x16xi1>, vector<32x16xf32>
    %c2_i32_60 = arith.constant 2 : i32
    %644 = vector.broadcast %c2_i32_60 : i32 to vector<16x32xi32>
    %645 = arith.muli %644, %626 : vector<16x32xi32>
    %c0_i32_61 = arith.constant 0 : i32
    %646 = vector.broadcast %c0_i32_61 : i32 to vector<16x32xi32>
    %647 = arith.addi %645, %646 : vector<16x32xi32>
    %648 = arith.cmpi eq, %627, %647 : vector<16x32xi32>
    %cst_62 = arith.constant 1.000000e+00 : f32
    %cst_63 = arith.constant 0.000000e+00 : f32
    %649 = vector.broadcast %cst_62 : f32 to vector<16x32xf32>
    %650 = vector.broadcast %cst_63 : f32 to vector<16x32xf32>
    %651 = arith.select %648, %649, %650 : vector<16x32xi1>, vector<16x32xf32>
    %c2_i32_64 = arith.constant 2 : i32
    %652 = vector.broadcast %c2_i32_64 : i32 to vector<16x32xi32>
    %653 = arith.muli %652, %626 : vector<16x32xi32>
    %c1_i32_65 = arith.constant 1 : i32
    %654 = vector.broadcast %c1_i32_65 : i32 to vector<16x32xi32>
    %655 = arith.addi %653, %654 : vector<16x32xi32>
    %656 = arith.cmpi eq, %627, %655 : vector<16x32xi32>
    %cst_66 = arith.constant 1.000000e+00 : f32
    %cst_67 = arith.constant 0.000000e+00 : f32
    %657 = vector.broadcast %cst_66 : f32 to vector<16x32xf32>
    %658 = vector.broadcast %cst_67 : f32 to vector<16x32xf32>
    %659 = arith.select %656, %657, %658 : vector<16x32xi1>, vector<16x32xf32>
    %c0_68 = arith.constant 0 : index
    %660 = memref.load %arg3[%c0_68] : memref<2xf32, #tpu.memory_space<smem>>
    %661 = vector.broadcast %660 : f32 to vector<32x32xf32>
    %cst_69 = arith.constant dense<0.000000e+00> : vector<16x32xf32>
    %662 = tpu.matmul %535, %651, %cst_69 {dimension_numbers = #tpu.dot_dimension_numbers<[1], [0], [0], [1], [0, 0, 1, 1], [], []>} : vector<16x16xf32>, vector<16x32xf32>, vector<16x32xf32> -> vector<16x32xf32>
    %cst_70 = arith.constant dense<0.000000e+00> : vector<16x32xf32>
    %663 = tpu.matmul %600, %659, %cst_70 {dimension_numbers = #tpu.dot_dimension_numbers<[1], [0], [0], [1], [0, 0, 1, 1], [], []>} : vector<16x16xf32>, vector<16x32xf32>, vector<16x32xf32> -> vector<16x32xf32>
    %664 = arith.addf %662, %663 : vector<16x32xf32>
    %cst_71 = arith.constant dense<0.000000e+00> : vector<32x32xf32>
    %665 = tpu.matmul %635, %664, %cst_71 {dimension_numbers = #tpu.dot_dimension_numbers<[1], [0], [0], [1], [0, 0, 1, 1], [], []>} : vector<32x16xf32>, vector<16x32xf32>, vector<32x32xf32> -> vector<32x32xf32>
    %666 = arith.addf %661, %665 : vector<32x32xf32>
    %cst_72 = arith.constant dense<0.000000e+00> : vector<16x32xf32>
    %667 = tpu.matmul %570, %651, %cst_72 {dimension_numbers = #tpu.dot_dimension_numbers<[1], [0], [0], [1], [0, 0, 1, 1], [], []>} : vector<16x16xf32>, vector<16x32xf32>, vector<16x32xf32> -> vector<16x32xf32>
    %cst_73 = arith.constant dense<0.000000e+00> : vector<16x32xf32>
    %668 = tpu.matmul %619, %659, %cst_73 {dimension_numbers = #tpu.dot_dimension_numbers<[1], [0], [0], [1], [0, 0, 1, 1], [], []>} : vector<16x16xf32>, vector<16x32xf32>, vector<16x32xf32> -> vector<16x32xf32>
    %669 = arith.addf %667, %668 : vector<16x32xf32>
    %cst_74 = arith.constant dense<0.000000e+00> : vector<32x32xf32>
    %670 = tpu.matmul %643, %669, %cst_74 {dimension_numbers = #tpu.dot_dimension_numbers<[1], [0], [0], [1], [0, 0, 1, 1], [], []>} : vector<32x16xf32>, vector<16x32xf32>, vector<32x32xf32> -> vector<32x32xf32>
    %671 = arith.addf %666, %670 : vector<32x32xf32>
    %c0_75 = arith.constant 0 : index
    %c0_76 = arith.constant 0 : index
    %c0_77 = arith.constant 0 : index
    %c0_78 = arith.constant 0 : index
    %672 = vector.load %arg4[%c0_75, %c0_76, %c0_77, %c0_78] : memref<1x2x32x32xf32, #tpu.memory_space<vmem>>, vector<1x1x32x32xf32>
    %673 = vector.shape_cast %672 : vector<1x1x32x32xf32> to vector<32x32xf32>
    %674 = vector.shape_cast %671 : vector<32x32xf32> to vector<1x1x32x32xf32>
    tpu.vector_store %arg4[%c0_75, %c0_76, %c0_77, %c0_78], %674 {strides = array<i32>} : memref<1x2x32x32xf32, #tpu.memory_space<vmem>>, vector<1x1x32x32xf32>,
    %c1_79 = arith.constant 1 : index
    %675 = memref.load %arg3[%c1_79] : memref<2xf32, #tpu.memory_space<smem>>
    %676 = vector.broadcast %675 : f32 to vector<32x32xf32>
    %cst_80 = arith.constant dense<0.000000e+00> : vector<16x32xf32>
    %677 = tpu.matmul %539, %651, %cst_80 {dimension_numbers = #tpu.dot_dimension_numbers<[1], [0], [0], [1], [0, 0, 1, 1], [], []>} : vector<16x16xf32>, vector<16x32xf32>, vector<16x32xf32> -> vector<16x32xf32>
    %cst_81 = arith.constant dense<0.000000e+00> : vector<16x32xf32>
    %678 = tpu.matmul %604, %659, %cst_81 {dimension_numbers = #tpu.dot_dimension_numbers<[1], [0], [0], [1], [0, 0, 1, 1], [], []>} : vector<16x16xf32>, vector<16x32xf32>, vector<16x32xf32> -> vector<16x32xf32>
    %679 = arith.addf %677, %678 : vector<16x32xf32>
    %cst_82 = arith.constant dense<0.000000e+00> : vector<32x32xf32>
    %680 = tpu.matmul %635, %679, %cst_82 {dimension_numbers = #tpu.dot_dimension_numbers<[1], [0], [0], [1], [0, 0, 1, 1], [], []>} : vector<32x16xf32>, vector<16x32xf32>, vector<32x32xf32> -> vector<32x32xf32>
    %681 = arith.addf %676, %680 : vector<32x32xf32>
    %cst_83 = arith.constant dense<0.000000e+00> : vector<16x32xf32>
    %682 = tpu.matmul %574, %651, %cst_83 {dimension_numbers = #tpu.dot_dimension_numbers<[1], [0], [0], [1], [0, 0, 1, 1], [], []>} : vector<16x16xf32>, vector<16x32xf32>, vector<16x32xf32> -> vector<16x32xf32>
    %cst_84 = arith.constant dense<0.000000e+00> : vector<16x32xf32>
    %683 = tpu.matmul %623, %659, %cst_84 {dimension_numbers = #tpu.dot_dimension_numbers<[1], [0], [0], [1], [0, 0, 1, 1], [], []>} : vector<16x16xf32>, vector<16x32xf32>, vector<16x32xf32> -> vector<16x32xf32>
    %684 = arith.addf %682, %683 : vector<16x32xf32>
    %cst_85 = arith.constant dense<0.000000e+00> : vector<32x32xf32>
    %685 = tpu.matmul %643, %684, %cst_85 {dimension_numbers = #tpu.dot_dimension_numbers<[1], [0], [0], [1], [0, 0, 1, 1], [], []>} : vector<32x16xf32>, vector<16x32xf32>, vector<32x32xf32> -> vector<32x32xf32>
    %686 = arith.addf %681, %685 : vector<32x32xf32>
    %c0_86 = arith.constant 0 : index
    %c1_87 = arith.constant 1 : index
    %c0_88 = arith.constant 0 : index
    %c0_89 = arith.constant 0 : index
    %687 = vector.load %arg4[%c0_86, %c1_87, %c0_88, %c0_89] : memref<1x2x32x32xf32, #tpu.memory_space<vmem>>, vector<1x1x32x32xf32>
    %688 = vector.shape_cast %687 : vector<1x1x32x32xf32> to vector<32x32xf32>
    %689 = vector.shape_cast %686 : vector<32x32xf32> to vector<1x1x32x32xf32>
    tpu.vector_store %arg4[%c0_86, %c1_87, %c0_88, %c0_89], %689 {strides = array<i32>} : memref<1x2x32x32xf32, #tpu.memory_space<vmem>>, vector<1x1x32x32xf32>,
    return
  }
  func.func @transform_0(%arg0: i32) -> (i32, i32, i32, i32) {
    %c0_i32 = arith.constant 0 : i32
    %c0_i32_0 = arith.constant 0 : i32
    %c0_i32_1 = arith.constant 0 : i32
    %c0_i32_2 = arith.constant 0 : i32
    return %arg0, %c0_i32, %c0_i32_0, %c0_i32_1 : i32, i32, i32, i32
  }
  func.func @transform_1(%arg0: i32) -> i32 {
    %c0_i32 = arith.constant 0 : i32
    %c0_i32_0 = arith.constant 0 : i32
    return %c0_i32 : i32
  }
  func.func @transform_2(%arg0: i32) -> i32 {
    %c0_i32 = arith.constant 0 : i32
    %c0_i32_0 = arith.constant 0 : i32
    return %c0_i32 : i32
  }
  func.func @transform_3(%arg0: i32) -> (i32, i32, i32, i32) {
    %c0_i32 = arith.constant 0 : i32
    %c0_i32_0 = arith.constant 0 : i32
    %c0_i32_1 = arith.constant 0 : i32
    %c0_i32_2 = arith.constant 0 : i32
    return %arg0, %c0_i32, %c0_i32_0, %c0_i32_1 : i32, i32, i32, i32
  }
}

</mosaic_0001>

<llo_original>
// kernel: deconv2d_forward.1
$region0: #{deconv2d_forward.1}
  #allocation0 [shape = 'u32[]', space=smem, size = 0x4, offset = 0x4, fixed_abs, tag = 'smem constant byte address 0x4 - core index']
  #allocation1 [shape = 'u32[144,128]{1,0:T(1,128)}', space=vmem, size = 0x12000, scoped, tag = 'internal scratch']
  %s0 = inlined_call_operand.vmem [shape: f32[2,4,16,16], index: 0, kind: input, shape index: {}]
  %s1 = inlined_call_operand.vmem [shape: f32[128], index: 1, kind: input, shape index: {}]
  %s2 = inlined_call_operand.vmem [shape: f32[2], index: 2, kind: input, shape index: {}]
  %s3 = inlined_call_operand.hbm [shape: f32[2,2,32,32], index: 3, kind: output, shape index: {}]
  %s4 = sld [smem:[#allocation0]]
  $region53: #{deconv2d_forward.1} parent=0
    _
  %s6 = ssub.s32 1, %s4
  %s7 = scalar_select 0, %s6, %s4
  $region1: #{deconv2d_forward.1} parent=0
    #allocation2 [shape = 'u8[512]{0}', space=smem, size = 0x200, scoped, tag = 'input window, operand 1, single buffered']
    #allocation3 [shape = 's32[2]{0}', space=sflag, size = 0x8, scoped, tag = 'scoped memory for deconv2d_forward.1']
    #allocation4 [shape = 's32[2]{0}', space=sflag, size = 0x8, scoped, tag = 'scoped memory for deconv2d_forward.1']
    #allocation5 [shape = 'u8[512]{0}', space=smem, size = 0x200, scoped, tag = 'input window, operand 2, single buffered']
    #allocation6 [shape = 's32[1]{0}', space=sflag, size = 0x4, scoped, tag = 'scoped memory for deconv2d_forward.1']
    #allocation7 [shape = 'u8[65536]{0}', space=vmem, size = 0x10000, scoped, tag = 'output window, operand 0']
    %8 = vsyncpa [#allocation4], 0
    %9 = vsyncpa [#allocation6], 0
    %10 = vsyncpa [#allocation3], 0
    %s11 = scalar_lea.sflag [#allocation3], 1
    %12 = vsyncpa %s11, 0
    loop: start=0, step=1, limit=4
    $region2: #{deconv2d_forward.1} parent=1 // loop_pre_header
      _
    $region3: #{deconv2d_forward.1} parent=1 // loop_header
      %s14 = sphi 0, %s18
      %p15 = scmp.ge.s32.totalorder %s14, 4
      %s24 = sphi 0, %s26
      %s27 = sphi 0, %s24
      %s28 = sphi 0, %s27
      %s44 = sphi 0, %s28
      %s48 = sphi 0, %s48
      %s50 = sphi 0, %s48
      %s51 = sphi 0, %s50
      %s65 = sphi 0, %s51
      %s69 = sphi 0, %s69
      %s71 = sphi 0, %s69
      %s72 = sphi 0, %s71
      %s86 = sphi 0, %s72
      %s92 = sphi 0, %s94
      %s95 = sphi 0, %s92
      %s96 = sphi 0, %s95
      %s112 = sphi 0, %s96
    $region4: #{deconv2d_forward.1} parent=1 // loop_header_branch
      %17 = sbr.rel (%p15) target = $region8
    $region5: #{deconv2d_forward.1} parent=1 // loop_body
      %s19 = ssub.s32 %s14, 1
      %s20 = ssub.s32 %s14, 2
      %s21 = sadd.s32 %s14, 1
      %s22 = ssub.s32 %s14, %s21
      %p23 = scmp.eq.s32.totalorder %s22, 0
      %s25 = sadd.s32 %s24, 1
      %s26 = scalar_select %p23, %s24, %s25
      %p29 = pneg %p23
      %p30 = scmp.eq.s32.totalorder %s14, 1
      %p31 = por %p29, %p30
      %p32 = scmp.ne.s32.totalorder %s24, %s27
      %p33 = scmp.eq.s32.totalorder %s14, 0
      %p34 = por %p32, %p33
      %p35 = scmp.ne.s32.totalorder %s24, %s27
      %p36 = scmp.eq.s32.totalorder %s19, 1
      %p37 = por %p35, %p36
      %p38 = scmp.ne.s32.totalorder %s27, %s28
      %p39 = scmp.eq.s32.totalorder %s19, 0
      %p40 = por %p38, %p39
      %p41 = scmp.ne.s32.totalorder %s27, %s28
      %p42 = scmp.eq.s32.totalorder %s20, 1
      %p43 = por %p41, %p42
      %p45 = scmp.ne.s32.totalorder %s28, %s44
      %p46 = scmp.eq.s32.totalorder %s20, 0
      %p47 = por %p45, %p46
      %s49 = sadd.s32 %s48, 1
      %p52 = scmp.eq.s32.totalorder %s14, 1
      %p53 = scmp.ne.s32.totalorder %s48, %s50
      %p54 = scmp.eq.s32.totalorder %s14, 0
      %p55 = por %p53, %p54
      %p56 = scmp.ne.s32.totalorder %s48, %s50
      %p57 = scmp.eq.s32.totalorder %s19, 1
      %p58 = por %p56, %p57
      %p59 = scmp.ne.s32.totalorder %s50, %s51
      %p60 = scmp.eq.s32.totalorder %s19, 0
      %p61 = por %p59, %p60
      %p62 = scmp.ne.s32.totalorder %s50, %s51
      %p63 = scmp.eq.s32.totalorder %s20, 1
      %p64 = por %p62, %p63
      %p66 = scmp.ne.s32.totalorder %s51, %s65
      %p67 = scmp.eq.s32.totalorder %s20, 0
      %p68 = por %p66, %p67
      %s70 = sadd.s32 %s69, 1
      %p73 = scmp.eq.s32.totalorder %s14, 1
      %p74 = scmp.ne.s32.totalorder %s69, %s71
      %p75 = scmp.eq.s32.totalorder %s14, 0
      %p76 = por %p74, %p75
      %p77 = scmp.ne.s32.totalorder %s69, %s71
      %p78 = scmp.eq.s32.totalorder %s19, 1
      %p79 = por %p77, %p78
      %p80 = scmp.ne.s32.totalorder %s71, %s72
      %p81 = scmp.eq.s32.totalorder %s19, 0
      %p82 = por %p80, %p81
      %p83 = scmp.ne.s32.totalorder %s71, %s72
      %p84 = scmp.eq.s32.totalorder %s20, 1
      %p85 = por %p83, %p84
      %p87 = scmp.ne.s32.totalorder %s72, %s86
      %p88 = scmp.eq.s32.totalorder %s20, 0
      %p89 = por %p87, %p88
      %s90 = ssub.s32 %s14, %s21
      %p91 = scmp.eq.s32.totalorder %s90, 0
      %s93 = sadd.s32 %s92, 1
      %s94 = scalar_select %p91, %s92, %s93
      %p97 = pneg %p91
      %p98 = scmp.eq.s32.totalorder %s14, 1
      %p99 = por %p97, %p98
      %p100 = scmp.ne.s32.totalorder %s92, %s95
      %p101 = scmp.eq.s32.totalorder %s14, 0
      %p102 = por %p100, %p101
      %p103 = scmp.ne.s32.totalorder %s92, %s95
      %p104 = scmp.eq.s32.totalorder %s19, 1
      %p105 = por %p103, %p104
      %p106 = scmp.ne.s32.totalorder %s95, %s96
      %p107 = scmp.eq.s32.totalorder %s19, 0
      %p108 = por %p106, %p107
      %p109 = scmp.ne.s32.totalorder %s95, %s96
      %p110 = scmp.eq.s32.totalorder %s20, 1
      %p111 = por %p109, %p110
      %p113 = scmp.ne.s32.totalorder %s96, %s112
      %p114 = scmp.eq.s32.totalorder %s20, 0
      %p115 = por %p113, %p114
      %p116 = scmp.le.s32.totalorder 1, %s14
      %p117 = scmp.lt.s32.totalorder %s14, 3
      %p118 = pnand %p116, %p117
      %p119 = pneg %p118
      // Predicated region
      $region9: #{deconv2d_forward.1} parent=5 // pred_check
        _
      $region10: #{deconv2d_forward.1} parent=5 // pred_check_branch
        %121 = sbr.rel (%p118) target = $region12
      $region11: #{deconv2d_forward.1} parent=5 // pred_region
        %s122 = ssub.s32 %s14, 1
        // Predicated region
        $region13: #{deconv2d_forward.1} parent=11 // pred_check
          %p123 = pneg %p61
        $region14: #{deconv2d_forward.1} parent=11 // pred_check_branch
          %125 = sbr.rel (%p123) target = $region16
        $region15: #{deconv2d_forward.1} parent=11 // pred_region
          %s127 = ssub.s32 16, 16
          %128 = vsyncadd [#allocation4], %s127
          %s130 = sshll.u32 %s1, 4
          %s131 = int_to_ptr.vmem [resolvable:$true] %s130
          %133 = dma.vmem_to_smem %s131, 16, [#allocation2], [#allocation4]
        $region16: #{deconv2d_forward.1} parent=11 // pred_fallthru
          _
        // Predicated region
        $region17: #{deconv2d_forward.1} parent=11 // pred_check
          %p134 = pneg %p82
        $region18: #{deconv2d_forward.1} parent=11 // pred_check_branch
          %136 = sbr.rel (%p134) target = $region20
        $region19: #{deconv2d_forward.1} parent=11 // pred_region
          %s138 = ssub.s32 16, 16
          %139 = vsyncadd [#allocation6], %s138
          %s141 = sshll.u32 %s2, 4
          %s142 = int_to_ptr.vmem [resolvable:$true] %s141
          %144 = dma.vmem_to_smem %s142, 16, [#allocation5], [#allocation6]
        $region20: #{deconv2d_forward.1} parent=11 // pred_fallthru
          _
      $region12: #{deconv2d_forward.1} parent=5 // pred_fallthru
        _
      %p145 = scmp.lt.s32.totalorder %s14, 2
      // Predicated region
      $region21: #{deconv2d_forward.1} parent=5 // pred_check
        %p146 = pneg %p145
      $region22: #{deconv2d_forward.1} parent=5 // pred_check_branch
        %148 = sbr.rel (%p146) target = $region24
      $region23: #{deconv2d_forward.1} parent=5 // pred_region
        // Predicated region
        $region25: #{deconv2d_forward.1} parent=23 // pred_check
          %p149 = pneg %p34
        $region26: #{deconv2d_forward.1} parent=23 // pred_check_branch
          %151 = sbr.rel (%p149) target = $region28
        $region27: #{deconv2d_forward.1} parent=23 // pred_region
          %p152 = scmp.lt.s32.totalorder %s14, 1
          %s153 = scalar_select %p152, %s14, 1
          %s154 = smul.addr %s153, 8
          %s155 = smul.addr %s154, 8
          %s156 = scalar_lea.vmem %s0, %s155
        $region28: #{deconv2d_forward.1} parent=23 // pred_fallthru
          _
      $region24: #{deconv2d_forward.1} parent=5 // pred_fallthru
        _
      %p157 = scmp.le.s32.totalorder 1, %s14
      %p158 = scmp.lt.s32.totalorder %s14, 3
      %p159 = pnand %p157, %p158
      %p160 = pneg %p159
      // Predicated region
      $region29: #{deconv2d_forward.1} parent=5 // pred_check
        _
      $region30: #{deconv2d_forward.1} parent=5 // pred_check_branch
        %162 = sbr.rel (%p159) target = $region32
      $region31: #{deconv2d_forward.1} parent=5 // pred_region
        %s163 = ssub.s32 %s14, 1
        // Predicated region
        $region33: #{deconv2d_forward.1} parent=31 // pred_check
          %p164 = pneg %p61
        $region34: #{deconv2d_forward.1} parent=31 // pred_check_branch
          %166 = sbr.rel (%p164) target = $region36
        $region35: #{deconv2d_forward.1} parent=31 // pred_region
          %167 = dma.done [#allocation4], 16
        $region36: #{deconv2d_forward.1} parent=31 // pred_fallthru
          _
        // Predicated region
        $region37: #{deconv2d_forward.1} parent=31 // pred_check
          %p168 = pneg %p82
        $region38: #{deconv2d_forward.1} parent=31 // pred_check_branch
          %170 = sbr.rel (%p168) target = $region40
        $region39: #{deconv2d_forward.1} parent=31 // pred_region
          %171 = dma.done [#allocation6], 16
        $region40: #{deconv2d_forward.1} parent=31 // pred_fallthru
          _
        %172 = sfence
        %p173 = scmp.lt.s32.totalorder %s19, 1
        %s174 = scalar_select %p173, %s19, 1
        %s175 = smul.addr %s174, 8
        %s176 = smul.addr %s175, 8
        %s177 = scalar_lea.vmem %s0, %s176
        %p178 = pneg %p40
        %p179 = pneg %p37
        %p180 = pneg %p61
        %p181 = pneg %p58
        %p182 = pneg %p82
        %p183 = pneg %p79
        %p184 = pneg %p108
        %p185 = pneg %p105
        %s186 = sand.u32 %s95, 1
        %s187 = scalar_lea.sflag [#allocation3], %s186
        %s188 = sand.u32 %s95, 1
        %s189 = smul.addr %s188, 64
        %s190 = scalar_lea.vmem [#allocation7], %s189
        %p191 = scmp.lt.s32.totalorder %s19, 1
        %s192 = scalar_select %p191, %s19, 1
        %s193 = smul.addr %s192, 8
        %s194 = smul.addr %s193, 8
        %s195 = scalar_lea.vmem %s0, %s194
        %v196 = vld [vmem:[%s195] sm:$0xff]
        %v197 = vld [vmem:[%s195 + $0x8] sm:$0xff]
        %200 = vrot.lane.b32.xlu0 %v196, 1
        %v201 = vpop.permute.xlu0 %200
        %202 = vrot.lane.b32.xlu0 %v197, 1
        %v203 = vpop.permute.xlu0 %202
        %vm206 = vcmask 7168
        %v207 = vsel %vm206, 0.0, %v201
        %v208 = vsel %vm206, 0.0, %v203
        %vm211 = vcmask 1040384
        %v212 = vrot.slane %v207, 7
        %v213 = vrot.slane %v208, 7
        %v214 = vsel %vm211, %v212, %v213
        %v217 = vsel %vm211, 0.0, %v212
        %s218 = sld [smem:[#allocation2]]
        %v219 = vstv %s218
        %v220 = vmul.f32 %v219, %v217
        %v221 = vmul.f32 %v219, %v214
        %v222 = vadd.f32 %v220, 0.0
        %v223 = vadd.f32 %v221, 0.0
        %s224 = sld [smem:[#allocation2 + $0x10]]
        %v225 = vstv %s224
        %v226 = vmul.f32 %v225, %v217
        %v227 = vmul.f32 %v225, %v214
        %v228 = vadd.f32 %v226, 0.0
        %v229 = vadd.f32 %v227, 0.0
        %s230 = sld [smem:[#allocation2 + $0x2]]
        %v231 = vstv %s230
        %v232 = vmul.f32 %v231, %v207
        %v233 = vmul.f32 %v231, %v208
        %v234 = vadd.f32 %v222, %v232
        %v235 = vadd.f32 %v223, %v233
        %s236 = sld [smem:[#allocation2 + $0x12]]
        %v237 = vstv %s236
        %v238 = vmul.f32 %v237, %v207
        %v239 = vmul.f32 %v237, %v208
        %v240 = vadd.f32 %v228, %v238
        %v241 = vadd.f32 %v229, %v239
        %s242 = sld [smem:[#allocation2 + $0x40]]
        %v243 = vstv %s242
        %v244 = vmul.f32 %v243, %v207
        %v245 = vmul.f32 %v243, %v208
        %v246 = vadd.f32 %v244, 0.0
        %v247 = vadd.f32 %v245, 0.0
        %s248 = sld [smem:[#allocation2 + $0x50]]
        %v249 = vstv %s248
        %v250 = vmul.f32 %v249, %v207
        %v251 = vmul.f32 %v249, %v208
        %v252 = vadd.f32 %v250, 0.0
        %v253 = vadd.f32 %v251, 0.0
        %vm254 = vcmask 1046528
        %v255 = vrot.slane %v207, 1
        %v256 = vrot.slane %v208, 1
        %v257 = vsel %vm254, %v255, %v256
        %v260 = vsel %vm254, %v256, 0.0
        %s261 = sld [smem:[#allocation2 + $0x42]]
        %v262 = vstv %s261
        %v263 = vmul.f32 %v262, %v257
        %v264 = vmul.f32 %v262, %v260
        %v265 = vadd.f32 %v246, %v263
        %v266 = vadd.f32 %v247, %v264
        %s267 = sld [smem:[#allocation2 + $0x52]]
        %v268 = vstv %s267
        %v269 = vmul.f32 %v268, %v257
        %v270 = vmul.f32 %v268, %v260
        %v271 = vadd.f32 %v252, %v269
        %v272 = vadd.f32 %v253, %v270
        %v273 = vrot.slane %v196, 7
        %v274 = vrot.slane %v197, 7
        %v275 = vsel %vm211, %v273, %v274
        %v278 = vsel %vm211, 0.0, %v273
        %s279 = sld [smem:[#allocation2 + $0x1]]
        %v280 = vstv %s279
        %v281 = vmul.f32 %v280, %v278
        %v282 = vmul.f32 %v280, %v275
        %v283 = vadd.f32 %v234, %v281
        %v284 = vadd.f32 %v235, %v282
        %s285 = sld [smem:[#allocation2 + $0x11]]
        %v286 = vstv %s285
        %v287 = vmul.f32 %v286, %v278
        %v288 = vmul.f32 %v286, %v275
        %v289 = vadd.f32 %v240, %v287
        %v290 = vadd.f32 %v241, %v288
        %s291 = sld [smem:[#allocation2 + $0x20]]
        %v292 = vstv %s291
        %v293 = vmul.f32 %v292, %v278
        %v294 = vmul.f32 %v292, %v275
        %v295 = vadd.f32 %v293, 0.0
        %v296 = vadd.f32 %v294, 0.0
        %s297 = sld [smem:[#allocation2 + $0x30]]
        %v298 = vstv %s297
        %v299 = vmul.f32 %v298, %v278
        %v300 = vmul.f32 %v298, %v275
        %v301 = vadd.f32 %v299, 0.0
        %v302 = vadd.f32 %v300, 0.0
        %s303 = sld [smem:[#allocation2 + $0x3]]
        %v304 = vstv %s303
        %v305 = vmul.f32 %v304, %v196
        %v306 = vmul.f32 %v304, %v197
        %v307 = vadd.f32 %v283, %v305
        %v308 = vadd.f32 %v284, %v306
        %s309 = sld [smem:[#allocation2 + $0x13]]
        %v310 = vstv %s309
        %v311 = vmul.f32 %v310, %v196
        %v312 = vmul.f32 %v310, %v197
        %v313 = vadd.f32 %v289, %v311
        %v314 = vadd.f32 %v290, %v312
        %s315 = sld [smem:[#allocation2 + $0x22]]
        %v316 = vstv %s315
        %v317 = vmul.f32 %v316, %v196
        %v318 = vmul.f32 %v316, %v197
        %v319 = vadd.f32 %v295, %v317
        %v320 = vadd.f32 %v296, %v318
        %s321 = sld [smem:[#allocation2 + $0x32]]
        %v322 = vstv %s321
        %v323 = vmul.f32 %v322, %v196
        %v324 = vmul.f32 %v322, %v197
        %v325 = vadd.f32 %v301, %v323
        %v326 = vadd.f32 %v302, %v324
        %s327 = sld [smem:[#allocation2 + $0x41]]
        %v328 = vstv %s327
        %v329 = vmul.f32 %v328, %v196
        %v330 = vmul.f32 %v328, %v197
        %v331 = vadd.f32 %v265, %v329
        %v332 = vadd.f32 %v266, %v330
        %s333 = sld [smem:[#allocation2 + $0x51]]
        %v334 = vstv %s333
        %v335 = vmul.f32 %v334, %v196
        %v336 = vmul.f32 %v334, %v197
        %v337 = vadd.f32 %v271, %v335
        %v338 = vadd.f32 %v272, %v336
        %s339 = sld [smem:[#allocation2 + $0x60]]
        %v340 = vstv %s339
        %v341 = vmul.f32 %v340, %v196
        %v342 = vmul.f32 %v340, %v197
        %v343 = vadd.f32 %v341, 0.0
        %v344 = vadd.f32 %v342, 0.0
        %s345 = sld [smem:[#allocation2 + $0x70]]
        %v346 = vstv %s345
        %v347 = vmul.f32 %v346, %v196
        %v348 = vmul.f32 %v346, %v197
        %v349 = vadd.f32 %v347, 0.0
        %v350 = vadd.f32 %v348, 0.0
        %v351 = vrot.slane %v196, 1
        %v352 = vrot.slane %v197, 1
        %v353 = vsel %vm254, %v351, %v352
        %v356 = vsel %vm254, %v352, 0.0
        %s357 = sld [smem:[#allocation2 + $0x43]]
        %v358 = vstv %s357
        %v359 = vmul.f32 %v358, %v353
        %v360 = vmul.f32 %v358, %v356
        %v361 = vadd.f32 %v331, %v359
        %v362 = vadd.f32 %v332, %v360
        %s363 = sld [smem:[#allocation2 + $0x53]]
        %v364 = vstv %s363
        %v365 = vmul.f32 %v364, %v353
        %v366 = vmul.f32 %v364, %v356
        %v367 = vadd.f32 %v337, %v365
        %v368 = vadd.f32 %v338, %v366
        %s369 = sld [smem:[#allocation2 + $0x62]]
        %v370 = vstv %s369
        %v371 = vmul.f32 %v370, %v353
        %v372 = vmul.f32 %v370, %v356
        %v373 = vadd.f32 %v343, %v371
        %v374 = vadd.f32 %v344, %v372
        %s375 = sld [smem:[#allocation2 + $0x72]]
        %v376 = vstv %s375
        %v377 = vmul.f32 %v376, %v353
        %v378 = vmul.f32 %v376, %v356
        %v379 = vadd.f32 %v349, %v377
        %v380 = vadd.f32 %v350, %v378
        %381 = vrot.lane.b32.xlu0 %v196, 127
        %v382 = vpop.permute.xlu0 %381
        %383 = vrot.lane.b32.xlu0 %v197, 127
        %v384 = vpop.permute.xlu0 %383
        %vm387 = vcmask 121856
        %v388 = vsel %vm387, %v382, 0.0
        %v389 = vsel %vm387, %v384, 0.0
        %v392 = vrot.slane %v388, 7
        %v393 = vrot.slane %v389, 7
        %v394 = vsel %vm211, %v392, %v393
        %v397 = vsel %vm211, 0.0, %v392
        %s398 = sld [smem:[#allocation2 + $0x21]]
        %v399 = vstv %s398
        %v400 = vmul.f32 %v399, %v397
        %v401 = vmul.f32 %v399, %v394
        %v402 = vadd.f32 %v319, %v400
        %v403 = vadd.f32 %v320, %v401
        %s404 = sld [smem:[#allocation2 + $0x31]]
        %v405 = vstv %s404
        %v406 = vmul.f32 %v405, %v397
        %v407 = vmul.f32 %v405, %v394
        %v408 = vadd.f32 %v325, %v406
        %v409 = vadd.f32 %v326, %v407
        %s410 = sld [smem:[#allocation2 + $0x23]]
        %v411 = vstv %s410
        %v412 = vmul.f32 %v411, %v388
        %v413 = vmul.f32 %v411, %v389
        %v414 = vadd.f32 %v402, %v412
        %v415 = vadd.f32 %v403, %v413
        %s416 = sld [smem:[#allocation2 + $0x33]]
        %v417 = vstv %s416
        %v418 = vmul.f32 %v417, %v388
        %v419 = vmul.f32 %v417, %v389
        %v420 = vadd.f32 %v408, %v418
        %v421 = vadd.f32 %v409, %v419
        %s422 = sld [smem:[#allocation2 + $0x61]]
        %v423 = vstv %s422
        %v424 = vmul.f32 %v423, %v388
        %v425 = vmul.f32 %v423, %v389
        %v426 = vadd.f32 %v373, %v424
        %v427 = vadd.f32 %v374, %v425
        %s428 = sld [smem:[#allocation2 + $0x71]]
        %v429 = vstv %s428
        %v430 = vmul.f32 %v429, %v388
        %v431 = vmul.f32 %v429, %v389
        %v432 = vadd.f32 %v379, %v430
        %v433 = vadd.f32 %v380, %v431
        %v434 = vrot.slane %v388, 1
        %v435 = vrot.slane %v389, 1
        %v436 = vsel %vm254, %v434, %v435
        %v439 = vsel %vm254, %v435, 0.0
        %s440 = sld [smem:[#allocation2 + $0x63]]
        %v441 = vstv %s440
        %v442 = vmul.f32 %v441, %v436
        %v443 = vmul.f32 %v441, %v439
        %v444 = vadd.f32 %v426, %v442
        %v445 = vadd.f32 %v427, %v443
        %s446 = sld [smem:[#allocation2 + $0x73]]
        %v447 = vstv %s446
        %v448 = vmul.f32 %v447, %v436
        %v449 = vmul.f32 %v447, %v439
        %v450 = vadd.f32 %v432, %v448
        %v451 = vadd.f32 %v433, %v449
        %s452 = scalar_lea.vmem %s195, 16
        %v453 = vld [vmem:[%s452] sm:$0xff]
        %v454 = vld [vmem:[%s452 + $0x8] sm:$0xff]
        %457 = vrot.lane.b32.xlu0 %v453, 1
        %v458 = vpop.permute.xlu0 %457
        %459 = vrot.lane.b32.xlu0 %v454, 1
        %v460 = vpop.permute.xlu0 %459
        %v463 = vsel %vm206, 0.0, %v458
        %v464 = vsel %vm206, 0.0, %v460
        %v467 = vrot.slane %v463, 7
        %v468 = vrot.slane %v464, 7
        %v469 = vsel %vm211, %v467, %v468
        %v472 = vsel %vm211, 0.0, %v467
        %s473 = sld [smem:[#allocation2 + $0x4]]
        %v474 = vstv %s473
        %v475 = vmul.f32 %v474, %v472
        %v476 = vmul.f32 %v474, %v469
        %v477 = vadd.f32 %v307, %v475
        %v478 = vadd.f32 %v308, %v476
        %s479 = sld [smem:[#allocation2 + $0x14]]
        %v480 = vstv %s479
        %v481 = vmul.f32 %v480, %v472
        %v482 = vmul.f32 %v480, %v469
        %v483 = vadd.f32 %v313, %v481
        %v484 = vadd.f32 %v314, %v482
        %s485 = sld [smem:[#allocation2 + $0x6]]
        %v486 = vstv %s485
        %v487 = vmul.f32 %v486, %v463
        %v488 = vmul.f32 %v486, %v464
        %v489 = vadd.f32 %v477, %v487
        %v490 = vadd.f32 %v478, %v488
        %s491 = sld [smem:[#allocation2 + $0x16]]
        %v492 = vstv %s491
        %v493 = vmul.f32 %v492, %v463
        %v494 = vmul.f32 %v492, %v464
        %v495 = vadd.f32 %v483, %v493
        %v496 = vadd.f32 %v484, %v494
        %s497 = sld [smem:[#allocation2 + $0x44]]
        %v498 = vstv %s497
        %v499 = vmul.f32 %v498, %v463
        %v500 = vmul.f32 %v498, %v464
        %v501 = vadd.f32 %v361, %v499
        %v502 = vadd.f32 %v362, %v500
        %s503 = sld [smem:[#allocation2 + $0x54]]
        %v504 = vstv %s503
        %v505 = vmul.f32 %v504, %v463
        %v506 = vmul.f32 %v504, %v464
        %v507 = vadd.f32 %v367, %v505
        %v508 = vadd.f32 %v368, %v506
        %v509 = vrot.slane %v463, 1
        %v510 = vrot.slane %v464, 1
        %v511 = vsel %vm254, %v509, %v510
        %v514 = vsel %vm254, %v510, 0.0
        %s515 = sld [smem:[#allocation2 + $0x46]]
        %v516 = vstv %s515
        %v517 = vmul.f32 %v516, %v511
        %v518 = vmul.f32 %v516, %v514
        %v519 = vadd.f32 %v501, %v517
        %v520 = vadd.f32 %v502, %v518
        %s521 = sld [smem:[#allocation2 + $0x56]]
        %v522 = vstv %s521
        %v523 = vmul.f32 %v522, %v511
        %v524 = vmul.f32 %v522, %v514
        %v525 = vadd.f32 %v507, %v523
        %v526 = vadd.f32 %v508, %v524
        %v527 = vrot.slane %v453, 7
        %v528 = vrot.slane %v454, 7
        %v529 = vsel %vm211, %v527, %v528
        %v532 = vsel %vm211, 0.0, %v527
        %s533 = sld [smem:[#allocation2 + $0x5]]
        %v534 = vstv %s533
        %v535 = vmul.f32 %v534, %v532
        %v536 = vmul.f32 %v534, %v529
        %v537 = vadd.f32 %v489, %v535
        %v538 = vadd.f32 %v490, %v536
        %s539 = sld [smem:[#allocation2 + $0x15]]
        %v540 = vstv %s539
        %v541 = vmul.f32 %v540, %v532
        %v542 = vmul.f32 %v540, %v529
        %v543 = vadd.f32 %v495, %v541
        %v544 = vadd.f32 %v496, %v542
        %s545 = sld [smem:[#allocation2 + $0x24]]
        %v546 = vstv %s545
        %v547 = vmul.f32 %v546, %v532
        %v548 = vmul.f32 %v546, %v529
        %v549 = vadd.f32 %v414, %v547
        %v550 = vadd.f32 %v415, %v548
        %s551 = sld [smem:[#allocation2 + $0x34]]
        %v552 = vstv %s551
        %v553 = vmul.f32 %v552, %v532
        %v554 = vmul.f32 %v552, %v529
        %v555 = vadd.f32 %v420, %v553
        %v556 = vadd.f32 %v421, %v554
        %s557 = sld [smem:[#allocation2 + $0x7]]
        %v558 = vstv %s557
        %v559 = vmul.f32 %v558, %v453
        %v560 = vmul.f32 %v558, %v454
        %v561 = vadd.f32 %v537, %v559
        %v562 = vadd.f32 %v538, %v560
        %s563 = sld [smem:[#allocation2 + $0x17]]
        %v564 = vstv %s563
        %v565 = vmul.f32 %v564, %v453
        %v566 = vmul.f32 %v564, %v454
        %v567 = vadd.f32 %v543, %v565
        %v568 = vadd.f32 %v544, %v566
        %s569 = sld [smem:[#allocation2 + $0x26]]
        %v570 = vstv %s569
        %v571 = vmul.f32 %v570, %v453
        %v572 = vmul.f32 %v570, %v454
        %v573 = vadd.f32 %v549, %v571
        %v574 = vadd.f32 %v550, %v572
        %s575 = sld [smem:[#allocation2 + $0x36]]
        %v576 = vstv %s575
        %v577 = vmul.f32 %v576, %v453
        %v578 = vmul.f32 %v576, %v454
        %v579 = vadd.f32 %v555, %v577
        %v580 = vadd.f32 %v556, %v578
        %s581 = sld [smem:[#allocation2 + $0x45]]
        %v582 = vstv %s581
        %v583 = vmul.f32 %v582, %v453
        %v584 = vmul.f32 %v582, %v454
        %v585 = vadd.f32 %v519, %v583
        %v586 = vadd.f32 %v520, %v584
        %s587 = sld [smem:[#allocation2 + $0x55]]
        %v588 = vstv %s587
        %v589 = vmul.f32 %v588, %v453
        %v590 = vmul.f32 %v588, %v454
        %v591 = vadd.f32 %v525, %v589
        %v592 = vadd.f32 %v526, %v590
        %s593 = sld [smem:[#allocation2 + $0x64]]
        %v594 = vstv %s593
        %v595 = vmul.f32 %v594, %v453
        %v596 = vmul.f32 %v594, %v454
        %v597 = vadd.f32 %v444, %v595
        %v598 = vadd.f32 %v445, %v596
        %s599 = sld [smem:[#allocation2 + $0x74]]
        %v600 = vstv %s599
        %v601 = vmul.f32 %v600, %v453
        %v602 = vmul.f32 %v600, %v454
        %v603 = vadd.f32 %v450, %v601
        %v604 = vadd.f32 %v451, %v602
        %v605 = vrot.slane %v453, 1
        %v606 = vrot.slane %v454, 1
        %v607 = vsel %vm254, %v605, %v606
        %v610 = vsel %vm254, %v606, 0.0
        %s611 = sld [smem:[#allocation2 + $0x47]]
        %v612 = vstv %s611
        %v613 = vmul.f32 %v612, %v607
        %v614 = vmul.f32 %v612, %v610
        %v615 = vadd.f32 %v585, %v613
        %v616 = vadd.f32 %v586, %v614
        %s617 = sld [smem:[#allocation2 + $0x57]]
        %v618 = vstv %s617
        %v619 = vmul.f32 %v618, %v607
        %v620 = vmul.f32 %v618, %v610
        %v621 = vadd.f32 %v591, %v619
        %v622 = vadd.f32 %v592, %v620
        %s623 = sld [smem:[#allocation2 + $0x66]]
        %v624 = vstv %s623
        %v625 = vmul.f32 %v624, %v607
        %v626 = vmul.f32 %v624, %v610
        %v627 = vadd.f32 %v597, %v625
        %v628 = vadd.f32 %v598, %v626
        %s629 = sld [smem:[#allocation2 + $0x76]]
        %v630 = vstv %s629
        %v631 = vmul.f32 %v630, %v607
        %v632 = vmul.f32 %v630, %v610
        %v633 = vadd.f32 %v603, %v631
        %v634 = vadd.f32 %v604, %v632
        %635 = vrot.lane.b32.xlu0 %v453, 127
        %v636 = vpop.permute.xlu0 %635
        %637 = vrot.lane.b32.xlu0 %v454, 127
        %v638 = vpop.permute.xlu0 %637
        %v641 = vsel %vm387, %v636, 0.0
        %v642 = vsel %vm387, %v638, 0.0
        %v645 = vrot.slane %v641, 7
        %v646 = vrot.slane %v642, 7
        %v647 = vsel %vm211, %v645, %v646
        %v650 = vsel %vm211, 0.0, %v645
        %s651 = sld [smem:[#allocation2 + $0x25]]
        %v652 = vstv %s651
        %v653 = vmul.f32 %v652, %v650
        %v654 = vmul.f32 %v652, %v647
        %v655 = vadd.f32 %v573, %v653
        %v656 = vadd.f32 %v574, %v654
        %s657 = sld [smem:[#allocation2 + $0x35]]
        %v658 = vstv %s657
        %v659 = vmul.f32 %v658, %v650
        %v660 = vmul.f32 %v658, %v647
        %v661 = vadd.f32 %v579, %v659
        %v662 = vadd.f32 %v580, %v660
        %s663 = sld [smem:[#allocation2 + $0x27]]
        %v664 = vstv %s663
        %v665 = vmul.f32 %v664, %v641
        %v666 = vmul.f32 %v664, %v642
        %v667 = vadd.f32 %v655, %v665
        %v668 = vadd.f32 %v656, %v666
        %s669 = sld [smem:[#allocation2 + $0x37]]
        %v670 = vstv %s669
        %v671 = vmul.f32 %v670, %v641
        %v672 = vmul.f32 %v670, %v642
        %v673 = vadd.f32 %v661, %v671
        %v674 = vadd.f32 %v662, %v672
        %s675 = sld [smem:[#allocation2 + $0x65]]
        %v676 = vstv %s675
        %v677 = vmul.f32 %v676, %v641
        %v678 = vmul.f32 %v676, %v642
        %v679 = vadd.f32 %v627, %v677
        %v680 = vadd.f32 %v628, %v678
        %s681 = sld [smem:[#allocation2 + $0x75]]
        %v682 = vstv %s681
        %v683 = vmul.f32 %v682, %v641
        %v684 = vmul.f32 %v682, %v642
        %v685 = vadd.f32 %v633, %v683
        %v686 = vadd.f32 %v634, %v684
        %v687 = vrot.slane %v641, 1
        %v688 = vrot.slane %v642, 1
        %v689 = vsel %vm254, %v687, %v688
        %v692 = vsel %vm254, %v688, 0.0
        %s693 = sld [smem:[#allocation2 + $0x67]]
        %v694 = vstv %s693
        %v695 = vmul.f32 %v694, %v689
        %v696 = vmul.f32 %v694, %v692
        %v697 = vadd.f32 %v679, %v695
        %v698 = vadd.f32 %v680, %v696
        %s699 = sld [smem:[#allocation2 + $0x77]]
        %v700 = vstv %s699
        %v701 = vmul.f32 %v700, %v689
        %v702 = vmul.f32 %v700, %v692
        %v703 = vadd.f32 %v685, %v701
        %v704 = vadd.f32 %v686, %v702
        %s705 = scalar_lea.vmem %s195, 32
        %v706 = vld [vmem:[%s705] sm:$0xff]
        %v707 = vld [vmem:[%s705 + $0x8] sm:$0xff]
        %710 = vrot.lane.b32.xlu0 %v706, 1
        %v711 = vpop.permute.xlu0 %710
        %712 = vrot.lane.b32.xlu0 %v707, 1
        %v713 = vpop.permute.xlu0 %712
        %v716 = vsel %vm206, 0.0, %v711
        %v717 = vsel %vm206, 0.0, %v713
        %v720 = vrot.slane %v716, 7
        %v721 = vrot.slane %v717, 7
        %v722 = vsel %vm211, %v720, %v721
        %v725 = vsel %vm211, 0.0, %v720
        %s726 = sld [smem:[#allocation2 + $0x8]]
        %v727 = vstv %s726
        %v728 = vmul.f32 %v727, %v725
        %v729 = vmul.f32 %v727, %v722
        %v730 = vadd.f32 %v561, %v728
        %v731 = vadd.f32 %v562, %v729
        %s732 = sld [smem:[#allocation2 + $0x18]]
        %v733 = vstv %s732
        %v734 = vmul.f32 %v733, %v725
        %v735 = vmul.f32 %v733, %v722
        %v736 = vadd.f32 %v567, %v734
        %v737 = vadd.f32 %v568, %v735
        %s738 = sld [smem:[#allocation2 + $0xa]]
        %v739 = vstv %s738
        %v740 = vmul.f32 %v739, %v716
        %v741 = vmul.f32 %v739, %v717
        %v742 = vadd.f32 %v730, %v740
        %v743 = vadd.f32 %v731, %v741
        %s744 = sld [smem:[#allocation2 + $0x1a]]
        %v745 = vstv %s744
        %v746 = vmul.f32 %v745, %v716
        %v747 = vmul.f32 %v745, %v717
        %v748 = vadd.f32 %v736, %v746
        %v749 = vadd.f32 %v737, %v747
        %s750 = sld [smem:[#allocation2 + $0x48]]
        %v751 = vstv %s750
        %v752 = vmul.f32 %v751, %v716
        %v753 = vmul.f32 %v751, %v717
        %v754 = vadd.f32 %v615, %v752
        %v755 = vadd.f32 %v616, %v753
        %s756 = sld [smem:[#allocation2 + $0x58]]
        %v757 = vstv %s756
        %v758 = vmul.f32 %v757, %v716
        %v759 = vmul.f32 %v757, %v717
        %v760 = vadd.f32 %v621, %v758
        %v761 = vadd.f32 %v622, %v759
        %v762 = vrot.slane %v716, 1
        %v763 = vrot.slane %v717, 1
        %v764 = vsel %vm254, %v762, %v763
        %v767 = vsel %vm254, %v763, 0.0
        %s768 = sld [smem:[#allocation2 + $0x4a]]
        %v769 = vstv %s768
        %v770 = vmul.f32 %v769, %v764
        %v771 = vmul.f32 %v769, %v767
        %v772 = vadd.f32 %v754, %v770
        %v773 = vadd.f32 %v755, %v771
        %s774 = sld [smem:[#allocation2 + $0x5a]]
        %v775 = vstv %s774
        %v776 = vmul.f32 %v775, %v764
        %v777 = vmul.f32 %v775, %v767
        %v778 = vadd.f32 %v760, %v776
        %v779 = vadd.f32 %v761, %v777
        %v780 = vrot.slane %v706, 7
        %v781 = vrot.slane %v707, 7
        %v782 = vsel %vm211, %v780, %v781
        %v785 = vsel %vm211, 0.0, %v780
        %s786 = sld [smem:[#allocation2 + $0x9]]
        %v787 = vstv %s786
        %v788 = vmul.f32 %v787, %v785
        %v789 = vmul.f32 %v787, %v782
        %v790 = vadd.f32 %v742, %v788
        %v791 = vadd.f32 %v743, %v789
        %s792 = sld [smem:[#allocation2 + $0x19]]
        %v793 = vstv %s792
        %v794 = vmul.f32 %v793, %v785
        %v795 = vmul.f32 %v793, %v782
        %v796 = vadd.f32 %v748, %v794
        %v797 = vadd.f32 %v749, %v795
        %s798 = sld [smem:[#allocation2 + $0x28]]
        %v799 = vstv %s798
        %v800 = vmul.f32 %v799, %v785
        %v801 = vmul.f32 %v799, %v782
        %v802 = vadd.f32 %v667, %v800
        %v803 = vadd.f32 %v668, %v801
        %s804 = sld [smem:[#allocation2 + $0x38]]
        %v805 = vstv %s804
        %v806 = vmul.f32 %v805, %v785
        %v807 = vmul.f32 %v805, %v782
        %v808 = vadd.f32 %v673, %v806
        %v809 = vadd.f32 %v674, %v807
        %s810 = sld [smem:[#allocation2 + $0xb]]
        %v811 = vstv %s810
        %v812 = vmul.f32 %v811, %v706
        %v813 = vmul.f32 %v811, %v707
        %v814 = vadd.f32 %v790, %v812
        %v815 = vadd.f32 %v791, %v813
        %s816 = sld [smem:[#allocation2 + $0x1b]]
        %v817 = vstv %s816
        %v818 = vmul.f32 %v817, %v706
        %v819 = vmul.f32 %v817, %v707
        %v820 = vadd.f32 %v796, %v818
        %v821 = vadd.f32 %v797, %v819
        %s822 = sld [smem:[#allocation2 + $0x2a]]
        %v823 = vstv %s822
        %v824 = vmul.f32 %v823, %v706
        %v825 = vmul.f32 %v823, %v707
        %v826 = vadd.f32 %v802, %v824
        %v827 = vadd.f32 %v803, %v825
        %s828 = sld [smem:[#allocation2 + $0x3a]]
        %v829 = vstv %s828
        %v830 = vmul.f32 %v829, %v706
        %v831 = vmul.f32 %v829, %v707
        %v832 = vadd.f32 %v808, %v830
        %v833 = vadd.f32 %v809, %v831
        %s834 = sld [smem:[#allocation2 + $0x49]]
        %v835 = vstv %s834
        %v836 = vmul.f32 %v835, %v706
        %v837 = vmul.f32 %v835, %v707
        %v838 = vadd.f32 %v772, %v836
        %v839 = vadd.f32 %v773, %v837
        %s840 = sld [smem:[#allocation2 + $0x59]]
        %v841 = vstv %s840
        %v842 = vmul.f32 %v841, %v706
        %v843 = vmul.f32 %v841, %v707
        %v844 = vadd.f32 %v778, %v842
        %v845 = vadd.f32 %v779, %v843
        %s846 = sld [smem:[#allocation2 + $0x68]]
        %v847 = vstv %s846
        %v848 = vmul.f32 %v847, %v706
        %v849 = vmul.f32 %v847, %v707
        %v850 = vadd.f32 %v697, %v848
        %v851 = vadd.f32 %v698, %v849
        %s852 = sld [smem:[#allocation2 + $0x78]]
        %v853 = vstv %s852
        %v854 = vmul.f32 %v853, %v706
        %v855 = vmul.f32 %v853, %v707
        %v856 = vadd.f32 %v703, %v854
        %v857 = vadd.f32 %v704, %v855
        %v858 = vrot.slane %v706, 1
        %v859 = vrot.slane %v707, 1
        %v860 = vsel %vm254, %v858, %v859
        %v863 = vsel %vm254, %v859, 0.0
        %s864 = sld [smem:[#allocation2 + $0x4b]]
        %v865 = vstv %s864
        %v866 = vmul.f32 %v865, %v860
        %v867 = vmul.f32 %v865, %v863
        %v868 = vadd.f32 %v838, %v866
        %v869 = vadd.f32 %v839, %v867
        %s870 = sld [smem:[#allocation2 + $0x5b]]
        %v871 = vstv %s870
        %v872 = vmul.f32 %v871, %v860
        %v873 = vmul.f32 %v871, %v863
        %v874 = vadd.f32 %v844, %v872
        %v875 = vadd.f32 %v845, %v873
        %s876 = sld [smem:[#allocation2 + $0x6a]]
        %v877 = vstv %s876
        %v878 = vmul.f32 %v877, %v860
        %v879 = vmul.f32 %v877, %v863
        %v880 = vadd.f32 %v850, %v878
        %v881 = vadd.f32 %v851, %v879
        %s882 = sld [smem:[#allocation2 + $0x7a]]
        %v883 = vstv %s882
        %v884 = vmul.f32 %v883, %v860
        %v885 = vmul.f32 %v883, %v863
        %v886 = vadd.f32 %v856, %v884
        %v887 = vadd.f32 %v857, %v885
        %888 = vrot.lane.b32.xlu0 %v706, 127
        %v889 = vpop.permute.xlu0 %888
        %890 = vrot.lane.b32.xlu0 %v707, 127
        %v891 = vpop.permute.xlu0 %890
        %v894 = vsel %vm387, %v889, 0.0
        %v895 = vsel %vm387, %v891, 0.0
        %v898 = vrot.slane %v894, 7
        %v899 = vrot.slane %v895, 7
        %v900 = vsel %vm211, %v898, %v899
        %v903 = vsel %vm211, 0.0, %v898
        %s904 = sld [smem:[#allocation2 + $0x29]]
        %v905 = vstv %s904
        %v906 = vmul.f32 %v905, %v903
        %v907 = vmul.f32 %v905, %v900
        %v908 = vadd.f32 %v826, %v906
        %v909 = vadd.f32 %v827, %v907
        %s910 = sld [smem:[#allocation2 + $0x39]]
        %v911 = vstv %s910
        %v912 = vmul.f32 %v911, %v903
        %v913 = vmul.f32 %v911, %v900
        %v914 = vadd.f32 %v832, %v912
        %v915 = vadd.f32 %v833, %v913
        %s916 = sld [smem:[#allocation2 + $0x2b]]
        %v917 = vstv %s916
        %v918 = vmul.f32 %v917, %v894
        %v919 = vmul.f32 %v917, %v895
        %v920 = vadd.f32 %v908, %v918
        %v921 = vadd.f32 %v909, %v919
        %s922 = sld [smem:[#allocation2 + $0x3b]]
        %v923 = vstv %s922
        %v924 = vmul.f32 %v923, %v894
        %v925 = vmul.f32 %v923, %v895
        %v926 = vadd.f32 %v914, %v924
        %v927 = vadd.f32 %v915, %v925
        %s928 = sld [smem:[#allocation2 + $0x69]]
        %v929 = vstv %s928
        %v930 = vmul.f32 %v929, %v894
        %v931 = vmul.f32 %v929, %v895
        %v932 = vadd.f32 %v880, %v930
        %v933 = vadd.f32 %v881, %v931
        %s934 = sld [smem:[#allocation2 + $0x79]]
        %v935 = vstv %s934
        %v936 = vmul.f32 %v935, %v894
        %v937 = vmul.f32 %v935, %v895
        %v938 = vadd.f32 %v886, %v936
        %v939 = vadd.f32 %v887, %v937
        %v940 = vrot.slane %v894, 1
        %v941 = vrot.slane %v895, 1
        %v942 = vsel %vm254, %v940, %v941
        %v945 = vsel %vm254, %v941, 0.0
        %s946 = sld [smem:[#allocation2 + $0x6b]]
        %v947 = vstv %s946
        %v948 = vmul.f32 %v947, %v942
        %v949 = vmul.f32 %v947, %v945
        %v950 = vadd.f32 %v932, %v948
        %v951 = vadd.f32 %v933, %v949
        %s952 = sld [smem:[#allocation2 + $0x7b]]
        %v953 = vstv %s952
        %v954 = vmul.f32 %v953, %v942
        %v955 = vmul.f32 %v953, %v945
        %v956 = vadd.f32 %v938, %v954
        %v957 = vadd.f32 %v939, %v955
        %s958 = scalar_lea.vmem %s195, 48
        %v959 = vld [vmem:[%s958] sm:$0xff]
        %v960 = vld [vmem:[%s958 + $0x8] sm:$0xff]
        %963 = vrot.lane.b32.xlu0 %v959, 1
        %v964 = vpop.permute.xlu0 %963
        %965 = vrot.lane.b32.xlu0 %v960, 1
        %v966 = vpop.permute.xlu0 %965
        %v969 = vsel %vm206, 0.0, %v964
        %v970 = vsel %vm206, 0.0, %v966
        %v973 = vrot.slane %v969, 7
        %v974 = vrot.slane %v970, 7
        %v975 = vsel %vm211, %v973, %v974
        %v978 = vsel %vm211, 0.0, %v973
        %s979 = sld [smem:[#allocation2 + $0xc]]
        %v980 = vstv %s979
        %v981 = vmul.f32 %v980, %v978
        %v982 = vmul.f32 %v980, %v975
        %v983 = vadd.f32 %v814, %v981
        %v984 = vadd.f32 %v815, %v982
        %s985 = sld [smem:[#allocation2 + $0x1c]]
        %v986 = vstv %s985
        %v987 = vmul.f32 %v986, %v978
        %v988 = vmul.f32 %v986, %v975
        %v989 = vadd.f32 %v820, %v987
        %v990 = vadd.f32 %v821, %v988
        %s991 = sld [smem:[#allocation2 + $0xe]]
        %v992 = vstv %s991
        %v993 = vmul.f32 %v992, %v969
        %v994 = vmul.f32 %v992, %v970
        %v995 = vadd.f32 %v983, %v993
        %v996 = vadd.f32 %v984, %v994
        %s997 = sld [smem:[#allocation2 + $0x1e]]
        %v998 = vstv %s997
        %v999 = vmul.f32 %v998, %v969
        %v1000 = vmul.f32 %v998, %v970
        %v1001 = vadd.f32 %v989, %v999
        %v1002 = vadd.f32 %v990, %v1000
        %s1003 = sld [smem:[#allocation2 + $0x4c]]
        %v1004 = vstv %s1003
        %v1005 = vmul.f32 %v1004, %v969
        %v1006 = vmul.f32 %v1004, %v970
        %v1007 = vadd.f32 %v868, %v1005
        %v1008 = vadd.f32 %v869, %v1006
        %s1009 = sld [smem:[#allocation2 + $0x5c]]
        %v1010 = vstv %s1009
        %v1011 = vmul.f32 %v1010, %v969
        %v1012 = vmul.f32 %v1010, %v970
        %v1013 = vadd.f32 %v874, %v1011
        %v1014 = vadd.f32 %v875, %v1012
        %v1015 = vrot.slane %v969, 1
        %v1016 = vrot.slane %v970, 1
        %v1017 = vsel %vm254, %v1015, %v1016
        %v1020 = vsel %vm254, %v1016, 0.0
        %s1021 = sld [smem:[#allocation2 + $0x4e]]
        %v1022 = vstv %s1021
        %v1023 = vmul.f32 %v1022, %v1017
        %v1024 = vmul.f32 %v1022, %v1020
        %v1025 = vadd.f32 %v1007, %v1023
        %v1026 = vadd.f32 %v1008, %v1024
        %s1027 = sld [smem:[#allocation2 + $0x5e]]
        %v1028 = vstv %s1027
        %v1029 = vmul.f32 %v1028, %v1017
        %v1030 = vmul.f32 %v1028, %v1020
        %v1031 = vadd.f32 %v1013, %v1029
        %v1032 = vadd.f32 %v1014, %v1030
        %v1033 = vrot.slane %v959, 7
        %v1034 = vrot.slane %v960, 7
        %v1035 = vsel %vm211, %v1033, %v1034
        %v1038 = vsel %vm211, 0.0, %v1033
        %s1039 = sld [smem:[#allocation2 + $0xd]]
        %v1040 = vstv %s1039
        %v1041 = vmul.f32 %v1040, %v1038
        %v1042 = vmul.f32 %v1040, %v1035
        %v1043 = vadd.f32 %v995, %v1041
        %v1044 = vadd.f32 %v996, %v1042
        %s1045 = sld [smem:[#allocation2 + $0x1d]]
        %v1046 = vstv %s1045
        %v1047 = vmul.f32 %v1046, %v1038
        %v1048 = vmul.f32 %v1046, %v1035
        %v1049 = vadd.f32 %v1001, %v1047
        %v1050 = vadd.f32 %v1002, %v1048
        %s1051 = sld [smem:[#allocation2 + $0x2c]]
        %v1052 = vstv %s1051
        %v1053 = vmul.f32 %v1052, %v1038
        %v1054 = vmul.f32 %v1052, %v1035
        %v1055 = vadd.f32 %v920, %v1053
        %v1056 = vadd.f32 %v921, %v1054
        %s1057 = sld [smem:[#allocation2 + $0x3c]]
        %v1058 = vstv %s1057
        %v1059 = vmul.f32 %v1058, %v1038
        %v1060 = vmul.f32 %v1058, %v1035
        %v1061 = vadd.f32 %v926, %v1059
        %v1062 = vadd.f32 %v927, %v1060
        %s1063 = sld [smem:[#allocation2 + $0xf]]
        %v1064 = vstv %s1063
        %v1065 = vmul.f32 %v1064, %v959
        %v1066 = vmul.f32 %v1064, %v960
        %v1067 = vadd.f32 %v1043, %v1065
        %v1068 = vadd.f32 %v1044, %v1066
        %s1069 = sld [smem:[#allocation2 + $0x1f]]
        %v1070 = vstv %s1069
        %v1071 = vmul.f32 %v1070, %v959
        %v1072 = vmul.f32 %v1070, %v960
        %v1073 = vadd.f32 %v1049, %v1071
        %v1074 = vadd.f32 %v1050, %v1072
        %s1075 = sld [smem:[#allocation2 + $0x2e]]
        %v1076 = vstv %s1075
        %v1077 = vmul.f32 %v1076, %v959
        %v1078 = vmul.f32 %v1076, %v960
        %v1079 = vadd.f32 %v1055, %v1077
        %v1080 = vadd.f32 %v1056, %v1078
        %s1081 = sld [smem:[#allocation2 + $0x3e]]
        %v1082 = vstv %s1081
        %v1083 = vmul.f32 %v1082, %v959
        %v1084 = vmul.f32 %v1082, %v960
        %v1085 = vadd.f32 %v1061, %v1083
        %v1086 = vadd.f32 %v1062, %v1084
        %s1087 = sld [smem:[#allocation2 + $0x4d]]
        %v1088 = vstv %s1087
        %v1089 = vmul.f32 %v1088, %v959
        %v1090 = vmul.f32 %v1088, %v960
        %v1091 = vadd.f32 %v1025, %v1089
        %v1092 = vadd.f32 %v1026, %v1090
        %s1093 = sld [smem:[#allocation2 + $0x5d]]
        %v1094 = vstv %s1093
        %v1095 = vmul.f32 %v1094, %v959
        %v1096 = vmul.f32 %v1094, %v960
        %v1097 = vadd.f32 %v1031, %v1095
        %v1098 = vadd.f32 %v1032, %v1096
        %s1099 = sld [smem:[#allocation2 + $0x6c]]
        %v1100 = vstv %s1099
        %v1101 = vmul.f32 %v1100, %v959
        %v1102 = vmul.f32 %v1100, %v960
        %v1103 = vadd.f32 %v950, %v1101
        %v1104 = vadd.f32 %v951, %v1102
        %s1105 = sld [smem:[#allocation2 + $0x7c]]
        %v1106 = vstv %s1105
        %v1107 = vmul.f32 %v1106, %v959
        %v1108 = vmul.f32 %v1106, %v960
        %v1109 = vadd.f32 %v956, %v1107
        %v1110 = vadd.f32 %v957, %v1108
        %v1111 = vrot.slane %v959, 1
        %v1112 = vrot.slane %v960, 1
        %v1113 = vsel %vm254, %v1111, %v1112
        %v1116 = vsel %vm254, %v1112, 0.0
        %s1117 = sld [smem:[#allocation2 + $0x4f]]
        %v1118 = vstv %s1117
        %v1119 = vmul.f32 %v1118, %v1113
        %v1120 = vmul.f32 %v1118, %v1116
        %v1121 = vadd.f32 %v1091, %v1119
        %v1122 = vadd.f32 %v1092, %v1120
        %s1123 = sld [smem:[#allocation2 + $0x5f]]
        %v1124 = vstv %s1123
        %v1125 = vmul.f32 %v1124, %v1113
        %v1126 = vmul.f32 %v1124, %v1116
        %v1127 = vadd.f32 %v1097, %v1125
        %v1128 = vadd.f32 %v1098, %v1126
        %s1129 = sld [smem:[#allocation2 + $0x6e]]
        %v1130 = vstv %s1129
        %v1131 = vmul.f32 %v1130, %v1113
        %v1132 = vmul.f32 %v1130, %v1116
        %v1133 = vadd.f32 %v1103, %v1131
        %v1134 = vadd.f32 %v1104, %v1132
        %s1135 = sld [smem:[#allocation2 + $0x7e]]
        %v1136 = vstv %s1135
        %v1137 = vmul.f32 %v1136, %v1113
        %v1138 = vmul.f32 %v1136, %v1116
        %v1139 = vadd.f32 %v1109, %v1137
        %v1140 = vadd.f32 %v1110, %v1138
        %1141 = vrot.lane.b32.xlu0 %v959, 127
        %v1142 = vpop.permute.xlu0 %1141
        %1143 = vrot.lane.b32.xlu0 %v960, 127
        %v1144 = vpop.permute.xlu0 %1143
        %v1147 = vsel %vm387, %v1142, 0.0
        %v1148 = vsel %vm387, %v1144, 0.0
        %v1151 = vrot.slane %v1147, 7
        %v1152 = vrot.slane %v1148, 7
        %v1153 = vsel %vm211, %v1151, %v1152
        %v1156 = vsel %vm211, 0.0, %v1151
        %s1157 = sld [smem:[#allocation2 + $0x2d]]
        %v1158 = vstv %s1157
        %v1159 = vmul.f32 %v1158, %v1156
        %v1160 = vmul.f32 %v1158, %v1153
        %v1161 = vadd.f32 %v1079, %v1159
        %v1162 = vadd.f32 %v1080, %v1160
        %s1163 = sld [smem:[#allocation2 + $0x3d]]
        %v1164 = vstv %s1163
        %v1165 = vmul.f32 %v1164, %v1156
        %v1166 = vmul.f32 %v1164, %v1153
        %v1167 = vadd.f32 %v1085, %v1165
        %v1168 = vadd.f32 %v1086, %v1166
        %s1169 = sld [smem:[#allocation2 + $0x2f]]
        %v1170 = vstv %s1169
        %v1171 = vmul.f32 %v1170, %v1147
        %v1172 = vmul.f32 %v1170, %v1148
        %v1173 = vadd.f32 %v1161, %v1171
        %v1174 = vadd.f32 %v1162, %v1172
        %s1175 = sld [smem:[#allocation2 + $0x3f]]
        %v1176 = vstv %s1175
        %v1177 = vmul.f32 %v1176, %v1147
        %v1178 = vmul.f32 %v1176, %v1148
        %v1179 = vadd.f32 %v1167, %v1177
        %v1180 = vadd.f32 %v1168, %v1178
        %s1181 = sld [smem:[#allocation2 + $0x6d]]
        %v1182 = vstv %s1181
        %v1183 = vmul.f32 %v1182, %v1147
        %v1184 = vmul.f32 %v1182, %v1148
        %v1185 = vadd.f32 %v1133, %v1183
        %v1186 = vadd.f32 %v1134, %v1184
        %s1187 = sld [smem:[#allocation2 + $0x7d]]
        %v1188 = vstv %s1187
        %v1189 = vmul.f32 %v1188, %v1147
        %v1190 = vmul.f32 %v1188, %v1148
        %v1191 = vadd.f32 %v1139, %v1189
        %v1192 = vadd.f32 %v1140, %v1190
        %v1193 = vrot.slane %v1147, 1
        %v1194 = vrot.slane %v1148, 1
        %v1195 = vsel %vm254, %v1193, %v1194
        %v1198 = vsel %vm254, %v1194, 0.0
        %s1199 = sld [smem:[#allocation2 + $0x6f]]
        %v1200 = vstv %s1199
        %v1201 = vmul.f32 %v1200, %v1195
        %v1202 = vmul.f32 %v1200, %v1198
        %v1203 = vadd.f32 %v1185, %v1201
        %v1204 = vadd.f32 %v1186, %v1202
        %s1205 = sld [smem:[#allocation2 + $0x7f]]
        %v1206 = vstv %s1205
        %v1207 = vmul.f32 %v1206, %v1195
        %v1208 = vmul.f32 %v1206, %v1198
        %v1209 = vadd.f32 %v1191, %v1207
        %v1210 = vadd.f32 %v1192, %v1208
        %v1211 = vlaneseq
        %v1212 = vshrl.u32 %v1211, 7
        %v1213 = vadd.s32 %v1212, 8
        %v1214 = vadd.s32 %v1212, 16
        %v1215 = vadd.s32 %v1212, 24
        %v1216 = vlaneseq
        %v1217 = vand.u32 %v1216, 127
        %v1218 = vmul.u32 %v1217, 2
        %vm1219 = vcmp.eq.s32.totalorder %v1212, %v1218
        %vm1220 = vcmp.eq.s32.totalorder %v1213, %v1218
        %vm1221 = vcmp.eq.s32.totalorder %v1214, %v1218
        %vm1222 = vcmp.eq.s32.totalorder %v1215, %v1218
        %v1223 = vsel %vm1219, 1.0, 0.0
        %v1224 = vsel %vm1220, 1.0, 0.0
        %v1225 = vsel %vm1221, 1.0, 0.0
        %v1226 = vsel %vm1222, 1.0, 0.0
        %v1227 = vadd.s32 %v1218, 1
        %vm1228 = vcmp.eq.s32.totalorder %v1212, %v1227
        %vm1229 = vcmp.eq.s32.totalorder %v1213, %v1227
        %vm1230 = vcmp.eq.s32.totalorder %v1214, %v1227
        %vm1231 = vcmp.eq.s32.totalorder %v1215, %v1227
        %v1232 = vsel %vm1228, 1.0, 0.0
        %v1233 = vsel %vm1229, 1.0, 0.0
        %v1234 = vsel %vm1230, 1.0, 0.0
        %v1235 = vsel %vm1231, 1.0, 0.0
        %v1236 = vmul.u32 %v1212, 2
        %v1237 = vmul.u32 %v1213, 2
        %vm1238 = vcmp.eq.s32.totalorder %v1217, %v1236
        %vm1239 = vcmp.eq.s32.totalorder %v1217, %v1237
        %v1240 = vsel %vm1238, 1.0, 0.0
        %v1241 = vsel %vm1239, 1.0, 0.0
        %v1242 = vadd.s32 %v1236, 1
        %v1243 = vadd.s32 %v1237, 1
        %vm1244 = vcmp.eq.s32.totalorder %v1217, %v1242
        %vm1245 = vcmp.eq.s32.totalorder %v1217, %v1243
        %v1246 = vsel %vm1244, 1.0, 0.0
        %v1247 = vsel %vm1245, 1.0, 0.0
        %s1248 = sld [smem:[#allocation5]]
        %v1249 = vstv %s1248
        %vm1250 = vcmask 130048
        %v1252 = vsel %vm1250, %v1173, 0
        %v1255 = vsel %vm1250, %v1174, 0
        %1257 = vmatprep.subr.mxu0 0.0
        %1258 = vmatpush1.msra.mxu0 0.0
        %1259 = vmatprep.subr.mxu0 0.0
        %1260 = vmatpush1.msra.mxu0 0.0
        %1261 = vmatprep.subr.mxu0 0.0
        %1262 = vmatpush1.msra.mxu0 0.0
        %1263 = vmatprep.subr.mxu0 0.0
        %1264 = vmatpush1.msra.mxu0 0.0
        %1265 = vmatprep.subr.mxu0 0.0
        %1266 = vmatpush1.msra.mxu0 0.0
        %1267 = vmatprep.subr.mxu0 0.0
        %1268 = vmatpush1.msra.mxu0 0.0
        %1269 = vmatprep.subr.mxu0 0.0
        %1270 = vmatpush1.msra.mxu0 0.0
        %1271 = vmatprep.subr.mxu0 0.0
        %1272 = vmatpush1.msra.mxu0 0.0
        %1273 = vmatprep.subr.mxu0 0.0
        %1274 = vmatpush1.msra.mxu0 0.0
        %1275 = vmatprep.subr.mxu0 0.0
        %1276 = vmatpush1.msra.mxu0 0.0
        %1277 = vmatprep.subr.mxu0 0.0
        %1278 = vmatpush1.msra.mxu0 0.0
        %1279 = vmatprep.subr.mxu0 0.0
        %1280 = vmatpush1.msra.mxu0 0.0
        %1281 = vmatprep.subr.mxu0 0.0
        %1282 = vmatpush1.msra.mxu0 0.0
        %1283 = vmatprep.subr.mxu0 0.0
        %1284 = vmatpush1.msra.mxu0 0.0
        %1285 = vmatprep.subr.mxu0 0.0
        %1286 = vmatpush1.msra.mxu0 %v1247
        %1287 = vmatprep.subr.mxu0 0.0
        %1288 = vmatpush1.msra.mxu0 %v1246
        %1289 = vmatprep.subr.mxu0 0.0
        %1290 = vmatpush2.msra.mxu0 0.0
        %1291 = vmatprep.subr.mxu0 0.0
        %1292 = vmatpush2.msra.mxu0 0.0
        %1293 = vmatprep.subr.mxu0 0.0
        %1294 = vmatpush2.msra.mxu0 0.0
        %1295 = vmatprep.subr.mxu0 0.0
        %1296 = vmatpush2.msra.mxu0 0.0
        %1297 = vmatprep.subr.mxu0 0.0
        %1298 = vmatpush2.msra.mxu0 0.0
        %1299 = vmatprep.subr.mxu0 0.0
        %1300 = vmatpush2.msra.mxu0 0.0
        %1301 = vmatprep.subr.mxu0 0.0
        %1302 = vmatpush2.msra.mxu0 0.0
        %1303 = vmatprep.subr.mxu0 0.0
        %1304 = vmatpush2.msra.mxu0 0.0
        %1305 = vmatprep.subr.mxu0 0.0
        %1306 = vmatpush2.msra.mxu0 0.0
        %1307 = vmatprep.subr.mxu0 0.0
        %1308 = vmatpush2.msra.mxu0 0.0
        %1309 = vmatprep.subr.mxu0 0.0
        %1310 = vmatpush2.msra.mxu0 0.0
        %1311 = vmatprep.subr.mxu0 0.0
        %1312 = vmatpush2.msra.mxu0 0.0
        %1313 = vmatprep.subr.mxu0 0.0
        %1314 = vmatpush2.msra.mxu0 0.0
        %1315 = vmatprep.subr.mxu0 0.0
        %1316 = vmatpush2.msra.mxu0 0.0
        %1317 = vmatprep.subr.mxu0 0.0
        %1318 = vmatpush2.msra.mxu0 0.0
        %1319 = vmatprep.subr.mxu0 0.0
        %1320 = vmatpush2.msra.mxu0 0.0
        %1321 = vmatprep.mubr.f32.mxu0 0.0
        %1322 = vmatmul.mubr.f32.gmra.mxu0 %v1252
        %v1323 = vpop.f32.mrf.mxu0
        %v1324 = vadd.f32 0.0, %v1323
        %v1325 = vpop.f32.mrf.mxu0
        %1326 = vmatprep.mubr.f32.mxu0 0.0
        %1327 = vmatmul.mubr.f32.gmra.mxu0 %v1255
        %v1328 = vpop.f32.mrf.mxu0
        %v1329 = vadd.f32 0.0, %v1328
        %v1330 = vpop.f32.mrf.mxu0
        %1331 = vdwg.mxu0
        %v1333 = vsel %vm1250, %v1067, 0
        %v1336 = vsel %vm1250, %v1068, 0
        %1338 = vmatprep.subr.mxu0 0.0
        %1339 = vmatpush1.msra.mxu0 0.0
        %1340 = vmatprep.subr.mxu0 0.0
        %1341 = vmatpush1.msra.mxu0 0.0
        %1342 = vmatprep.subr.mxu0 0.0
        %1343 = vmatpush1.msra.mxu0 0.0
        %1344 = vmatprep.subr.mxu0 0.0
        %1345 = vmatpush1.msra.mxu0 0.0
        %1346 = vmatprep.subr.mxu0 0.0
        %1347 = vmatpush1.msra.mxu0 0.0
        %1348 = vmatprep.subr.mxu0 0.0
        %1349 = vmatpush1.msra.mxu0 0.0
        %1350 = vmatprep.subr.mxu0 0.0
        %1351 = vmatpush1.msra.mxu0 0.0
        %1352 = vmatprep.subr.mxu0 0.0
        %1353 = vmatpush1.msra.mxu0 0.0
        %1354 = vmatprep.subr.mxu0 0.0
        %1355 = vmatpush1.msra.mxu0 0.0
        %1356 = vmatprep.subr.mxu0 0.0
        %1357 = vmatpush1.msra.mxu0 0.0
        %1358 = vmatprep.subr.mxu0 0.0
        %1359 = vmatpush1.msra.mxu0 0.0
        %1360 = vmatprep.subr.mxu0 0.0
        %1361 = vmatpush1.msra.mxu0 0.0
        %1362 = vmatprep.subr.mxu0 0.0
        %1363 = vmatpush1.msra.mxu0 0.0
        %1364 = vmatprep.subr.mxu0 0.0
        %1365 = vmatpush1.msra.mxu0 0.0
        %1366 = vmatprep.subr.mxu0 0.0
        %1367 = vmatpush1.msra.mxu0 %v1241
        %1368 = vmatprep.subr.mxu0 0.0
        %1369 = vmatpush1.msra.mxu0 %v1240
        %1370 = vmatprep.subr.mxu0 0.0
        %1371 = vmatpush2.msra.mxu0 0.0
        %1372 = vmatprep.subr.mxu0 0.0
        %1373 = vmatpush2.msra.mxu0 0.0
        %1374 = vmatprep.subr.mxu0 0.0
        %1375 = vmatpush2.msra.mxu0 0.0
        %1376 = vmatprep.subr.mxu0 0.0
        %1377 = vmatpush2.msra.mxu0 0.0
        %1378 = vmatprep.subr.mxu0 0.0
        %1379 = vmatpush2.msra.mxu0 0.0
        %1380 = vmatprep.subr.mxu0 0.0
        %1381 = vmatpush2.msra.mxu0 0.0
        %1382 = vmatprep.subr.mxu0 0.0
        %1383 = vmatpush2.msra.mxu0 0.0
        %1384 = vmatprep.subr.mxu0 0.0
        %1385 = vmatpush2.msra.mxu0 0.0
        %1386 = vmatprep.subr.mxu0 0.0
        %1387 = vmatpush2.msra.mxu0 0.0
        %1388 = vmatprep.subr.mxu0 0.0
        %1389 = vmatpush2.msra.mxu0 0.0
        %1390 = vmatprep.subr.mxu0 0.0
        %1391 = vmatpush2.msra.mxu0 0.0
        %1392 = vmatprep.subr.mxu0 0.0
        %1393 = vmatpush2.msra.mxu0 0.0
        %1394 = vmatprep.subr.mxu0 0.0
        %1395 = vmatpush2.msra.mxu0 0.0
        %1396 = vmatprep.subr.mxu0 0.0
        %1397 = vmatpush2.msra.mxu0 0.0
        %1398 = vmatprep.subr.mxu0 0.0
        %1399 = vmatpush2.msra.mxu0 0.0
        %1400 = vmatprep.subr.mxu0 0.0
        %1401 = vmatpush2.msra.mxu0 0.0
        %1402 = vmatprep.mubr.f32.mxu0 0.0
        %1403 = vmatmul.mubr.f32.gmra.mxu0 %v1333
        %v1404 = vpop.f32.mrf.mxu0
        %v1405 = vadd.f32 %v1324, %v1404
        %v1406 = vpop.f32.mrf.mxu0
        %1407 = vmatprep.mubr.f32.mxu0 0.0
        %1408 = vmatmul.mubr.f32.gmra.mxu0 %v1336
        %v1409 = vpop.f32.mrf.mxu0
        %v1410 = vadd.f32 %v1329, %v1409
        %v1411 = vpop.f32.mrf.mxu0
        %1412 = vdwg.mxu0
        %v1414 = vsel %vm1250, %v1223, 0
        %v1417 = vsel %vm1250, %v1224, 0
        %v1420 = vsel %vm1250, %v1225, 0
        %v1423 = vsel %vm1250, %v1226, 0
        %1425 = vmatprep.subr.mxu0 0.0
        %1426 = vmatpush1.msra.mxu0 0.0
        %1427 = vmatprep.subr.mxu0 0.0
        %1428 = vmatpush1.msra.mxu0 0.0
        %1429 = vmatprep.subr.mxu0 0.0
        %1430 = vmatpush1.msra.mxu0 0.0
        %1431 = vmatprep.subr.mxu0 0.0
        %1432 = vmatpush1.msra.mxu0 0.0
        %1433 = vmatprep.subr.mxu0 0.0
        %1434 = vmatpush1.msra.mxu0 0.0
        %1435 = vmatprep.subr.mxu0 0.0
        %1436 = vmatpush1.msra.mxu0 0.0
        %1437 = vmatprep.subr.mxu0 0.0
        %1438 = vmatpush1.msra.mxu0 0.0
        %1439 = vmatprep.subr.mxu0 0.0
        %1440 = vmatpush1.msra.mxu0 0.0
        %1441 = vmatprep.subr.mxu0 0.0
        %1442 = vmatpush1.msra.mxu0 0.0
        %1443 = vmatprep.subr.mxu0 0.0
        %1444 = vmatpush1.msra.mxu0 0.0
        %1445 = vmatprep.subr.mxu0 0.0
        %1446 = vmatpush1.msra.mxu0 0.0
        %1447 = vmatprep.subr.mxu0 0.0
        %1448 = vmatpush1.msra.mxu0 0.0
        %1449 = vmatprep.subr.mxu0 0.0
        %1450 = vmatpush1.msra.mxu0 0.0
        %1451 = vmatprep.subr.mxu0 0.0
        %1452 = vmatpush1.msra.mxu0 0.0
        %1453 = vmatprep.subr.mxu0 0.0
        %1454 = vmatpush1.msra.mxu0 %v1410
        %1455 = vmatprep.subr.mxu0 0.0
        %1456 = vmatpush1.msra.mxu0 %v1405
        %1457 = vmatprep.subr.mxu0 0.0
        %1458 = vmatpush2.msra.mxu0 0.0
        %1459 = vmatprep.subr.mxu0 0.0
        %1460 = vmatpush2.msra.mxu0 0.0
        %1461 = vmatprep.subr.mxu0 0.0
        %1462 = vmatpush2.msra.mxu0 0.0
        %1463 = vmatprep.subr.mxu0 0.0
        %1464 = vmatpush2.msra.mxu0 0.0
        %1465 = vmatprep.subr.mxu0 0.0
        %1466 = vmatpush2.msra.mxu0 0.0
        %1467 = vmatprep.subr.mxu0 0.0
        %1468 = vmatpush2.msra.mxu0 0.0
        %1469 = vmatprep.subr.mxu0 0.0
        %1470 = vmatpush2.msra.mxu0 0.0
        %1471 = vmatprep.subr.mxu0 0.0
        %1472 = vmatpush2.msra.mxu0 0.0
        %1473 = vmatprep.subr.mxu0 0.0
        %1474 = vmatpush2.msra.mxu0 0.0
        %1475 = vmatprep.subr.mxu0 0.0
        %1476 = vmatpush2.msra.mxu0 0.0
        %1477 = vmatprep.subr.mxu0 0.0
        %1478 = vmatpush2.msra.mxu0 0.0
        %1479 = vmatprep.subr.mxu0 0.0
        %1480 = vmatpush2.msra.mxu0 0.0
        %1481 = vmatprep.subr.mxu0 0.0
        %1482 = vmatpush2.msra.mxu0 0.0
        %1483 = vmatprep.subr.mxu0 0.0
        %1484 = vmatpush2.msra.mxu0 0.0
        %1485 = vmatprep.subr.mxu0 0.0
        %1486 = vmatpush2.msra.mxu0 0.0
        %1487 = vmatprep.subr.mxu0 0.0
        %1488 = vmatpush2.msra.mxu0 0.0
        %1489 = vmatprep.mubr.f32.mxu0 0.0
        %1490 = vmatmul.mubr.f32.gmra.mxu0 %v1414
        %v1491 = vpop.f32.mrf.mxu0
        %v1492 = vadd.f32 0.0, %v1491
        %v1493 = vpop.f32.mrf.mxu0
        %1494 = vmatprep.mubr.f32.mxu0 0.0
        %1495 = vmatmul.mubr.f32.gmra.mxu0 %v1417
        %v1496 = vpop.f32.mrf.mxu0
        %v1497 = vadd.f32 0.0, %v1496
        %v1498 = vpop.f32.mrf.mxu0
        %1499 = vmatprep.mubr.f32.mxu0 0.0
        %1500 = vmatmul.mubr.f32.gmra.mxu0 %v1420
        %v1501 = vpop.f32.mrf.mxu0
        %v1502 = vadd.f32 0.0, %v1501
        %v1503 = vpop.f32.mrf.mxu0
        %1504 = vmatprep.mubr.f32.mxu0 0.0
        %1505 = vmatmul.mubr.f32.gmra.mxu0 %v1423
        %v1506 = vpop.f32.mrf.mxu0
        %v1507 = vadd.f32 0.0, %v1506
        %v1508 = vpop.f32.mrf.mxu0
        %1509 = vdwg.mxu0
        %v1510 = vadd.f32 %v1249, %v1492
        %v1511 = vadd.f32 %v1249, %v1497
        %v1512 = vadd.f32 %v1249, %v1502
        %v1513 = vadd.f32 %v1249, %v1507
        %v1515 = vsel %vm1250, %v1203, 0
        %v1518 = vsel %vm1250, %v1204, 0
        %1520 = vmatprep.subr.mxu0 0.0
        %1521 = vmatpush1.msra.mxu0 0.0
        %1522 = vmatprep.subr.mxu0 0.0
        %1523 = vmatpush1.msra.mxu0 0.0
        %1524 = vmatprep.subr.mxu0 0.0
        %1525 = vmatpush1.msra.mxu0 0.0
        %1526 = vmatprep.subr.mxu0 0.0
        %1527 = vmatpush1.msra.mxu0 0.0
        %1528 = vmatprep.subr.mxu0 0.0
        %1529 = vmatpush1.msra.mxu0 0.0
        %1530 = vmatprep.subr.mxu0 0.0
        %1531 = vmatpush1.msra.mxu0 0.0
        %1532 = vmatprep.subr.mxu0 0.0
        %1533 = vmatpush1.msra.mxu0 0.0
        %1534 = vmatprep.subr.mxu0 0.0
        %1535 = vmatpush1.msra.mxu0 0.0
        %1536 = vmatprep.subr.mxu0 0.0
        %1537 = vmatpush1.msra.mxu0 0.0
        %1538 = vmatprep.subr.mxu0 0.0
        %1539 = vmatpush1.msra.mxu0 0.0
        %1540 = vmatprep.subr.mxu0 0.0
        %1541 = vmatpush1.msra.mxu0 0.0
        %1542 = vmatprep.subr.mxu0 0.0
        %1543 = vmatpush1.msra.mxu0 0.0
        %1544 = vmatprep.subr.mxu0 0.0
        %1545 = vmatpush1.msra.mxu0 0.0
        %1546 = vmatprep.subr.mxu0 0.0
        %1547 = vmatpush1.msra.mxu0 0.0
        %1548 = vmatprep.subr.mxu0 0.0
        %1549 = vmatpush1.msra.mxu0 %v1247
        %1550 = vmatprep.subr.mxu0 0.0
        %1551 = vmatpush1.msra.mxu0 %v1246
        %1552 = vmatprep.subr.mxu0 0.0
        %1553 = vmatpush2.msra.mxu0 0.0
        %1554 = vmatprep.subr.mxu0 0.0
        %1555 = vmatpush2.msra.mxu0 0.0
        %1556 = vmatprep.subr.mxu0 0.0
        %1557 = vmatpush2.msra.mxu0 0.0
        %1558 = vmatprep.subr.mxu0 0.0
        %1559 = vmatpush2.msra.mxu0 0.0
        %1560 = vmatprep.subr.mxu0 0.0
        %1561 = vmatpush2.msra.mxu0 0.0
        %1562 = vmatprep.subr.mxu0 0.0
        %1563 = vmatpush2.msra.mxu0 0.0
        %1564 = vmatprep.subr.mxu0 0.0
        %1565 = vmatpush2.msra.mxu0 0.0
        %1566 = vmatprep.subr.mxu0 0.0
        %1567 = vmatpush2.msra.mxu0 0.0
        %1568 = vmatprep.subr.mxu0 0.0
        %1569 = vmatpush2.msra.mxu0 0.0
        %1570 = vmatprep.subr.mxu0 0.0
        %1571 = vmatpush2.msra.mxu0 0.0
        %1572 = vmatprep.subr.mxu0 0.0
        %1573 = vmatpush2.msra.mxu0 0.0
        %1574 = vmatprep.subr.mxu0 0.0
        %1575 = vmatpush2.msra.mxu0 0.0
        %1576 = vmatprep.subr.mxu0 0.0
        %1577 = vmatpush2.msra.mxu0 0.0
        %1578 = vmatprep.subr.mxu0 0.0
        %1579 = vmatpush2.msra.mxu0 0.0
        %1580 = vmatprep.subr.mxu0 0.0
        %1581 = vmatpush2.msra.mxu0 0.0
        %1582 = vmatprep.subr.mxu0 0.0
        %1583 = vmatpush2.msra.mxu0 0.0
        %1584 = vmatprep.mubr.f32.mxu0 0.0
        %1585 = vmatmul.mubr.f32.gmra.mxu0 %v1515
        %v1586 = vpop.f32.mrf.mxu0
        %v1587 = vadd.f32 0.0, %v1586
        %v1588 = vpop.f32.mrf.mxu0
        %1589 = vmatprep.mubr.f32.mxu0 0.0
        %1590 = vmatmul.mubr.f32.gmra.mxu0 %v1518
        %v1591 = vpop.f32.mrf.mxu0
        %v1592 = vadd.f32 0.0, %v1591
        %v1593 = vpop.f32.mrf.mxu0
        %1594 = vdwg.mxu0
        %v1596 = vsel %vm1250, %v1121, 0
        %v1599 = vsel %vm1250, %v1122, 0
        %1601 = vmatprep.subr.mxu0 0.0
        %1602 = vmatpush1.msra.mxu0 0.0
        %1603 = vmatprep.subr.mxu0 0.0
        %1604 = vmatpush1.msra.mxu0 0.0
        %1605 = vmatprep.subr.mxu0 0.0
        %1606 = vmatpush1.msra.mxu0 0.0
        %1607 = vmatprep.subr.mxu0 0.0
        %1608 = vmatpush1.msra.mxu0 0.0
        %1609 = vmatprep.subr.mxu0 0.0
        %1610 = vmatpush1.msra.mxu0 0.0
        %1611 = vmatprep.subr.mxu0 0.0
        %1612 = vmatpush1.msra.mxu0 0.0
        %1613 = vmatprep.subr.mxu0 0.0
        %1614 = vmatpush1.msra.mxu0 0.0
        %1615 = vmatprep.subr.mxu0 0.0
        %1616 = vmatpush1.msra.mxu0 0.0
        %1617 = vmatprep.subr.mxu0 0.0
        %1618 = vmatpush1.msra.mxu0 0.0
        %1619 = vmatprep.subr.mxu0 0.0
        %1620 = vmatpush1.msra.mxu0 0.0
        %1621 = vmatprep.subr.mxu0 0.0
        %1622 = vmatpush1.msra.mxu0 0.0
        %1623 = vmatprep.subr.mxu0 0.0
        %1624 = vmatpush1.msra.mxu0 0.0
        %1625 = vmatprep.subr.mxu0 0.0
        %1626 = vmatpush1.msra.mxu0 0.0
        %1627 = vmatprep.subr.mxu0 0.0
        %1628 = vmatpush1.msra.mxu0 0.0
        %1629 = vmatprep.subr.mxu0 0.0
        %1630 = vmatpush1.msra.mxu0 %v1241
        %1631 = vmatprep.subr.mxu0 0.0
        %1632 = vmatpush1.msra.mxu0 %v1240
        %1633 = vmatprep.subr.mxu0 0.0
        %1634 = vmatpush2.msra.mxu0 0.0
        %1635 = vmatprep.subr.mxu0 0.0
        %1636 = vmatpush2.msra.mxu0 0.0
        %1637 = vmatprep.subr.mxu0 0.0
        %1638 = vmatpush2.msra.mxu0 0.0
        %1639 = vmatprep.subr.mxu0 0.0
        %1640 = vmatpush2.msra.mxu0 0.0
        %1641 = vmatprep.subr.mxu0 0.0
        %1642 = vmatpush2.msra.mxu0 0.0
        %1643 = vmatprep.subr.mxu0 0.0
        %1644 = vmatpush2.msra.mxu0 0.0
        %1645 = vmatprep.subr.mxu0 0.0
        %1646 = vmatpush2.msra.mxu0 0.0
        %1647 = vmatprep.subr.mxu0 0.0
        %1648 = vmatpush2.msra.mxu0 0.0
        %1649 = vmatprep.subr.mxu0 0.0
        %1650 = vmatpush2.msra.mxu0 0.0
        %1651 = vmatprep.subr.mxu0 0.0
        %1652 = vmatpush2.msra.mxu0 0.0
        %1653 = vmatprep.subr.mxu0 0.0
        %1654 = vmatpush2.msra.mxu0 0.0
        %1655 = vmatprep.subr.mxu0 0.0
        %1656 = vmatpush2.msra.mxu0 0.0
        %1657 = vmatprep.subr.mxu0 0.0
        %1658 = vmatpush2.msra.mxu0 0.0
        %1659 = vmatprep.subr.mxu0 0.0
        %1660 = vmatpush2.msra.mxu0 0.0
        %1661 = vmatprep.subr.mxu0 0.0
        %1662 = vmatpush2.msra.mxu0 0.0
        %1663 = vmatprep.subr.mxu0 0.0
        %1664 = vmatpush2.msra.mxu0 0.0
        %1665 = vmatprep.mubr.f32.mxu0 0.0
        %1666 = vmatmul.mubr.f32.gmra.mxu0 %v1596
        %v1667 = vpop.f32.mrf.mxu0
        %v1668 = vadd.f32 %v1587, %v1667
        %v1669 = vpop.f32.mrf.mxu0
        %1670 = vmatprep.mubr.f32.mxu0 0.0
        %1671 = vmatmul.mubr.f32.gmra.mxu0 %v1599
        %v1672 = vpop.f32.mrf.mxu0
        %v1673 = vadd.f32 %v1592, %v1672
        %v1674 = vpop.f32.mrf.mxu0
        %1675 = vdwg.mxu0
        %v1677 = vsel %vm1250, %v1232, 0
        %v1680 = vsel %vm1250, %v1233, 0
        %v1683 = vsel %vm1250, %v1234, 0
        %v1686 = vsel %vm1250, %v1235, 0
        %1688 = vmatprep.subr.mxu0 0.0
        %1689 = vmatpush1.msra.mxu0 0.0
        %1690 = vmatprep.subr.mxu0 0.0
        %1691 = vmatpush1.msra.mxu0 0.0
        %1692 = vmatprep.subr.mxu0 0.0
        %1693 = vmatpush1.msra.mxu0 0.0
        %1694 = vmatprep.subr.mxu0 0.0
        %1695 = vmatpush1.msra.mxu0 0.0
        %1696 = vmatprep.subr.mxu0 0.0
        %1697 = vmatpush1.msra.mxu0 0.0
        %1698 = vmatprep.subr.mxu0 0.0
        %1699 = vmatpush1.msra.mxu0 0.0
        %1700 = vmatprep.subr.mxu0 0.0
        %1701 = vmatpush1.msra.mxu0 0.0
        %1702 = vmatprep.subr.mxu0 0.0
        %1703 = vmatpush1.msra.mxu0 0.0
        %1704 = vmatprep.subr.mxu0 0.0
        %1705 = vmatpush1.msra.mxu0 0.0
        %1706 = vmatprep.subr.mxu0 0.0
        %1707 = vmatpush1.msra.mxu0 0.0
        %1708 = vmatprep.subr.mxu0 0.0
        %1709 = vmatpush1.msra.mxu0 0.0
        %1710 = vmatprep.subr.mxu0 0.0
        %1711 = vmatpush1.msra.mxu0 0.0
        %1712 = vmatprep.subr.mxu0 0.0
        %1713 = vmatpush1.msra.mxu0 0.0
        %1714 = vmatprep.subr.mxu0 0.0
        %1715 = vmatpush1.msra.mxu0 0.0
        %1716 = vmatprep.subr.mxu0 0.0
        %1717 = vmatpush1.msra.mxu0 %v1673
        %1718 = vmatprep.subr.mxu0 0.0
        %1719 = vmatpush1.msra.mxu0 %v1668
        %1720 = vmatprep.subr.mxu0 0.0
        %1721 = vmatpush2.msra.mxu0 0.0
        %1722 = vmatprep.subr.mxu0 0.0
        %1723 = vmatpush2.msra.mxu0 0.0
        %1724 = vmatprep.subr.mxu0 0.0
        %1725 = vmatpush2.msra.mxu0 0.0
        %1726 = vmatprep.subr.mxu0 0.0
        %1727 = vmatpush2.msra.mxu0 0.0
        %1728 = vmatprep.subr.mxu0 0.0
        %1729 = vmatpush2.msra.mxu0 0.0
        %1730 = vmatprep.subr.mxu0 0.0
        %1731 = vmatpush2.msra.mxu0 0.0
        %1732 = vmatprep.subr.mxu0 0.0
        %1733 = vmatpush2.msra.mxu0 0.0
        %1734 = vmatprep.subr.mxu0 0.0
        %1735 = vmatpush2.msra.mxu0 0.0
        %1736 = vmatprep.subr.mxu0 0.0
        %1737 = vmatpush2.msra.mxu0 0.0
        %1738 = vmatprep.subr.mxu0 0.0
        %1739 = vmatpush2.msra.mxu0 0.0
        %1740 = vmatprep.subr.mxu0 0.0
        %1741 = vmatpush2.msra.mxu0 0.0
        %1742 = vmatprep.subr.mxu0 0.0
        %1743 = vmatpush2.msra.mxu0 0.0
        %1744 = vmatprep.subr.mxu0 0.0
        %1745 = vmatpush2.msra.mxu0 0.0
        %1746 = vmatprep.subr.mxu0 0.0
        %1747 = vmatpush2.msra.mxu0 0.0
        %1748 = vmatprep.subr.mxu0 0.0
        %1749 = vmatpush2.msra.mxu0 0.0
        %1750 = vmatprep.subr.mxu0 0.0
        %1751 = vmatpush2.msra.mxu0 0.0
        %1752 = vmatprep.mubr.f32.mxu0 0.0
        %1753 = vmatmul.mubr.f32.gmra.mxu0 %v1677
        %v1754 = vpop.f32.mrf.mxu0
        %v1755 = vadd.f32 0.0, %v1754
        %v1756 = vpop.f32.mrf.mxu0
        %1757 = vmatprep.mubr.f32.mxu0 0.0
        %1758 = vmatmul.mubr.f32.gmra.mxu0 %v1680
        %v1759 = vpop.f32.mrf.mxu0
        %v1760 = vadd.f32 0.0, %v1759
        %v1761 = vpop.f32.mrf.mxu0
        %1762 = vmatprep.mubr.f32.mxu0 0.0
        %1763 = vmatmul.mubr.f32.gmra.mxu0 %v1683
        %v1764 = vpop.f32.mrf.mxu0
        %v1765 = vadd.f32 0.0, %v1764
        %v1766 = vpop.f32.mrf.mxu0
        %1767 = vmatprep.mubr.f32.mxu0 0.0
        %1768 = vmatmul.mubr.f32.gmra.mxu0 %v1686
        %v1769 = vpop.f32.mrf.mxu0
        %v1770 = vadd.f32 0.0, %v1769
        %v1771 = vpop.f32.mrf.mxu0
        %1772 = vdwg.mxu0
        %v1773 = vadd.f32 %v1510, %v1755
        %v1774 = vadd.f32 %v1511, %v1760
        %v1775 = vadd.f32 %v1512, %v1765
        %v1776 = vadd.f32 %v1513, %v1770
        %vm1777 = vcmask 261120
        %1778 = vst.msk [vmem:[%s190] sm:$0xff] %vm1777, %v1773
        %1779 = vst.msk [vmem:[%s190 + $0x8] sm:$0xff] %vm1777, %v1774
        %1780 = vst.msk [vmem:[%s190 + $0x10] sm:$0xff] %vm1777, %v1775
        %1781 = vst.msk [vmem:[%s190 + $0x18] sm:$0xff] %vm1777, %v1776
        %s1782 = sld [smem:[#allocation5 + $0x1]]
        %v1783 = vstv %s1782
        %v1785 = vsel %vm1250, %v1179, 0
        %v1788 = vsel %vm1250, %v1180, 0
        %1790 = vmatprep.subr.mxu0 0.0
        %1791 = vmatpush1.msra.mxu0 0.0
        %1792 = vmatprep.subr.mxu0 0.0
        %1793 = vmatpush1.msra.mxu0 0.0
        %1794 = vmatprep.subr.mxu0 0.0
        %1795 = vmatpush1.msra.mxu0 0.0
        %1796 = vmatprep.subr.mxu0 0.0
        %1797 = vmatpush1.msra.mxu0 0.0
        %1798 = vmatprep.subr.mxu0 0.0
        %1799 = vmatpush1.msra.mxu0 0.0
        %1800 = vmatprep.subr.mxu0 0.0
        %1801 = vmatpush1.msra.mxu0 0.0
        %1802 = vmatprep.subr.mxu0 0.0
        %1803 = vmatpush1.msra.mxu0 0.0
        %1804 = vmatprep.subr.mxu0 0.0
        %1805 = vmatpush1.msra.mxu0 0.0
        %1806 = vmatprep.subr.mxu0 0.0
        %1807 = vmatpush1.msra.mxu0 0.0
        %1808 = vmatprep.subr.mxu0 0.0
        %1809 = vmatpush1.msra.mxu0 0.0
        %1810 = vmatprep.subr.mxu0 0.0
        %1811 = vmatpush1.msra.mxu0 0.0
        %1812 = vmatprep.subr.mxu0 0.0
        %1813 = vmatpush1.msra.mxu0 0.0
        %1814 = vmatprep.subr.mxu0 0.0
        %1815 = vmatpush1.msra.mxu0 0.0
        %1816 = vmatprep.subr.mxu0 0.0
        %1817 = vmatpush1.msra.mxu0 0.0
        %1818 = vmatprep.subr.mxu0 0.0
        %1819 = vmatpush1.msra.mxu0 %v1247
        %1820 = vmatprep.subr.mxu0 0.0
        %1821 = vmatpush1.msra.mxu0 %v1246
        %1822 = vmatprep.subr.mxu0 0.0
        %1823 = vmatpush2.msra.mxu0 0.0
        %1824 = vmatprep.subr.mxu0 0.0
        %1825 = vmatpush2.msra.mxu0 0.0
        %1826 = vmatprep.subr.mxu0 0.0
        %1827 = vmatpush2.msra.mxu0 0.0
        %1828 = vmatprep.subr.mxu0 0.0
        %1829 = vmatpush2.msra.mxu0 0.0
        %1830 = vmatprep.subr.mxu0 0.0
        %1831 = vmatpush2.msra.mxu0 0.0
        %1832 = vmatprep.subr.mxu0 0.0
        %1833 = vmatpush2.msra.mxu0 0.0
        %1834 = vmatprep.subr.mxu0 0.0
        %1835 = vmatpush2.msra.mxu0 0.0
        %1836 = vmatprep.subr.mxu0 0.0
        %1837 = vmatpush2.msra.mxu0 0.0
        %1838 = vmatprep.subr.mxu0 0.0
        %1839 = vmatpush2.msra.mxu0 0.0
        %1840 = vmatprep.subr.mxu0 0.0
        %1841 = vmatpush2.msra.mxu0 0.0
        %1842 = vmatprep.subr.mxu0 0.0
        %1843 = vmatpush2.msra.mxu0 0.0
        %1844 = vmatprep.subr.mxu0 0.0
        %1845 = vmatpush2.msra.mxu0 0.0
        %1846 = vmatprep.subr.mxu0 0.0
        %1847 = vmatpush2.msra.mxu0 0.0
        %1848 = vmatprep.subr.mxu0 0.0
        %1849 = vmatpush2.msra.mxu0 0.0
        %1850 = vmatprep.subr.mxu0 0.0
        %1851 = vmatpush2.msra.mxu0 0.0
        %1852 = vmatprep.subr.mxu0 0.0
        %1853 = vmatpush2.msra.mxu0 0.0
        %1854 = vmatprep.mubr.f32.mxu0 0.0
        %1855 = vmatmul.mubr.f32.gmra.mxu0 %v1785
        %v1856 = vpop.f32.mrf.mxu0
        %v1857 = vadd.f32 0.0, %v1856
        %v1858 = vpop.f32.mrf.mxu0
        %1859 = vmatprep.mubr.f32.mxu0 0.0
        %1860 = vmatmul.mubr.f32.gmra.mxu0 %v1788
        %v1861 = vpop.f32.mrf.mxu0
        %v1862 = vadd.f32 0.0, %v1861
        %v1863 = vpop.f32.mrf.mxu0
        %1864 = vdwg.mxu0
        %v1866 = vsel %vm1250, %v1073, 0
        %v1869 = vsel %vm1250, %v1074, 0
        %1871 = vmatprep.subr.mxu0 0.0
        %1872 = vmatpush1.msra.mxu0 0.0
        %1873 = vmatprep.subr.mxu0 0.0
        %1874 = vmatpush1.msra.mxu0 0.0
        %1875 = vmatprep.subr.mxu0 0.0
        %1876 = vmatpush1.msra.mxu0 0.0
        %1877 = vmatprep.subr.mxu0 0.0
        %1878 = vmatpush1.msra.mxu0 0.0
        %1879 = vmatprep.subr.mxu0 0.0
        %1880 = vmatpush1.msra.mxu0 0.0
        %1881 = vmatprep.subr.mxu0 0.0
        %1882 = vmatpush1.msra.mxu0 0.0
        %1883 = vmatprep.subr.mxu0 0.0
        %1884 = vmatpush1.msra.mxu0 0.0
        %1885 = vmatprep.subr.mxu0 0.0
        %1886 = vmatpush1.msra.mxu0 0.0
        %1887 = vmatprep.subr.mxu0 0.0
        %1888 = vmatpush1.msra.mxu0 0.0
        %1889 = vmatprep.subr.mxu0 0.0
        %1890 = vmatpush1.msra.mxu0 0.0
        %1891 = vmatprep.subr.mxu0 0.0
        %1892 = vmatpush1.msra.mxu0 0.0
        %1893 = vmatprep.subr.mxu0 0.0
        %1894 = vmatpush1.msra.mxu0 0.0
        %1895 = vmatprep.subr.mxu0 0.0
        %1896 = vmatpush1.msra.mxu0 0.0
        %1897 = vmatprep.subr.mxu0 0.0
        %1898 = vmatpush1.msra.mxu0 0.0
        %1899 = vmatprep.subr.mxu0 0.0
        %1900 = vmatpush1.msra.mxu0 %v1241
        %1901 = vmatprep.subr.mxu0 0.0
        %1902 = vmatpush1.msra.mxu0 %v1240
        %1903 = vmatprep.subr.mxu0 0.0
        %1904 = vmatpush2.msra.mxu0 0.0
        %1905 = vmatprep.subr.mxu0 0.0
        %1906 = vmatpush2.msra.mxu0 0.0
        %1907 = vmatprep.subr.mxu0 0.0
        %1908 = vmatpush2.msra.mxu0 0.0
        %1909 = vmatprep.subr.mxu0 0.0
        %1910 = vmatpush2.msra.mxu0 0.0
        %1911 = vmatprep.subr.mxu0 0.0
        %1912 = vmatpush2.msra.mxu0 0.0
        %1913 = vmatprep.subr.mxu0 0.0
        %1914 = vmatpush2.msra.mxu0 0.0
        %1915 = vmatprep.subr.mxu0 0.0
        %1916 = vmatpush2.msra.mxu0 0.0
        %1917 = vmatprep.subr.mxu0 0.0
        %1918 = vmatpush2.msra.mxu0 0.0
        %1919 = vmatprep.subr.mxu0 0.0
        %1920 = vmatpush2.msra.mxu0 0.0
        %1921 = vmatprep.subr.mxu0 0.0
        %1922 = vmatpush2.msra.mxu0 0.0
        %1923 = vmatprep.subr.mxu0 0.0
        %1924 = vmatpush2.msra.mxu0 0.0
        %1925 = vmatprep.subr.mxu0 0.0
        %1926 = vmatpush2.msra.mxu0 0.0
        %1927 = vmatprep.subr.mxu0 0.0
        %1928 = vmatpush2.msra.mxu0 0.0
        %1929 = vmatprep.subr.mxu0 0.0
        %1930 = vmatpush2.msra.mxu0 0.0
        %1931 = vmatprep.subr.mxu0 0.0
        %1932 = vmatpush2.msra.mxu0 0.0
        %1933 = vmatprep.subr.mxu0 0.0
        %1934 = vmatpush2.msra.mxu0 0.0
        %1935 = vmatprep.mubr.f32.mxu0 0.0
        %1936 = vmatmul.mubr.f32.gmra.mxu0 %v1866
        %v1937 = vpop.f32.mrf.mxu0
        %v1938 = vadd.f32 %v1857, %v1937
        %v1939 = vpop.f32.mrf.mxu0
        %1940 = vmatprep.mubr.f32.mxu0 0.0
        %1941 = vmatmul.mubr.f32.gmra.mxu0 %v1869
        %v1942 = vpop.f32.mrf.mxu0
        %v1943 = vadd.f32 %v1862, %v1942
        %v1944 = vpop.f32.mrf.mxu0
        %1945 = vdwg.mxu0
        %1946 = vmatprep.subr.mxu0 0.0
        %1947 = vmatpush1.msra.mxu0 0.0
        %1948 = vmatprep.subr.mxu0 0.0
        %1949 = vmatpush1.msra.mxu0 0.0
        %1950 = vmatprep.subr.mxu0 0.0
        %1951 = vmatpush1.msra.mxu0 0.0
        %1952 = vmatprep.subr.mxu0 0.0
        %1953 = vmatpush1.msra.mxu0 0.0
        %1954 = vmatprep.subr.mxu0 0.0
        %1955 = vmatpush1.msra.mxu0 0.0
        %1956 = vmatprep.subr.mxu0 0.0
        %1957 = vmatpush1.msra.mxu0 0.0
        %1958 = vmatprep.subr.mxu0 0.0
        %1959 = vmatpush1.msra.mxu0 0.0
        %1960 = vmatprep.subr.mxu0 0.0
        %1961 = vmatpush1.msra.mxu0 0.0
        %1962 = vmatprep.subr.mxu0 0.0
        %1963 = vmatpush1.msra.mxu0 0.0
        %1964 = vmatprep.subr.mxu0 0.0
        %1965 = vmatpush1.msra.mxu0 0.0
        %1966 = vmatprep.subr.mxu0 0.0
        %1967 = vmatpush1.msra.mxu0 0.0
        %1968 = vmatprep.subr.mxu0 0.0
        %1969 = vmatpush1.msra.mxu0 0.0
        %1970 = vmatprep.subr.mxu0 0.0
        %1971 = vmatpush1.msra.mxu0 0.0
        %1972 = vmatprep.subr.mxu0 0.0
        %1973 = vmatpush1.msra.mxu0 0.0
        %1974 = vmatprep.subr.mxu0 0.0
        %1975 = vmatpush1.msra.mxu0 %v1943
        %1976 = vmatprep.subr.mxu0 0.0
        %1977 = vmatpush1.msra.mxu0 %v1938
        %1978 = vmatprep.subr.mxu0 0.0
        %1979 = vmatpush2.msra.mxu0 0.0
        %1980 = vmatprep.subr.mxu0 0.0
        %1981 = vmatpush2.msra.mxu0 0.0
        %1982 = vmatprep.subr.mxu0 0.0
        %1983 = vmatpush2.msra.mxu0 0.0
        %1984 = vmatprep.subr.mxu0 0.0
        %1985 = vmatpush2.msra.mxu0 0.0
        %1986 = vmatprep.subr.mxu0 0.0
        %1987 = vmatpush2.msra.mxu0 0.0
        %1988 = vmatprep.subr.mxu0 0.0
        %1989 = vmatpush2.msra.mxu0 0.0
        %1990 = vmatprep.subr.mxu0 0.0
        %1991 = vmatpush2.msra.mxu0 0.0
        %1992 = vmatprep.subr.mxu0 0.0
        %1993 = vmatpush2.msra.mxu0 0.0
        %1994 = vmatprep.subr.mxu0 0.0
        %1995 = vmatpush2.msra.mxu0 0.0
        %1996 = vmatprep.subr.mxu0 0.0
        %1997 = vmatpush2.msra.mxu0 0.0
        %1998 = vmatprep.subr.mxu0 0.0
        %1999 = vmatpush2.msra.mxu0 0.0
        %2000 = vmatprep.subr.mxu0 0.0
        %2001 = vmatpush2.msra.mxu0 0.0
        %2002 = vmatprep.subr.mxu0 0.0
        %2003 = vmatpush2.msra.mxu0 0.0
        %2004 = vmatprep.subr.mxu0 0.0
        %2005 = vmatpush2.msra.mxu0 0.0
        %2006 = vmatprep.subr.mxu0 0.0
        %2007 = vmatpush2.msra.mxu0 0.0
        %2008 = vmatprep.subr.mxu0 0.0
        %2009 = vmatpush2.msra.mxu0 0.0
        %2010 = vmatprep.mubr.f32.mxu0 0.0
        %2011 = vmatmul.mubr.f32.gmra.mxu0 %v1414
        %v2012 = vpop.f32.mrf.mxu0
        %v2013 = vadd.f32 0.0, %v2012
        %v2014 = vpop.f32.mrf.mxu0
        %2015 = vmatprep.mubr.f32.mxu0 0.0
        %2016 = vmatmul.mubr.f32.gmra.mxu0 %v1417
        %v2017 = vpop.f32.mrf.mxu0
        %v2018 = vadd.f32 0.0, %v2017
        %v2019 = vpop.f32.mrf.mxu0
        %2020 = vmatprep.mubr.f32.mxu0 0.0
        %2021 = vmatmul.mubr.f32.gmra.mxu0 %v1420
        %v2022 = vpop.f32.mrf.mxu0
        %v2023 = vadd.f32 0.0, %v2022
        %v2024 = vpop.f32.mrf.mxu0
        %2025 = vmatprep.mubr.f32.mxu0 0.0
        %2026 = vmatmul.mubr.f32.gmra.mxu0 %v1423
        %v2027 = vpop.f32.mrf.mxu0
        %v2028 = vadd.f32 0.0, %v2027
        %v2029 = vpop.f32.mrf.mxu0
        %2030 = vdwg.mxu0
        %v2031 = vadd.f32 %v1783, %v2013
        %v2032 = vadd.f32 %v1783, %v2018
        %v2033 = vadd.f32 %v1783, %v2023
        %v2034 = vadd.f32 %v1783, %v2028
        %v2036 = vsel %vm1250, %v1209, 0
        %v2039 = vsel %vm1250, %v1210, 0
        %2041 = vmatprep.subr.mxu0 0.0
        %2042 = vmatpush1.msra.mxu0 0.0
        %2043 = vmatprep.subr.mxu0 0.0
        %2044 = vmatpush1.msra.mxu0 0.0
        %2045 = vmatprep.subr.mxu0 0.0
        %2046 = vmatpush1.msra.mxu0 0.0
        %2047 = vmatprep.subr.mxu0 0.0
        %2048 = vmatpush1.msra.mxu0 0.0
        %2049 = vmatprep.subr.mxu0 0.0
        %2050 = vmatpush1.msra.mxu0 0.0
        %2051 = vmatprep.subr.mxu0 0.0
        %2052 = vmatpush1.msra.mxu0 0.0
        %2053 = vmatprep.subr.mxu0 0.0
        %2054 = vmatpush1.msra.mxu0 0.0
        %2055 = vmatprep.subr.mxu0 0.0
        %2056 = vmatpush1.msra.mxu0 0.0
        %2057 = vmatprep.subr.mxu0 0.0
        %2058 = vmatpush1.msra.mxu0 0.0
        %2059 = vmatprep.subr.mxu0 0.0
        %2060 = vmatpush1.msra.mxu0 0.0
        %2061 = vmatprep.subr.mxu0 0.0
        %2062 = vmatpush1.msra.mxu0 0.0
        %2063 = vmatprep.subr.mxu0 0.0
        %2064 = vmatpush1.msra.mxu0 0.0
        %2065 = vmatprep.subr.mxu0 0.0
        %2066 = vmatpush1.msra.mxu0 0.0
        %2067 = vmatprep.subr.mxu0 0.0
        %2068 = vmatpush1.msra.mxu0 0.0
        %2069 = vmatprep.subr.mxu0 0.0
        %2070 = vmatpush1.msra.mxu0 %v1247
        %2071 = vmatprep.subr.mxu0 0.0
        %2072 = vmatpush1.msra.mxu0 %v1246
        %2073 = vmatprep.subr.mxu0 0.0
        %2074 = vmatpush2.msra.mxu0 0.0
        %2075 = vmatprep.subr.mxu0 0.0
        %2076 = vmatpush2.msra.mxu0 0.0
        %2077 = vmatprep.subr.mxu0 0.0
        %2078 = vmatpush2.msra.mxu0 0.0
        %2079 = vmatprep.subr.mxu0 0.0
        %2080 = vmatpush2.msra.mxu0 0.0
        %2081 = vmatprep.subr.mxu0 0.0
        %2082 = vmatpush2.msra.mxu0 0.0
        %2083 = vmatprep.subr.mxu0 0.0
        %2084 = vmatpush2.msra.mxu0 0.0
        %2085 = vmatprep.subr.mxu0 0.0
        %2086 = vmatpush2.msra.mxu0 0.0
        %2087 = vmatprep.subr.mxu0 0.0
        %2088 = vmatpush2.msra.mxu0 0.0
        %2089 = vmatprep.subr.mxu0 0.0
        %2090 = vmatpush2.msra.mxu0 0.0
        %2091 = vmatprep.subr.mxu0 0.0
        %2092 = vmatpush2.msra.mxu0 0.0
        %2093 = vmatprep.subr.mxu0 0.0
        %2094 = vmatpush2.msra.mxu0 0.0
        %2095 = vmatprep.subr.mxu0 0.0
        %2096 = vmatpush2.msra.mxu0 0.0
        %2097 = vmatprep.subr.mxu0 0.0
        %2098 = vmatpush2.msra.mxu0 0.0
        %2099 = vmatprep.subr.mxu0 0.0
        %2100 = vmatpush2.msra.mxu0 0.0
        %2101 = vmatprep.subr.mxu0 0.0
        %2102 = vmatpush2.msra.mxu0 0.0
        %2103 = vmatprep.subr.mxu0 0.0
        %2104 = vmatpush2.msra.mxu0 0.0
        %2105 = vmatprep.mubr.f32.mxu0 0.0
        %2106 = vmatmul.mubr.f32.gmra.mxu0 %v2036
        %v2107 = vpop.f32.mrf.mxu0
        %v2108 = vadd.f32 0.0, %v2107
        %v2109 = vpop.f32.mrf.mxu0
        %2110 = vmatprep.mubr.f32.mxu0 0.0
        %2111 = vmatmul.mubr.f32.gmra.mxu0 %v2039
        %v2112 = vpop.f32.mrf.mxu0
        %v2113 = vadd.f32 0.0, %v2112
        %v2114 = vpop.f32.mrf.mxu0
        %2115 = vdwg.mxu0
        %v2117 = vsel %vm1250, %v1127, 0
        %v2120 = vsel %vm1250, %v1128, 0
        %2122 = vmatprep.subr.mxu0 0.0
        %2123 = vmatpush1.msra.mxu0 0.0
        %2124 = vmatprep.subr.mxu0 0.0
        %2125 = vmatpush1.msra.mxu0 0.0
        %2126 = vmatprep.subr.mxu0 0.0
        %2127 = vmatpush1.msra.mxu0 0.0
        %2128 = vmatprep.subr.mxu0 0.0
        %2129 = vmatpush1.msra.mxu0 0.0
        %2130 = vmatprep.subr.mxu0 0.0
        %2131 = vmatpush1.msra.mxu0 0.0
        %2132 = vmatprep.subr.mxu0 0.0
        %2133 = vmatpush1.msra.mxu0 0.0
        %2134 = vmatprep.subr.mxu0 0.0
        %2135 = vmatpush1.msra.mxu0 0.0
        %2136 = vmatprep.subr.mxu0 0.0
        %2137 = vmatpush1.msra.mxu0 0.0
        %2138 = vmatprep.subr.mxu0 0.0
        %2139 = vmatpush1.msra.mxu0 0.0
        %2140 = vmatprep.subr.mxu0 0.0
        %2141 = vmatpush1.msra.mxu0 0.0
        %2142 = vmatprep.subr.mxu0 0.0
        %2143 = vmatpush1.msra.mxu0 0.0
        %2144 = vmatprep.subr.mxu0 0.0
        %2145 = vmatpush1.msra.mxu0 0.0
        %2146 = vmatprep.subr.mxu0 0.0
        %2147 = vmatpush1.msra.mxu0 0.0
        %2148 = vmatprep.subr.mxu0 0.0
        %2149 = vmatpush1.msra.mxu0 0.0
        %2150 = vmatprep.subr.mxu0 0.0
        %2151 = vmatpush1.msra.mxu0 %v1241
        %2152 = vmatprep.subr.mxu0 0.0
        %2153 = vmatpush1.msra.mxu0 %v1240
        %2154 = vmatprep.subr.mxu0 0.0
        %2155 = vmatpush2.msra.mxu0 0.0
        %2156 = vmatprep.subr.mxu0 0.0
        %2157 = vmatpush2.msra.mxu0 0.0
        %2158 = vmatprep.subr.mxu0 0.0
        %2159 = vmatpush2.msra.mxu0 0.0
        %2160 = vmatprep.subr.mxu0 0.0
        %2161 = vmatpush2.msra.mxu0 0.0
        %2162 = vmatprep.subr.mxu0 0.0
        %2163 = vmatpush2.msra.mxu0 0.0
        %2164 = vmatprep.subr.mxu0 0.0
        %2165 = vmatpush2.msra.mxu0 0.0
        %2166 = vmatprep.subr.mxu0 0.0
        %2167 = vmatpush2.msra.mxu0 0.0
        %2168 = vmatprep.subr.mxu0 0.0
        %2169 = vmatpush2.msra.mxu0 0.0
        %2170 = vmatprep.subr.mxu0 0.0
        %2171 = vmatpush2.msra.mxu0 0.0
        %2172 = vmatprep.subr.mxu0 0.0
        %2173 = vmatpush2.msra.mxu0 0.0
        %2174 = vmatprep.subr.mxu0 0.0
        %2175 = vmatpush2.msra.mxu0 0.0
        %2176 = vmatprep.subr.mxu0 0.0
        %2177 = vmatpush2.msra.mxu0 0.0
        %2178 = vmatprep.subr.mxu0 0.0
        %2179 = vmatpush2.msra.mxu0 0.0
        %2180 = vmatprep.subr.mxu0 0.0
        %2181 = vmatpush2.msra.mxu0 0.0
        %2182 = vmatprep.subr.mxu0 0.0
        %2183 = vmatpush2.msra.mxu0 0.0
        %2184 = vmatprep.subr.mxu0 0.0
        %2185 = vmatpush2.msra.mxu0 0.0
        %2186 = vmatprep.mubr.f32.mxu0 0.0
        %2187 = vmatmul.mubr.f32.gmra.mxu0 %v2117
        %v2188 = vpop.f32.mrf.mxu0
        %v2189 = vadd.f32 %v2108, %v2188
        %v2190 = vpop.f32.mrf.mxu0
        %2191 = vmatprep.mubr.f32.mxu0 0.0
        %2192 = vmatmul.mubr.f32.gmra.mxu0 %v2120
        %v2193 = vpop.f32.mrf.mxu0
        %v2194 = vadd.f32 %v2113, %v2193
        %v2195 = vpop.f32.mrf.mxu0
        %2196 = vdwg.mxu0
        %2197 = vmatprep.subr.mxu0 0.0
        %2198 = vmatpush1.msra.mxu0 0.0
        %2199 = vmatprep.subr.mxu0 0.0
        %2200 = vmatpush1.msra.mxu0 0.0
        %2201 = vmatprep.subr.mxu0 0.0
        %2202 = vmatpush1.msra.mxu0 0.0
        %2203 = vmatprep.subr.mxu0 0.0
        %2204 = vmatpush1.msra.mxu0 0.0
        %2205 = vmatprep.subr.mxu0 0.0
        %2206 = vmatpush1.msra.mxu0 0.0
        %2207 = vmatprep.subr.mxu0 0.0
        %2208 = vmatpush1.msra.mxu0 0.0
        %2209 = vmatprep.subr.mxu0 0.0
        %2210 = vmatpush1.msra.mxu0 0.0
        %2211 = vmatprep.subr.mxu0 0.0
        %2212 = vmatpush1.msra.mxu0 0.0
        %2213 = vmatprep.subr.mxu0 0.0
        %2214 = vmatpush1.msra.mxu0 0.0
        %2215 = vmatprep.subr.mxu0 0.0
        %2216 = vmatpush1.msra.mxu0 0.0
        %2217 = vmatprep.subr.mxu0 0.0
        %2218 = vmatpush1.msra.mxu0 0.0
        %2219 = vmatprep.subr.mxu0 0.0
        %2220 = vmatpush1.msra.mxu0 0.0
        %2221 = vmatprep.subr.mxu0 0.0
        %2222 = vmatpush1.msra.mxu0 0.0
        %2223 = vmatprep.subr.mxu0 0.0
        %2224 = vmatpush1.msra.mxu0 0.0
        %2225 = vmatprep.subr.mxu0 0.0
        %2226 = vmatpush1.msra.mxu0 %v2194
        %2227 = vmatprep.subr.mxu0 0.0
        %2228 = vmatpush1.msra.mxu0 %v2189
        %2229 = vmatprep.subr.mxu0 0.0
        %2230 = vmatpush2.msra.mxu0 0.0
        %2231 = vmatprep.subr.mxu0 0.0
        %2232 = vmatpush2.msra.mxu0 0.0
        %2233 = vmatprep.subr.mxu0 0.0
        %2234 = vmatpush2.msra.mxu0 0.0
        %2235 = vmatprep.subr.mxu0 0.0
        %2236 = vmatpush2.msra.mxu0 0.0
        %2237 = vmatprep.subr.mxu0 0.0
        %2238 = vmatpush2.msra.mxu0 0.0
        %2239 = vmatprep.subr.mxu0 0.0
        %2240 = vmatpush2.msra.mxu0 0.0
        %2241 = vmatprep.subr.mxu0 0.0
        %2242 = vmatpush2.msra.mxu0 0.0
        %2243 = vmatprep.subr.mxu0 0.0
        %2244 = vmatpush2.msra.mxu0 0.0
        %2245 = vmatprep.subr.mxu0 0.0
        %2246 = vmatpush2.msra.mxu0 0.0
        %2247 = vmatprep.subr.mxu0 0.0
        %2248 = vmatpush2.msra.mxu0 0.0
        %2249 = vmatprep.subr.mxu0 0.0
        %2250 = vmatpush2.msra.mxu0 0.0
        %2251 = vmatprep.subr.mxu0 0.0
        %2252 = vmatpush2.msra.mxu0 0.0
        %2253 = vmatprep.subr.mxu0 0.0
        %2254 = vmatpush2.msra.mxu0 0.0
        %2255 = vmatprep.subr.mxu0 0.0
        %2256 = vmatpush2.msra.mxu0 0.0
        %2257 = vmatprep.subr.mxu0 0.0
        %2258 = vmatpush2.msra.mxu0 0.0
        %2259 = vmatprep.subr.mxu0 0.0
        %2260 = vmatpush2.msra.mxu0 0.0
        %2261 = vmatprep.mubr.f32.mxu0 0.0
        %2262 = vmatmul.mubr.f32.gmra.mxu0 %v1677
        %v2263 = vpop.f32.mrf.mxu0
        %v2264 = vadd.f32 0.0, %v2263
        %v2265 = vpop.f32.mrf.mxu0
        %2266 = vmatprep.mubr.f32.mxu0 0.0
        %2267 = vmatmul.mubr.f32.gmra.mxu0 %v1680
        %v2268 = vpop.f32.mrf.mxu0
        %v2269 = vadd.f32 0.0, %v2268
        %v2270 = vpop.f32.mrf.mxu0
        %2271 = vmatprep.mubr.f32.mxu0 0.0
        %2272 = vmatmul.mubr.f32.gmra.mxu0 %v1683
        %v2273 = vpop.f32.mrf.mxu0
        %v2274 = vadd.f32 0.0, %v2273
        %v2275 = vpop.f32.mrf.mxu0
        %2276 = vmatprep.mubr.f32.mxu0 0.0
        %2277 = vmatmul.mubr.f32.gmra.mxu0 %v1686
        %v2278 = vpop.f32.mrf.mxu0
        %v2279 = vadd.f32 0.0, %v2278
        %v2280 = vpop.f32.mrf.mxu0
        %2281 = vdwg.mxu0
        %v2282 = vadd.f32 %v2031, %v2264
        %v2283 = vadd.f32 %v2032, %v2269
        %v2284 = vadd.f32 %v2033, %v2274
        %v2285 = vadd.f32 %v2034, %v2279
        %s2286 = scalar_lea.vmem %s190, 32 [#allocation7]
        %2287 = vst.msk [vmem:[%s2286] sm:$0xff] %vm1777, %v2282
        %2288 = vst.msk [vmem:[%s2286 + $0x8] sm:$0xff] %vm1777, %v2283
        %2289 = vst.msk [vmem:[%s2286 + $0x10] sm:$0xff] %vm1777, %v2284
        %2290 = vst.msk [vmem:[%s2286 + $0x18] sm:$0xff] %vm1777, %v2285
        %s2291 = sand.u32 %s95, 1
        %s2292 = scalar_lea.sflag [#allocation3], %s2291
        %s2293 = sand.u32 %s95, 1
        %s2294 = smul.addr %s2293, 64
        %s2295 = scalar_lea.vmem [#allocation7], %s2294
        // Predicated region
        $region41: #{deconv2d_forward.1} parent=31 // pred_check
          %p2296 = pneg %p105
        $region42: #{deconv2d_forward.1} parent=31 // pred_check_branch
          %2298 = sbr.rel (%p2296) target = $region44
        $region43: #{deconv2d_forward.1} parent=31 // pred_region
          %s2300 = ssub.s32 1024, 1024
          %2301 = vsyncadd %s2292, %s2300
          %s2302 = smul.addr %s19, 8
          %s2303 = smul.addr %s2302, 128
          %s2304 = scalar_lea.hbm %s3, %s2303
          %s2305 = sshll.u32 %s2295, 4
          %s2306 = int_to_ptr.vmem [resolvable:$true] %s2305
          %2311 = dma.vmem_to_hbm [thread:$0]  %s2306, 1024, %s2304, %s2292, 128, 128, 8
        $region44: #{deconv2d_forward.1} parent=31 // pred_fallthru
          _
      $region32: #{deconv2d_forward.1} parent=5 // pred_fallthru
        _
      %p2312 = scmp.le.s32.totalorder 2, %s14
      // Predicated region
      $region45: #{deconv2d_forward.1} parent=5 // pred_check
        %p2313 = pneg %p2312
      $region46: #{deconv2d_forward.1} parent=5 // pred_check_branch
        %2315 = sbr.rel (%p2313) target = $region48
      $region47: #{deconv2d_forward.1} parent=5 // pred_region
        %s2316 = ssub.s32 %s14, 2
        // Predicated region
        $region49: #{deconv2d_forward.1} parent=47 // pred_check
          %p2317 = pneg %p111
        $region50: #{deconv2d_forward.1} parent=47 // pred_check_branch
          %2319 = sbr.rel (%p2317) target = $region52
        $region51: #{deconv2d_forward.1} parent=47 // pred_region
          %s2320 = sand.u32 %s96, 1
          %s2321 = scalar_lea.sflag [#allocation3], %s2320
          %s2322 = sand.u32 %s96, 1
          %s2323 = smul.addr %s2322, 64
          %s2324 = scalar_lea.vmem [#allocation7], %s2323
          %2325 = dma.done %s2321, 1024
        $region52: #{deconv2d_forward.1} parent=47 // pred_fallthru
          _
      $region48: #{deconv2d_forward.1} parent=5 // pred_fallthru
        _
    $region6: #{deconv2d_forward.1} parent=1 // loop_footer
      %s18 = sadd.s32 1, %s14
    $region7: #{deconv2d_forward.1} parent=1 // loop_footer_branch
      %13 = sbr.rel target = $region3
    $region8: #{deconv2d_forward.1} parent=1 // loop_exit
      _
    %2326 = vsyncpa [#allocation3], 1
    %s2327 = scalar_lea.sflag [#allocation3], 1
    %2328 = vsyncpa %s2327, 1
    %2329 = vsyncpa [#allocation4], 1
    %s2330 = scalar_lea.sflag [#allocation4], 1
    %2331 = vsyncpa %s2330, 1
    %2332 = vsyncpa [#allocation6], 1

</llo_original>
